<compile_context>
chip_gen: v6e
topology: v6e:2x2x1
jax: 0.10.0
libtpu: 0.0.40
codegen_flags: <defaults>
</compile_context>

<pallas_src>
import math

import numpy as np
import jax
import jax.numpy as jnp
from jax import lax
from jax.experimental import pallas as pl
from jax.experimental.pallas import tpu as pltpu


_TWO_PI = 2.0 * math.pi
_SUBLANE_BUCKET = 64    # bucket n_out -> bounded number of compiled shapes
_LANE = 128
_MAX_TILE_T = 256       # keeps double-buffered working set within scoped VMEM


def _round_up(x, m):
    return ((x + m - 1) // m) * m


def _phase_vocoder_kernel(re0_ref, im0_ref, re1_ref, im1_ref,
                          pa_ref, alpha_ref, tri_ref,
                          out_re_ref, out_im_ref):
    # Blocks: planes (1, N, Tt); pa (1, Tt); alpha (N, 1); tri (N, N).
    re0 = re0_ref[0]            # (N, Tt)
    im0 = im0_ref[0]
    re1 = re1_ref[0]
    im1 = im1_ref[0]
    pa = pa_ref[...]            # (1, Tt)  phase advance (broadcast over frames)
    alpha = alpha_ref[...]      # (N, 1)   interpolation weights
    tri = tri_ref[...]          # (N, N)   strictly-lower-triangular ones

    norm0 = jnp.sqrt(re0 * re0 + im0 * im0)
    norm1 = jnp.sqrt(re1 * re1 + im1 * im1)

    # angle1 - angle0 with a single atan2: angle(conj(s0) * s1).  The wrap to
    # [-pi, pi] below absorbs the mod-2pi ambiguity, so results match torch's
    # angle_1 - angle_0 (up to the atan2(0,0) convention on exactly-zero bins).
    cross = im1 * re0 - re1 * im0
    dot_ = re1 * re0 + im1 * im0
    delta = jnp.arctan2(cross, dot_)

    two_pi = jnp.float32(_TWO_PI)
    inv_two_pi = jnp.float32(1.0 / _TWO_PI)
    ph = delta - pa
    ph = ph - two_pi * jnp.round(ph * inv_two_pi)   # wrap to [-pi, pi]
    ph = ph + pa

    # phase_0 = angle of the original first frame (time_steps[0] == 0, so the
    # first gathered frame *is* the original frame 0).  Tiny (1, Tt) atan2.
    phase_0 = jnp.arctan2(im0[0:1, :], re0[0:1, :])

    # phase_acc[j, :] = phase_0 + sum_{k<j} ph[k, :]
    # (torch: cat([phase_0, ph[:-1]]) then cumsum over frames).  Done as one
    # MXU matmul with the host-built strictly-lower-triangular ones matrix;
    # HIGHEST precision keeps the accumulated f32 phases exact.
    phase_acc = phase_0 + jnp.dot(tri, ph,
                                  preferred_element_type=jnp.float32,
                                  precision=lax.Precision.HIGHEST)

    mag = alpha * norm1 + (1.0 - alpha) * norm0

    out_re_ref[0] = mag * jnp.cos(phase_acc)
    out_im_ref[0] = mag * jnp.sin(phase_acc)


def _phase_vocoder_pallas(re0, im0, re1, im1, pa, alphas, tri, tile_t):
    B, N, Tp = re0.shape
    grid = (B, Tp // tile_t)

    plane_spec = pl.BlockSpec((1, N, tile_t), lambda b, t: (b, 0, t))
    pa_spec = pl.BlockSpec((1, tile_t), lambda b, t: (0, t))
    alpha_spec = pl.BlockSpec((N, 1), lambda b, t: (0, 0))      # grid-invariant
    tri_spec = pl.BlockSpec((N, N), lambda b, t: (0, 0))        # grid-invariant
    out_spec = pl.BlockSpec((1, N, tile_t), lambda b, t: (b, 0, t))

    return pl.pallas_call(
        _phase_vocoder_kernel,
        out_shape=(jax.ShapeDtypeStruct((B, N, Tp), jnp.float32),
                   jax.ShapeDtypeStruct((B, N, Tp), jnp.float32)),
        grid=grid,
        in_specs=[plane_spec, plane_spec, plane_spec, plane_spec,
                  pa_spec, alpha_spec, tri_spec],
        out_specs=(out_spec, out_spec),
        compiler_params=pltpu.CompilerParams(
            dimension_semantics=("parallel", "parallel"),
            vmem_limit_bytes=48 * 1024 * 1024),   # < 64 MiB physical on v7x
    )(re0, im0, re1, im1, pa, alphas, tri)


def spec_stretch(spec_re, spec_im, *, rate, stretch_min, stretch_max, key):
    """SpecStretch.forward. spec = spec_re + i*spec_im, shape (B, n_freq, time)."""
    B, Fq, T = spec_re.shape
    k_apply, k_rate = jax.random.split(key)

    # Host-side randomness, mirroring torch.rand(1).item() / uniform_().item().
    # TODO(synk): the host-side RNG draw + data-dependent output length keep
    # this wrapper eager (untraceable), exactly like the original module.
    u = float(jax.random.uniform(k_apply, ()))
    if u >= rate:
        return lax.complex(spec_re, spec_im)

    stretch = float(jax.random.uniform(k_rate, (), minval=stretch_min,
                                       maxval=stretch_max))
    if stretch == 1.0:      # torchaudio returns the input unchanged
        return lax.complex(spec_re, spec_im)

    # The module passes n_freq = spec.size(1) but permutes freq/time; this only
    # broadcasts correctly when the spectrogram is square.
    assert T == Fq, "SpecStretch as written requires time == n_freq"

    # --- static (host-known) phase-vocoder plumbing -------------------------
    hop_length = Fq - 1                         # n_fft // 2, n_fft = 2*(Fq-1)
    time_steps = np.arange(0.0, Fq, stretch, dtype=np.float32)
    n_out = int(time_steps.shape[0])
    idx0 = time_steps.astype(np.int32)          # trunc (non-negative)
    alphas = np.mod(time_steps, 1.0).astype(np.float32)

    # Frame (sublane) axis bucketed to 64 -> bounded recompiles across stretch
    # draws; pv-freq (lane) axis padded to 128 -> lane-dense stores.
    n_pad = _round_up(max(n_out, 8), _SUBLANE_BUCKET)
    t_pad = _round_up(T, _LANE)
    tile_t = _LANE
    for cand in (_MAX_TILE_T, _LANE):
        if t_pad % cand == 0:
            tile_t = cand
            break

    idx0_p = np.concatenate([idx0, np.full(n_pad - n_out, idx0[-1], np.int32)])
    idx1_p = idx0_p + 1
    alphas_p = np.zeros((n_pad, 1), np.float32)
    alphas_p[:n_out, 0] = alphas

    pa = np.zeros((1, t_pad), np.float32)
    pa[0, :Fq] = np.linspace(0.0, math.pi * hop_length, Fq, dtype=np.float32)

    # strictly-lower-triangular ones: cumsum-over-frames as one MXU matmul.
    tri = np.tril(np.ones((n_pad, n_pad), np.float32), k=-1)

    # --- data-movement glue (no transposes: the permute(0,2,1) in/out of the
    # phase vocoder is folded into the static frame gather) ------------------
    # The pv frame axis == original freq axis (axis 1); pad 2 zero frames
    # (F.pad(spec, [0, 2])) and zero-pad the lane axis to t_pad, in one pad.
    spec_re_p = jnp.pad(spec_re, ((0, 0), (0, 2), (0, t_pad - T)))
    spec_im_p = jnp.pad(spec_im, ((0, 0), (0, 2), (0, t_pad - T)))

    # Static index_select along the frame axis.  (idx0/idx1 overlap heavily; a
    # union gather would roughly halve this HBM traffic but needs an in-kernel
    # row select — kept as plain static gathers here.)
    i0 = jnp.asarray(idx0_p)
    i1 = jnp.asarray(idx1_p)
    re0 = jnp.take(spec_re_p, i0, axis=1)
    im0 = jnp.take(spec_im_p, i0, axis=1)
    re1 = jnp.take(spec_re_p, i1, axis=1)
    im1 = jnp.take(spec_im_p, i1, axis=1)

    out_re, out_im = _phase_vocoder_pallas(
        re0, im0, re1, im1,
        jnp.asarray(pa), jnp.asarray(alphas_p), jnp.asarray(tri), tile_t)

    # Kernel already wrote the module's final (B, out_frames, n_freq) layout;
    # just drop the padding.
    out_re = out_re[:, :n_out, :T]
    out_im = out_im[:, :n_out, :T]
    return lax.complex(out_re, out_im)


if __name__ == "__main__":
    key = jax.random.PRNGKey(0)
    k_re, k_im, k_aug = jax.random.split(key, 3)

    B, Fq, T = 2, 16, 16                        # (batch, n_freq, time)
    spec_re = jax.random.normal(k_re, (B, Fq, T), dtype=jnp.float32)
    spec_im = jax.random.normal(k_im, (B, Fq, T), dtype=jnp.float32)

    out = spec_stretch(spec_re, spec_im,
                       rate=1.0, stretch_min=0.8, stretch_max=1.25, key=k_aug)
    out = jax.block_until_ready(out)
    assert out.ndim == 3 and out.shape[0] == B and out.shape[2] == T
    assert jnp.all(jnp.isfinite(out.real)) and jnp.all(jnp.isfinite(out.imag))
    print("KERNEL_OK")
</pallas_src>

<mosaic_0001>
module attributes {stable_mosaic.version = 11 : i64} {
  func.func @_phase_vocoder_kernel(%arg0: i32, %arg1: i32, %arg2: memref<1x64x128xf32, #tpu.memory_space<vmem>>, %arg3: memref<1x64x128xf32, #tpu.memory_space<vmem>>, %arg4: memref<1x64x128xf32, #tpu.memory_space<vmem>>, %arg5: memref<1x64x128xf32, #tpu.memory_space<vmem>>, %arg6: memref<1x128xf32, #tpu.memory_space<vmem>>, %arg7: memref<64x1xf32, #tpu.memory_space<vmem>>, %arg8: memref<64x64xf32, #tpu.memory_space<vmem>>, %arg9: memref<1x64x128xf32, #tpu.memory_space<vmem>>, %arg10: memref<1x64x128xf32, #tpu.memory_space<vmem>>) attributes {dimension_semantics = [#tpu.dimension_semantics<parallel>, #tpu.dimension_semantics<parallel>], iteration_bounds = array<i64: 2, 1>, scalar_prefetch = 0 : i64, scratch_operands = 0 : i64, tpu.core_type = #tpu.core_type<tc>, window_params = [{transform_indices = @transform_0, window_bounds = array<i64: 1, 64, 128>}, {transform_indices = @transform_1, window_bounds = array<i64: 1, 64, 128>}, {transform_indices = @transform_2, window_bounds = array<i64: 1, 64, 128>}, {transform_indices = @transform_3, window_bounds = array<i64: 1, 64, 128>}, {transform_indices = @transform_4, window_bounds = array<i64: 1, 128>}, {pipeline_mode = #tpu.pipeline_mode<synchronous>, transform_indices = @transform_5, window_bounds = array<i64: 64, 1>}, {pipeline_mode = #tpu.pipeline_mode<synchronous>, transform_indices = @transform_6, window_bounds = array<i64: 64, 64>}, {transform_indices = @transform_7, window_bounds = array<i64: 1, 64, 128>}, {transform_indices = @transform_8, window_bounds = array<i64: 1, 64, 128>}]} {
    %c0 = arith.constant 0 : index
    %c0_0 = arith.constant 0 : index
    %c0_1 = arith.constant 0 : index
    %0 = vector.load %arg2[%c0, %c0_0, %c0_1] : memref<1x64x128xf32, #tpu.memory_space<vmem>>, vector<1x64x128xf32>
    %1 = vector.shape_cast %0 : vector<1x64x128xf32> to vector<64x128xf32>
    %c0_2 = arith.constant 0 : index
    %c0_3 = arith.constant 0 : index
    %c0_4 = arith.constant 0 : index
    %2 = vector.load %arg3[%c0_2, %c0_3, %c0_4] : memref<1x64x128xf32, #tpu.memory_space<vmem>>, vector<1x64x128xf32>
    %3 = vector.shape_cast %2 : vector<1x64x128xf32> to vector<64x128xf32>
    %c0_5 = arith.constant 0 : index
    %c0_6 = arith.constant 0 : index
    %c0_7 = arith.constant 0 : index
    %4 = vector.load %arg4[%c0_5, %c0_6, %c0_7] : memref<1x64x128xf32, #tpu.memory_space<vmem>>, vector<1x64x128xf32>
    %5 = vector.shape_cast %4 : vector<1x64x128xf32> to vector<64x128xf32>
    %c0_8 = arith.constant 0 : index
    %c0_9 = arith.constant 0 : index
    %c0_10 = arith.constant 0 : index
    %6 = vector.load %arg5[%c0_8, %c0_9, %c0_10] : memref<1x64x128xf32, #tpu.memory_space<vmem>>, vector<1x64x128xf32>
    %7 = vector.shape_cast %6 : vector<1x64x128xf32> to vector<64x128xf32>
    %c0_11 = arith.constant 0 : index
    %c0_12 = arith.constant 0 : index
    %8 = vector.load %arg6[%c0_11, %c0_12] : memref<1x128xf32, #tpu.memory_space<vmem>>, vector<1x128xf32>
    %c0_13 = arith.constant 0 : index
    %c0_14 = arith.constant 0 : index
    %9 = vector.load %arg7[%c0_13, %c0_14] : memref<64x1xf32, #tpu.memory_space<vmem>>, vector<64x1xf32>
    %c0_15 = arith.constant 0 : index
    %c0_16 = arith.constant 0 : index
    %10 = vector.load %arg8[%c0_15, %c0_16] : memref<64x64xf32, #tpu.memory_space<vmem>>, vector<64x64xf32>
    %11 = arith.mulf %1, %1 : vector<64x128xf32>
    %12 = arith.mulf %3, %3 : vector<64x128xf32>
    %13 = arith.addf %11, %12 : vector<64x128xf32>
    %14 = math.sqrt %13 : vector<64x128xf32>
    %15 = arith.mulf %5, %5 : vector<64x128xf32>
    %16 = arith.mulf %7, %7 : vector<64x128xf32>
    %17 = arith.addf %15, %16 : vector<64x128xf32>
    %18 = math.sqrt %17 : vector<64x128xf32>
    %19 = arith.mulf %7, %1 : vector<64x128xf32>
    %20 = arith.mulf %5, %3 : vector<64x128xf32>
    %21 = arith.subf %19, %20 : vector<64x128xf32>
    %22 = arith.mulf %5, %1 : vector<64x128xf32>
    %23 = arith.mulf %7, %3 : vector<64x128xf32>
    %24 = arith.addf %22, %23 : vector<64x128xf32>
    %25 = math.atan2 %21, %24 : vector<64x128xf32>
    %26 = vector.broadcast %8 : vector<1x128xf32> to vector<64x128xf32>
    %27 = arith.subf %25, %26 : vector<64x128xf32>
    %cst = arith.constant 0.159154937 : f32
    %28 = vector.broadcast %cst : f32 to vector<64x128xf32>
    %29 = arith.mulf %27, %28 : vector<64x128xf32>
    %30 = math.roundeven %29 : vector<64x128xf32>
    %cst_17 = arith.constant 6.28318548 : f32
    %31 = vector.broadcast %cst_17 : f32 to vector<64x128xf32>
    %32 = arith.mulf %31, %30 : vector<64x128xf32>
    %33 = arith.subf %27, %32 : vector<64x128xf32>
    %34 = vector.broadcast %8 : vector<1x128xf32> to vector<64x128xf32>
    %35 = arith.addf %33, %34 : vector<64x128xf32>
    %36 = vector.extract_strided_slice %3 {offsets = [0, 0], sizes = [1, 128], strides = [1, 1]} : vector<64x128xf32> to vector<1x128xf32>
    %37 = vector.extract_strided_slice %1 {offsets = [0, 0], sizes = [1, 128], strides = [1, 1]} : vector<64x128xf32> to vector<1x128xf32>
    %38 = math.atan2 %36, %37 : vector<1x128xf32>
    %cst_18 = arith.constant dense<0.000000e+00> : vector<64x128xf32>
    %39 = tpu.matmul %10, %35, %cst_18 {dimension_numbers = #tpu.dot_dimension_numbers<[1], [0], [0], [1], [0, 0, 1, 1], [], []>, precision = #tpu.contract_precision<fp32>} : vector<64x64xf32>, vector<64x128xf32>, vector<64x128xf32> -> vector<64x128xf32>
    %40 = vector.broadcast %38 : vector<1x128xf32> to vector<64x128xf32>
    %41 = arith.addf %40, %39 : vector<64x128xf32>
    %42 = vector.broadcast %9 : vector<64x1xf32> to vector<64x128xf32>
    %43 = arith.mulf %42, %18 : vector<64x128xf32>
    %cst_19 = arith.constant 1.000000e+00 : f32
    %44 = vector.broadcast %cst_19 : f32 to vector<64x1xf32>
    %45 = arith.subf %44, %9 : vector<64x1xf32>
    %46 = vector.broadcast %45 : vector<64x1xf32> to vector<64x128xf32>
    %47 = arith.mulf %46, %14 : vector<64x128xf32>
    %48 = arith.addf %43, %47 : vector<64x128xf32>
    %49 = math.cos %41 : vector<64x128xf32>
    %50 = arith.mulf %48, %49 : vector<64x128xf32>
    %c0_20 = arith.constant 0 : index
    %c0_21 = arith.constant 0 : index
    %c0_22 = arith.constant 0 : index
    %51 = vector.load %arg9[%c0_20, %c0_21, %c0_22] : memref<1x64x128xf32, #tpu.memory_space<vmem>>, vector<1x64x128xf32>
    %52 = vector.shape_cast %51 : vector<1x64x128xf32> to vector<64x128xf32>
    %53 = vector.shape_cast %50 : vector<64x128xf32> to vector<1x64x128xf32>
    tpu.vector_store %arg9[%c0_20, %c0_21, %c0_22], %53 {strides = array<i32>} : memref<1x64x128xf32, #tpu.memory_space<vmem>>, vector<1x64x128xf32>,
    %54 = math.sin %41 : vector<64x128xf32>
    %55 = arith.mulf %48, %54 : vector<64x128xf32>
    %c0_23 = arith.constant 0 : index
    %c0_24 = arith.constant 0 : index
    %c0_25 = arith.constant 0 : index
    %56 = vector.load %arg10[%c0_23, %c0_24, %c0_25] : memref<1x64x128xf32, #tpu.memory_space<vmem>>, vector<1x64x128xf32>
    %57 = vector.shape_cast %56 : vector<1x64x128xf32> to vector<64x128xf32>
    %58 = vector.shape_cast %55 : vector<64x128xf32> to vector<1x64x128xf32>
    tpu.vector_store %arg10[%c0_23, %c0_24, %c0_25], %58 {strides = array<i32>} : memref<1x64x128xf32, #tpu.memory_space<vmem>>, vector<1x64x128xf32>,
    return
  }
  func.func @transform_0(%arg0: i32, %arg1: i32) -> (i32, i32, i32) {
    %c0_i32 = arith.constant 0 : i32
    %c0_i32_0 = arith.constant 0 : i32
    return %arg0, %c0_i32, %arg1 : i32, i32, i32
  }
  func.func @transform_1(%arg0: i32, %arg1: i32) -> (i32, i32, i32) {
    %c0_i32 = arith.constant 0 : i32
    %c0_i32_0 = arith.constant 0 : i32
    return %arg0, %c0_i32, %arg1 : i32, i32, i32
  }
  func.func @transform_2(%arg0: i32, %arg1: i32) -> (i32, i32, i32) {
    %c0_i32 = arith.constant 0 : i32
    %c0_i32_0 = arith.constant 0 : i32
    return %arg0, %c0_i32, %arg1 : i32, i32, i32
  }
  func.func @transform_3(%arg0: i32, %arg1: i32) -> (i32, i32, i32) {
    %c0_i32 = arith.constant 0 : i32
    %c0_i32_0 = arith.constant 0 : i32
    return %arg0, %c0_i32, %arg1 : i32, i32, i32
  }
  func.func @transform_4(%arg0: i32, %arg1: i32) -> (i32, i32) {
    %c0_i32 = arith.constant 0 : i32
    %c0_i32_0 = arith.constant 0 : i32
    return %c0_i32, %arg1 : i32, i32
  }
  func.func @transform_5(%arg0: i32, %arg1: i32) -> (i32, i32) {
    %c0_i32 = arith.constant 0 : i32
    %c0_i32_0 = arith.constant 0 : i32
    %c0_i32_1 = arith.constant 0 : i32
    return %c0_i32, %c0_i32_0 : i32, i32
  }
  func.func @transform_6(%arg0: i32, %arg1: i32) -> (i32, i32) {
    %c0_i32 = arith.constant 0 : i32
    %c0_i32_0 = arith.constant 0 : i32
    %c0_i32_1 = arith.constant 0 : i32
    return %c0_i32, %c0_i32_0 : i32, i32
  }
  func.func @transform_7(%arg0: i32, %arg1: i32) -> (i32, i32, i32) {
    %c0_i32 = arith.constant 0 : i32
    %c0_i32_0 = arith.constant 0 : i32
    return %arg0, %c0_i32, %arg1 : i32, i32, i32
  }
  func.func @transform_8(%arg0: i32, %arg1: i32) -> (i32, i32, i32) {
    %c0_i32 = arith.constant 0 : i32
    %c0_i32_0 = arith.constant 0 : i32
    return %arg0, %c0_i32, %arg1 : i32, i32, i32
  }
}

</mosaic_0001>

<llo_original>
// kernel: tpu_custom_call.1
$region0: #{tpu_custom_call.1}
  #allocation0 [shape = 'u32[]', space=smem, size = 0x4, offset = 0x4, fixed_abs, tag = 'smem constant byte address 0x4 - core index']
  #allocation1 [shape = 'u32[144,128]{1,0:T(1,128)}', space=vmem, size = 0x12000, scoped, tag = 'internal scratch']
  %s0 = inlined_call_operand.hbm [shape: f32[2,64,128], index: 0, kind: input, shape index: {}]
  %s1 = inlined_call_operand.hbm [shape: f32[2,64,128], index: 1, kind: input, shape index: {}]
  %s2 = inlined_call_operand.hbm [shape: f32[2,64,128], index: 2, kind: input, shape index: {}]
  %s3 = inlined_call_operand.hbm [shape: f32[2,64,128], index: 3, kind: input, shape index: {}]
  %s4 = inlined_call_operand.vmem [shape: f32[1,128], index: 4, kind: input, shape index: {}]
  %s5 = inlined_call_operand.vmem [shape: f32[64,1], index: 5, kind: input, shape index: {}]
  %s6 = inlined_call_operand.vmem [shape: f32[64,64], index: 6, kind: input, shape index: {}]
  %s7 = inlined_call_operand.hbm [shape: f32[2,64,128], index: 7, kind: output, shape index: {0}]
  %s8 = inlined_call_operand.hbm [shape: f32[2,64,128], index: 8, kind: output, shape index: {1}]
  %9 = xla_tuple %s7, %s8
  %s10 = sld [smem:[#allocation0]]
  $region85: #{tpu_custom_call.1} parent=0
    _
  %s12 = ssub.s32 1, %s10
  %s13 = scalar_select 0, %s12, %s10
  $region1: #{tpu_custom_call.1} parent=0
    #allocation2 [shape = 'u8[65536]{0}', space=vmem, size = 0x10000, scoped, tag = 'input window, operand 0']
    #allocation3 [shape = 's32[2]{0}', space=sflag, size = 0x8, scoped, tag = 'scoped memory for tpu_custom_call.1']
    #allocation4 [shape = 's32[2]{0}', space=sflag, size = 0x8, scoped, tag = 'scoped memory for tpu_custom_call.1']
    #allocation5 [shape = 'u8[65536]{0}', space=vmem, size = 0x10000, scoped, tag = 'input window, operand 1']
    #allocation6 [shape = 's32[2]{0}', space=sflag, size = 0x8, scoped, tag = 'scoped memory for tpu_custom_call.1']
    #allocation7 [shape = 'u8[65536]{0}', space=vmem, size = 0x10000, scoped, tag = 'input window, operand 2']
    #allocation8 [shape = 'u8[65536]{0}', space=vmem, size = 0x10000, scoped, tag = 'input window, operand 3']
    #allocation9 [shape = 's32[2]{0}', space=sflag, size = 0x8, scoped, tag = 'scoped memory for tpu_custom_call.1']
    #allocation10 [shape = 'u8[65536]{0}', space=vmem, size = 0x10000, scoped, tag = 'output window, operand 0']
    #allocation11 [shape = 'u8[65536]{0}', space=vmem, size = 0x10000, scoped, tag = 'output window, operand 1']
    #allocation12 [shape = 's32[2]{0}', space=sflag, size = 0x8, scoped, tag = 'scoped memory for tpu_custom_call.1']
    %14 = vsyncpa [#allocation3], 0
    %s15 = scalar_lea.sflag [#allocation3], 1
    %16 = vsyncpa %s15, 0
    %17 = vsyncpa [#allocation6], 0
    %s18 = scalar_lea.sflag [#allocation6], 1
    %19 = vsyncpa %s18, 0
    %20 = vsyncpa [#allocation9], 0
    %s21 = scalar_lea.sflag [#allocation9], 1
    %22 = vsyncpa %s21, 0
    %23 = vsyncpa [#allocation4], 0
    %s24 = scalar_lea.sflag [#allocation4], 1
    %25 = vsyncpa %s24, 0
    %26 = vsyncpa [#allocation12], 0
    %s27 = scalar_lea.sflag [#allocation12], 1
    %28 = vsyncpa %s27, 0
    loop: start=0, step=1, limit=4
    $region2: #{tpu_custom_call.1} parent=1 // loop_pre_header
      _
    $region3: #{tpu_custom_call.1} parent=1 // loop_header
      %s30 = sphi 0, %s34
      %p31 = scmp.ge.s32.totalorder %s30, 4
      %s37 = sphi 0, %s49
      %s38 = sphi 0, %s45
      %s39 = sphi 0, %s37
      %s40 = sphi 0, %s38
      %s41 = sphi 0, %s39
      %s42 = sphi 0, %s40
      %s54 = sphi 0, %s56
      %s57 = sphi 0, %s54
      %s58 = sphi 0, %s57
      %s74 = sphi 0, %s58
      %s82 = sphi 0, %s84
      %s85 = sphi 0, %s82
      %s86 = sphi 0, %s85
      %s102 = sphi 0, %s86
      %s110 = sphi 0, %s112
      %s113 = sphi 0, %s110
      %s114 = sphi 0, %s113
      %s130 = sphi 0, %s114
      %s138 = sphi 0, %s140
      %s141 = sphi 0, %s138
      %s142 = sphi 0, %s141
      %s158 = sphi 0, %s142
      %s164 = sphi 0, %s166
      %s167 = sphi 0, %s164
      %s168 = sphi 0, %s167
      %s184 = sphi 0, %s168
      %s188 = sphi 0, %s188
      %s190 = sphi 0, %s188
      %s191 = sphi 0, %s190
      %s205 = sphi 0, %s191
      %s209 = sphi 0, %s209
      %s211 = sphi 0, %s209
      %s212 = sphi 0, %s211
      %s226 = sphi 0, %s212
      %s234 = sphi 0, %s236
      %s237 = sphi 0, %s234
      %s238 = sphi 0, %s237
      %s254 = sphi 0, %s238
      %s262 = sphi 0, %s264
      %s265 = sphi 0, %s262
      %s266 = sphi 0, %s265
      %s282 = sphi 0, %s266
    $region4: #{tpu_custom_call.1} parent=1 // loop_header_branch
      %33 = sbr.rel (%p31) target = $region8
    $region5: #{tpu_custom_call.1} parent=1 // loop_body
      %s35 = ssub.s32 %s30, 1
      %s36 = ssub.s32 %s30, 2
      %s43 = sadd.s32 1, %s38
      %p44 = scmp.ge.s32.totalorder %s43, 1
      %s45 = scalar_select %p44, 0, %s43
      %s46 = sadd.s32 1, %s37
      %s47 = scalar_select %p44, %s46, %s37
      %p48 = scmp.ge.s32.totalorder %s47, 2
      %s49 = scalar_select %p48, 0, %s47
      %s50 = ssub.s32 %s37, %s49
      %s51 = ssub.s32 %s38, %s45
      %s52 = sor.u32 %s50, %s51
      %p53 = scmp.eq.s32.totalorder %s52, 0
      %s55 = sadd.s32 %s54, 1
      %s56 = scalar_select %p53, %s54, %s55
      %p59 = pneg %p53
      %p60 = scmp.eq.s32.totalorder %s30, 1
      %p61 = por %p59, %p60
      %p62 = scmp.ne.s32.totalorder %s54, %s57
      %p63 = scmp.eq.s32.totalorder %s30, 0
      %p64 = por %p62, %p63
      %p65 = scmp.ne.s32.totalorder %s54, %s57
      %p66 = scmp.eq.s32.totalorder %s35, 1
      %p67 = por %p65, %p66
      %p68 = scmp.ne.s32.totalorder %s57, %s58
      %p69 = scmp.eq.s32.totalorder %s35, 0
      %p70 = por %p68, %p69
      %p71 = scmp.ne.s32.totalorder %s57, %s58
      %p72 = scmp.eq.s32.totalorder %s36, 1
      %p73 = por %p71, %p72
      %p75 = scmp.ne.s32.totalorder %s58, %s74
      %p76 = scmp.eq.s32.totalorder %s36, 0
      %p77 = por %p75, %p76
      %s78 = ssub.s32 %s37, %s49
      %s79 = ssub.s32 %s38, %s45
      %s80 = sor.u32 %s78, %s79
      %p81 = scmp.eq.s32.totalorder %s80, 0
      %s83 = sadd.s32 %s82, 1
      %s84 = scalar_select %p81, %s82, %s83
      %p87 = pneg %p81
      %p88 = scmp.eq.s32.totalorder %s30, 1
      %p89 = por %p87, %p88
      %p90 = scmp.ne.s32.totalorder %s82, %s85
      %p91 = scmp.eq.s32.totalorder %s30, 0
      %p92 = por %p90, %p91
      %p93 = scmp.ne.s32.totalorder %s82, %s85
      %p94 = scmp.eq.s32.totalorder %s35, 1
      %p95 = por %p93, %p94
      %p96 = scmp.ne.s32.totalorder %s85, %s86
      %p97 = scmp.eq.s32.totalorder %s35, 0
      %p98 = por %p96, %p97
      %p99 = scmp.ne.s32.totalorder %s85, %s86
      %p100 = scmp.eq.s32.totalorder %s36, 1
      %p101 = por %p99, %p100
      %p103 = scmp.ne.s32.totalorder %s86, %s102
      %p104 = scmp.eq.s32.totalorder %s36, 0
      %p105 = por %p103, %p104
      %s106 = ssub.s32 %s37, %s49
      %s107 = ssub.s32 %s38, %s45
      %s108 = sor.u32 %s106, %s107
      %p109 = scmp.eq.s32.totalorder %s108, 0
      %s111 = sadd.s32 %s110, 1
      %s112 = scalar_select %p109, %s110, %s111
      %p115 = pneg %p109
      %p116 = scmp.eq.s32.totalorder %s30, 1
      %p117 = por %p115, %p116
      %p118 = scmp.ne.s32.totalorder %s110, %s113
      %p119 = scmp.eq.s32.totalorder %s30, 0
      %p120 = por %p118, %p119
      %p121 = scmp.ne.s32.totalorder %s110, %s113
      %p122 = scmp.eq.s32.totalorder %s35, 1
      %p123 = por %p121, %p122
      %p124 = scmp.ne.s32.totalorder %s113, %s114
      %p125 = scmp.eq.s32.totalorder %s35, 0
      %p126 = por %p124, %p125
      %p127 = scmp.ne.s32.totalorder %s113, %s114
      %p128 = scmp.eq.s32.totalorder %s36, 1
      %p129 = por %p127, %p128
      %p131 = scmp.ne.s32.totalorder %s114, %s130
      %p132 = scmp.eq.s32.totalorder %s36, 0
      %p133 = por %p131, %p132
      %s134 = ssub.s32 %s37, %s49
      %s135 = ssub.s32 %s38, %s45
      %s136 = sor.u32 %s134, %s135
      %p137 = scmp.eq.s32.totalorder %s136, 0
      %s139 = sadd.s32 %s138, 1
      %s140 = scalar_select %p137, %s138, %s139
      %p143 = pneg %p137
      %p144 = scmp.eq.s32.totalorder %s30, 1
      %p145 = por %p143, %p144
      %p146 = scmp.ne.s32.totalorder %s138, %s141
      %p147 = scmp.eq.s32.totalorder %s30, 0
      %p148 = por %p146, %p147
      %p149 = scmp.ne.s32.totalorder %s138, %s141
      %p150 = scmp.eq.s32.totalorder %s35, 1
      %p151 = por %p149, %p150
      %p152 = scmp.ne.s32.totalorder %s141, %s142
      %p153 = scmp.eq.s32.totalorder %s35, 0
      %p154 = por %p152, %p153
      %p155 = scmp.ne.s32.totalorder %s141, %s142
      %p156 = scmp.eq.s32.totalorder %s36, 1
      %p157 = por %p155, %p156
      %p159 = scmp.ne.s32.totalorder %s142, %s158
      %p160 = scmp.eq.s32.totalorder %s36, 0
      %p161 = por %p159, %p160
      %s162 = ssub.s32 %s38, %s45
      %p163 = scmp.eq.s32.totalorder %s162, 0
      %s165 = sadd.s32 %s164, 1
      %s166 = scalar_select %p163, %s164, %s165
      %p169 = pneg %p163
      %p170 = scmp.eq.s32.totalorder %s30, 1
      %p171 = por %p169, %p170
      %p172 = scmp.ne.s32.totalorder %s164, %s167
      %p173 = scmp.eq.s32.totalorder %s30, 0
      %p174 = por %p172, %p173
      %p175 = scmp.ne.s32.totalorder %s164, %s167
      %p176 = scmp.eq.s32.totalorder %s35, 1
      %p177 = por %p175, %p176
      %p178 = scmp.ne.s32.totalorder %s167, %s168
      %p179 = scmp.eq.s32.totalorder %s35, 0
      %p180 = por %p178, %p179
      %p181 = scmp.ne.s32.totalorder %s167, %s168
      %p182 = scmp.eq.s32.totalorder %s36, 1
      %p183 = por %p181, %p182
      %p185 = scmp.ne.s32.totalorder %s168, %s184
      %p186 = scmp.eq.s32.totalorder %s36, 0
      %p187 = por %p185, %p186
      %s189 = sadd.s32 %s188, 1
      %p192 = scmp.eq.s32.totalorder %s30, 1
      %p193 = scmp.ne.s32.totalorder %s188, %s190
      %p194 = scmp.eq.s32.totalorder %s30, 0
      %p195 = por %p193, %p194
      %p196 = scmp.ne.s32.totalorder %s188, %s190
      %p197 = scmp.eq.s32.totalorder %s35, 1
      %p198 = por %p196, %p197
      %p199 = scmp.ne.s32.totalorder %s190, %s191
      %p200 = scmp.eq.s32.totalorder %s35, 0
      %p201 = por %p199, %p200
      %p202 = scmp.ne.s32.totalorder %s190, %s191
      %p203 = scmp.eq.s32.totalorder %s36, 1
      %p204 = por %p202, %p203
      %p206 = scmp.ne.s32.totalorder %s191, %s205
      %p207 = scmp.eq.s32.totalorder %s36, 0
      %p208 = por %p206, %p207
      %s210 = sadd.s32 %s209, 1
      %p213 = scmp.eq.s32.totalorder %s30, 1
      %p214 = scmp.ne.s32.totalorder %s209, %s211
      %p215 = scmp.eq.s32.totalorder %s30, 0
      %p216 = por %p214, %p215
      %p217 = scmp.ne.s32.totalorder %s209, %s211
      %p218 = scmp.eq.s32.totalorder %s35, 1
      %p219 = por %p217, %p218
      %p220 = scmp.ne.s32.totalorder %s211, %s212
      %p221 = scmp.eq.s32.totalorder %s35, 0
      %p222 = por %p220, %p221
      %p223 = scmp.ne.s32.totalorder %s211, %s212
      %p224 = scmp.eq.s32.totalorder %s36, 1
      %p225 = por %p223, %p224
      %p227 = scmp.ne.s32.totalorder %s212, %s226
      %p228 = scmp.eq.s32.totalorder %s36, 0
      %p229 = por %p227, %p228
      %s230 = ssub.s32 %s37, %s49
      %s231 = ssub.s32 %s38, %s45
      %s232 = sor.u32 %s230, %s231
      %p233 = scmp.eq.s32.totalorder %s232, 0
      %s235 = sadd.s32 %s234, 1
      %s236 = scalar_select %p233, %s234, %s235
      %p239 = pneg %p233
      %p240 = scmp.eq.s32.totalorder %s30, 1
      %p241 = por %p239, %p240
      %p242 = scmp.ne.s32.totalorder %s234, %s237
      %p243 = scmp.eq.s32.totalorder %s30, 0
      %p244 = por %p242, %p243
      %p245 = scmp.ne.s32.totalorder %s234, %s237
      %p246 = scmp.eq.s32.totalorder %s35, 1
      %p247 = por %p245, %p246
      %p248 = scmp.ne.s32.totalorder %s237, %s238
      %p249 = scmp.eq.s32.totalorder %s35, 0
      %p250 = por %p248, %p249
      %p251 = scmp.ne.s32.totalorder %s237, %s238
      %p252 = scmp.eq.s32.totalorder %s36, 1
      %p253 = por %p251, %p252
      %p255 = scmp.ne.s32.totalorder %s238, %s254
      %p256 = scmp.eq.s32.totalorder %s36, 0
      %p257 = por %p255, %p256
      %s258 = ssub.s32 %s37, %s49
      %s259 = ssub.s32 %s38, %s45
      %s260 = sor.u32 %s258, %s259
      %p261 = scmp.eq.s32.totalorder %s260, 0
      %s263 = sadd.s32 %s262, 1
      %s264 = scalar_select %p261, %s262, %s263
      %p267 = pneg %p261
      %p268 = scmp.eq.s32.totalorder %s30, 1
      %p269 = por %p267, %p268
      %p270 = scmp.ne.s32.totalorder %s262, %s265
      %p271 = scmp.eq.s32.totalorder %s30, 0
      %p272 = por %p270, %p271
      %p273 = scmp.ne.s32.totalorder %s262, %s265
      %p274 = scmp.eq.s32.totalorder %s35, 1
      %p275 = por %p273, %p274
      %p276 = scmp.ne.s32.totalorder %s265, %s266
      %p277 = scmp.eq.s32.totalorder %s35, 0
      %p278 = por %p276, %p277
      %p279 = scmp.ne.s32.totalorder %s265, %s266
      %p280 = scmp.eq.s32.totalorder %s36, 1
      %p281 = por %p279, %p280
      %p283 = scmp.ne.s32.totalorder %s266, %s282
      %p284 = scmp.eq.s32.totalorder %s36, 0
      %p285 = por %p283, %p284
      %p286 = scmp.le.s32.totalorder 1, %s30
      %p287 = scmp.lt.s32.totalorder %s30, 3
      %p288 = pnand %p286, %p287
      %p289 = pneg %p288
      // Predicated region
      $region9: #{tpu_custom_call.1} parent=5 // pred_check
        _
      $region10: #{tpu_custom_call.1} parent=5 // pred_check_branch
        %291 = sbr.rel (%p288) target = $region12
      $region11: #{tpu_custom_call.1} parent=5 // pred_region
        %s292 = ssub.s32 %s30, 1
        // Predicated region
        $region13: #{tpu_custom_call.1} parent=11 // pred_check
          %p293 = pneg %p180
        $region14: #{tpu_custom_call.1} parent=11 // pred_check_branch
          %295 = sbr.rel (%p293) target = $region16
        $region15: #{tpu_custom_call.1} parent=11 // pred_region
          %p296 = scmp.lt.s32.totalorder %s40, 0
          %s297 = scalar_select %p296, %s40, 0
          %s298 = scalar_lea.vmem %s4, %s297
        $region16: #{tpu_custom_call.1} parent=11 // pred_fallthru
          _
        // Predicated region
        $region17: #{tpu_custom_call.1} parent=11 // pred_check
          %p299 = pneg %p201
        $region18: #{tpu_custom_call.1} parent=11 // pred_check_branch
          %301 = sbr.rel (%p299) target = $region20
        $region19: #{tpu_custom_call.1} parent=11 // pred_region
          _
        $region20: #{tpu_custom_call.1} parent=11 // pred_fallthru
          _
        // Predicated region
        $region21: #{tpu_custom_call.1} parent=11 // pred_check
          %p302 = pneg %p222
        $region22: #{tpu_custom_call.1} parent=11 // pred_check_branch
          %304 = sbr.rel (%p302) target = $region24
        $region23: #{tpu_custom_call.1} parent=11 // pred_region
          _
        $region24: #{tpu_custom_call.1} parent=11 // pred_fallthru
          _
      $region12: #{tpu_custom_call.1} parent=5 // pred_fallthru
        _
      %p305 = scmp.lt.s32.totalorder %s30, 2
      // Predicated region
      $region25: #{tpu_custom_call.1} parent=5 // pred_check
        %p306 = pneg %p305
      $region26: #{tpu_custom_call.1} parent=5 // pred_check_branch
        %308 = sbr.rel (%p306) target = $region28
      $region27: #{tpu_custom_call.1} parent=5 // pred_region
        // Predicated region
        $region29: #{tpu_custom_call.1} parent=27 // pred_check
          %p309 = pneg %p64
        $region30: #{tpu_custom_call.1} parent=27 // pred_check_branch
          %311 = sbr.rel (%p309) target = $region32
        $region31: #{tpu_custom_call.1} parent=27 // pred_region
          %s312 = sand.u32 %s54, 1
          %s313 = scalar_lea.sflag [#allocation3], %s312
          %s314 = sand.u32 %s54, 1
          %s315 = smul.addr %s314, 64
          %s316 = scalar_lea.vmem [#allocation2], %s315
          %s318 = ssub.s32 1024, 1024
          %319 = vsyncadd %s313, %s318
          %s320 = smul.addr %s37, 8
          %s321 = sadd.s32 %s38, %s320
          %s322 = smul.addr %s321, 128
          %s323 = scalar_lea.hbm %s0, %s322
          %s324 = sshll.u32 %s316, 4
          %s325 = int_to_ptr.vmem [resolvable:$true] %s324
          %330 = dma.hbm_to_vmem [thread:$0]  %s323, 1024, %s325, %s313, 128, 128, 8
        $region32: #{tpu_custom_call.1} parent=27 // pred_fallthru
          _
        // Predicated region
        $region33: #{tpu_custom_call.1} parent=27 // pred_check
          %p331 = pneg %p92
        $region34: #{tpu_custom_call.1} parent=27 // pred_check_branch
          %333 = sbr.rel (%p331) target = $region36
        $region35: #{tpu_custom_call.1} parent=27 // pred_region
          %s334 = sand.u32 %s30, 1
          %s335 = scalar_lea.sflag [#allocation6], %s334
          %s336 = sand.u32 %s82, 1
          %s337 = smul.addr %s336, 64
          %s338 = scalar_lea.vmem [#allocation5], %s337
          %s340 = ssub.s32 1024, 1024
          %341 = vsyncadd %s335, %s340
          %s342 = smul.addr %s37, 8
          %s343 = sadd.s32 %s38, %s342
          %s344 = smul.addr %s343, 128
          %s345 = scalar_lea.hbm %s1, %s344
          %s346 = sshll.u32 %s338, 4
          %s347 = int_to_ptr.vmem [resolvable:$true] %s346
          %352 = dma.hbm_to_vmem [thread:$0]  %s345, 1024, %s347, %s335, 128, 128, 8
        $region36: #{tpu_custom_call.1} parent=27 // pred_fallthru
          _
        // Predicated region
        $region37: #{tpu_custom_call.1} parent=27 // pred_check
          %p353 = pneg %p120
        $region38: #{tpu_custom_call.1} parent=27 // pred_check_branch
          %355 = sbr.rel (%p353) target = $region40
        $region39: #{tpu_custom_call.1} parent=27 // pred_region
          %s356 = sand.u32 %s30, 1
          %s357 = scalar_lea.sflag [#allocation6], %s356
          %s358 = sand.u32 %s110, 1
          %s359 = smul.addr %s358, 64
          %s360 = scalar_lea.vmem [#allocation7], %s359
          %s362 = ssub.s32 1024, 1024
          %363 = vsyncadd %s357, %s362
          %s364 = smul.addr %s37, 8
          %s365 = sadd.s32 %s38, %s364
          %s366 = smul.addr %s365, 128
          %s367 = scalar_lea.hbm %s2, %s366
          %s368 = sshll.u32 %s360, 4
          %s369 = int_to_ptr.vmem [resolvable:$true] %s368
          %374 = dma.hbm_to_vmem [thread:$0]  %s367, 1024, %s369, %s357, 128, 128, 8
        $region40: #{tpu_custom_call.1} parent=27 // pred_fallthru
          _
        // Predicated region
        $region41: #{tpu_custom_call.1} parent=27 // pred_check
          %p375 = pneg %p148
        $region42: #{tpu_custom_call.1} parent=27 // pred_check_branch
          %377 = sbr.rel (%p375) target = $region44
        $region43: #{tpu_custom_call.1} parent=27 // pred_region
          %s378 = sand.u32 %s138, 1
          %s379 = scalar_lea.sflag [#allocation9], %s378
          %s380 = sand.u32 %s138, 1
          %s381 = smul.addr %s380, 64
          %s382 = scalar_lea.vmem [#allocation8], %s381
          %s384 = ssub.s32 1024, 1024
          %385 = vsyncadd %s379, %s384
          %s386 = smul.addr %s37, 8
          %s387 = sadd.s32 %s38, %s386
          %s388 = smul.addr %s387, 128
          %s389 = scalar_lea.hbm %s3, %s388
          %s390 = sshll.u32 %s382, 4
          %s391 = int_to_ptr.vmem [resolvable:$true] %s390
          %396 = dma.hbm_to_vmem [thread:$0]  %s389, 1024, %s391, %s379, 128, 128, 8
        $region44: #{tpu_custom_call.1} parent=27 // pred_fallthru
          _
      $region28: #{tpu_custom_call.1} parent=5 // pred_fallthru
        _
      %p397 = scmp.le.s32.totalorder 1, %s30
      %p398 = scmp.lt.s32.totalorder %s30, 3
      %p399 = pnand %p397, %p398
      %p400 = pneg %p399
      // Predicated region
      $region45: #{tpu_custom_call.1} parent=5 // pred_check
        _
      $region46: #{tpu_custom_call.1} parent=5 // pred_check_branch
        %402 = sbr.rel (%p399) target = $region48
      $region47: #{tpu_custom_call.1} parent=5 // pred_region
        %s403 = ssub.s32 %s30, 1
        %s404 = sand.u32 %s57, 1
        %s405 = scalar_lea.sflag [#allocation3], %s404
        %s406 = sand.u32 %s57, 1
        %s407 = smul.addr %s406, 64
        %s408 = scalar_lea.vmem [#allocation2], %s407
        // Predicated region
        $region49: #{tpu_custom_call.1} parent=47 // pred_check
          %p409 = pneg %p70
        $region50: #{tpu_custom_call.1} parent=47 // pred_check_branch
          %411 = sbr.rel (%p409) target = $region52
        $region51: #{tpu_custom_call.1} parent=47 // pred_region
          %412 = dma.done %s405, 1024
        $region52: #{tpu_custom_call.1} parent=47 // pred_fallthru
          _
        %s413 = sand.u32 %s35, 1
        %s414 = scalar_lea.sflag [#allocation6], %s413
        %s415 = sand.u32 %s85, 1
        %s416 = smul.addr %s415, 64
        %s417 = scalar_lea.vmem [#allocation5], %s416
        // Predicated region
        $region53: #{tpu_custom_call.1} parent=47 // pred_check
          %p418 = pneg %p98
        $region54: #{tpu_custom_call.1} parent=47 // pred_check_branch
          %420 = sbr.rel (%p418) target = $region56
        $region55: #{tpu_custom_call.1} parent=47 // pred_region
          %421 = dma.done %s414, 1024
        $region56: #{tpu_custom_call.1} parent=47 // pred_fallthru
          _
        %s422 = sand.u32 %s35, 1
        %s423 = scalar_lea.sflag [#allocation6], %s422
        %s424 = sand.u32 %s113, 1
        %s425 = smul.addr %s424, 64
        %s426 = scalar_lea.vmem [#allocation7], %s425
        // Predicated region
        $region57: #{tpu_custom_call.1} parent=47 // pred_check
          %p427 = pneg %p126
        $region58: #{tpu_custom_call.1} parent=47 // pred_check_branch
          %429 = sbr.rel (%p427) target = $region60
        $region59: #{tpu_custom_call.1} parent=47 // pred_region
          %430 = dma.done %s423, 1024
        $region60: #{tpu_custom_call.1} parent=47 // pred_fallthru
          _
        %s431 = sand.u32 %s141, 1
        %s432 = scalar_lea.sflag [#allocation9], %s431
        %s433 = sand.u32 %s141, 1
        %s434 = smul.addr %s433, 64
        %s435 = scalar_lea.vmem [#allocation8], %s434
        // Predicated region
        $region61: #{tpu_custom_call.1} parent=47 // pred_check
          %p436 = pneg %p154
        $region62: #{tpu_custom_call.1} parent=47 // pred_check_branch
          %438 = sbr.rel (%p436) target = $region64
        $region63: #{tpu_custom_call.1} parent=47 // pred_region
          %439 = dma.done %s432, 1024
        $region64: #{tpu_custom_call.1} parent=47 // pred_fallthru
          _
        %s440 = sand.u32 %s57, 1
        %s441 = scalar_lea.sflag [#allocation3], %s440
        %s442 = sand.u32 %s57, 1
        %s443 = smul.addr %s442, 64
        %s444 = scalar_lea.vmem [#allocation2], %s443
        %p445 = pneg %p70
        %p446 = pneg %p67
        %s447 = sand.u32 %s35, 1
        %s448 = scalar_lea.sflag [#allocation6], %s447
        %s449 = sand.u32 %s85, 1
        %s450 = smul.addr %s449, 64
        %s451 = scalar_lea.vmem [#allocation5], %s450
        %p452 = pneg %p98
        %p453 = pneg %p95
        %s454 = sand.u32 %s35, 1
        %s455 = scalar_lea.sflag [#allocation6], %s454
        %s456 = sand.u32 %s113, 1
        %s457 = smul.addr %s456, 64
        %s458 = scalar_lea.vmem [#allocation7], %s457
        %p459 = pneg %p126
        %p460 = pneg %p123
        %s461 = sand.u32 %s141, 1
        %s462 = scalar_lea.sflag [#allocation9], %s461
        %s463 = sand.u32 %s141, 1
        %s464 = smul.addr %s463, 64
        %s465 = scalar_lea.vmem [#allocation8], %s464
        %p466 = pneg %p154
        %p467 = pneg %p151
        %p468 = scmp.lt.s32.totalorder %s40, 0
        %s469 = scalar_select %p468, %s40, 0
        %s470 = scalar_lea.vmem %s4, %s469
        %p471 = pneg %p180
        %p472 = pneg %p177
        %p473 = pneg %p201
        %p474 = pneg %p198
        %p475 = pneg %p222
        %p476 = pneg %p219
        %p477 = pneg %p250
        %p478 = pneg %p247
        %s479 = sand.u32 %s237, 1
        %s480 = scalar_lea.sflag [#allocation4], %s479
        %s481 = sand.u32 %s237, 1
        %s482 = smul.addr %s481, 64
        %s483 = scalar_lea.vmem [#allocation10], %s482
        %p484 = pneg %p278
        %p485 = pneg %p275
        %s486 = sand.u32 %s265, 1
        %s487 = scalar_lea.sflag [#allocation12], %s486
        %s488 = sand.u32 %s265, 1
        %s489 = smul.addr %s488, 64
        %s490 = scalar_lea.vmem [#allocation11], %s489
        %p491 = scmp.lt.s32.totalorder %s40, 0
        %s492 = scalar_select %p491, %s40, 0
        %s493 = scalar_lea.vmem %s4, %s492
        %v494 = vld [vmem:[%s408] sm:$0xff]
        %v495 = vld [vmem:[%s408 + $0x8] sm:$0xff]
        %v496 = vld [vmem:[%s408 + $0x10] sm:$0xff]
        %v497 = vld [vmem:[%s408 + $0x18] sm:$0xff]
        %v498 = vld [vmem:[%s408 + $0x20] sm:$0xff]
        %v499 = vld [vmem:[%s408 + $0x28] sm:$0xff]
        %v500 = vld [vmem:[%s408 + $0x30] sm:$0xff]
        %v501 = vld [vmem:[%s408 + $0x38] sm:$0xff]
        %v502 = vld [vmem:[%s417] sm:$0xff]
        %v503 = vld [vmem:[%s417 + $0x8] sm:$0xff]
        %v504 = vld [vmem:[%s417 + $0x10] sm:$0xff]
        %v505 = vld [vmem:[%s417 + $0x18] sm:$0xff]
        %v506 = vld [vmem:[%s417 + $0x20] sm:$0xff]
        %v507 = vld [vmem:[%s417 + $0x28] sm:$0xff]
        %v508 = vld [vmem:[%s417 + $0x30] sm:$0xff]
        %v509 = vld [vmem:[%s417 + $0x38] sm:$0xff]
        %v510 = vld [vmem:[%s426] sm:$0xff]
        %v511 = vld [vmem:[%s426 + $0x8] sm:$0xff]
        %v512 = vld [vmem:[%s426 + $0x10] sm:$0xff]
        %v513 = vld [vmem:[%s426 + $0x18] sm:$0xff]
        %v514 = vld [vmem:[%s426 + $0x20] sm:$0xff]
        %v515 = vld [vmem:[%s426 + $0x28] sm:$0xff]
        %v516 = vld [vmem:[%s426 + $0x30] sm:$0xff]
        %v517 = vld [vmem:[%s426 + $0x38] sm:$0xff]
        %v518 = vld [vmem:[%s435] sm:$0xff]
        %v519 = vld [vmem:[%s435 + $0x8] sm:$0xff]
        %v520 = vld [vmem:[%s435 + $0x10] sm:$0xff]
        %v521 = vld [vmem:[%s435 + $0x18] sm:$0xff]
        %v522 = vld [vmem:[%s435 + $0x20] sm:$0xff]
        %v523 = vld [vmem:[%s435 + $0x28] sm:$0xff]
        %v524 = vld [vmem:[%s435 + $0x30] sm:$0xff]
        %v525 = vld [vmem:[%s435 + $0x38] sm:$0xff]
        %v526 = vld [vmem:[%s493] sm:$0x1]
        %v527 = vld [vmem:[%s5] sm:$0xff]
        %v528 = vld [vmem:[%s5 + $0x8] sm:$0xff]
        %v529 = vld [vmem:[%s5 + $0x10] sm:$0xff]
        %v530 = vld [vmem:[%s5 + $0x18] sm:$0xff]
        %v531 = vld [vmem:[%s5 + $0x20] sm:$0xff]
        %v532 = vld [vmem:[%s5 + $0x28] sm:$0xff]
        %v533 = vld [vmem:[%s5 + $0x30] sm:$0xff]
        %v534 = vld [vmem:[%s5 + $0x38] sm:$0xff]
        %v535 = vld [vmem:[%s6] sm:$0xff]
        %v536 = vld [vmem:[%s6 + $0x8] sm:$0xff]
        %v537 = vld [vmem:[%s6 + $0x10] sm:$0xff]
        %v538 = vld [vmem:[%s6 + $0x18] sm:$0xff]
        %v539 = vld [vmem:[%s6 + $0x20] sm:$0xff]
        %v540 = vld [vmem:[%s6 + $0x28] sm:$0xff]
        %v541 = vld [vmem:[%s6 + $0x30] sm:$0xff]
        %v542 = vld [vmem:[%s6 + $0x38] sm:$0xff]
        %v543 = vmul.f32 %v494, %v494
        %v544 = vmul.f32 %v495, %v495
        %v545 = vmul.f32 %v496, %v496
        %v546 = vmul.f32 %v497, %v497
        %v547 = vmul.f32 %v498, %v498
        %v548 = vmul.f32 %v499, %v499
        %v549 = vmul.f32 %v500, %v500
        %v550 = vmul.f32 %v501, %v501
        %v551 = vmul.f32 %v502, %v502
        %v552 = vmul.f32 %v503, %v503
        %v553 = vmul.f32 %v504, %v504
        %v554 = vmul.f32 %v505, %v505
        %v555 = vmul.f32 %v506, %v506
        %v556 = vmul.f32 %v507, %v507
        %v557 = vmul.f32 %v508, %v508
        %v558 = vmul.f32 %v509, %v509
        %v559 = vadd.f32 %v543, %v551
        %v560 = vadd.f32 %v544, %v552
        %v561 = vadd.f32 %v545, %v553
        %v562 = vadd.f32 %v546, %v554
        %v563 = vadd.f32 %v547, %v555
        %v564 = vadd.f32 %v548, %v556
        %v565 = vadd.f32 %v549, %v557
        %v566 = vadd.f32 %v550, %v558
        %v567 = vrsqrt.pop %v559
        %v568 = vmul.f32 %v559, %v567
        %vm569 = vcmp.eq.f32.partialorder %v559, inf
        %v570 = vsel %vm569, %v559, %v568
        %vm571 = vcmp.eq.f32.partialorder %v559, 0.0
        %v572 = vand.u32 %v559, 2147483648
        %v573 = vsel %vm571, %v572, %v570
        %v574 = vrsqrt.pop %v560
        %v575 = vmul.f32 %v560, %v574
        %vm576 = vcmp.eq.f32.partialorder %v560, inf
        %v577 = vsel %vm576, %v560, %v575
        %vm578 = vcmp.eq.f32.partialorder %v560, 0.0
        %v579 = vand.u32 %v560, 2147483648
        %v580 = vsel %vm578, %v579, %v577
        %v581 = vrsqrt.pop %v561
        %v582 = vmul.f32 %v561, %v581
        %vm583 = vcmp.eq.f32.partialorder %v561, inf
        %v584 = vsel %vm583, %v561, %v582
        %vm585 = vcmp.eq.f32.partialorder %v561, 0.0
        %v586 = vand.u32 %v561, 2147483648
        %v587 = vsel %vm585, %v586, %v584
        %v588 = vrsqrt.pop %v562
        %v589 = vmul.f32 %v562, %v588
        %vm590 = vcmp.eq.f32.partialorder %v562, inf
        %v591 = vsel %vm590, %v562, %v589
        %vm592 = vcmp.eq.f32.partialorder %v562, 0.0
        %v593 = vand.u32 %v562, 2147483648
        %v594 = vsel %vm592, %v593, %v591
        %v595 = vrsqrt.pop %v563
        %v596 = vmul.f32 %v563, %v595
        %vm597 = vcmp.eq.f32.partialorder %v563, inf
        %v598 = vsel %vm597, %v563, %v596
        %vm599 = vcmp.eq.f32.partialorder %v563, 0.0
        %v600 = vand.u32 %v563, 2147483648
        %v601 = vsel %vm599, %v600, %v598
        %v602 = vrsqrt.pop %v564
        %v603 = vmul.f32 %v564, %v602
        %vm604 = vcmp.eq.f32.partialorder %v564, inf
        %v605 = vsel %vm604, %v564, %v603
        %vm606 = vcmp.eq.f32.partialorder %v564, 0.0
        %v607 = vand.u32 %v564, 2147483648
        %v608 = vsel %vm606, %v607, %v605
        %v609 = vrsqrt.pop %v565
        %v610 = vmul.f32 %v565, %v609
        %vm611 = vcmp.eq.f32.partialorder %v565, inf
        %v612 = vsel %vm611, %v565, %v610
        %vm613 = vcmp.eq.f32.partialorder %v565, 0.0
        %v614 = vand.u32 %v565, 2147483648
        %v615 = vsel %vm613, %v614, %v612
        %v616 = vrsqrt.pop %v566
        %v617 = vmul.f32 %v566, %v616
        %vm618 = vcmp.eq.f32.partialorder %v566, inf
        %v619 = vsel %vm618, %v566, %v617
        %vm620 = vcmp.eq.f32.partialorder %v566, 0.0
        %v621 = vand.u32 %v566, 2147483648
        %v622 = vsel %vm620, %v621, %v619
        %v623 = vmul.f32 %v510, %v510
        %v624 = vmul.f32 %v511, %v511
        %v625 = vmul.f32 %v512, %v512
        %v626 = vmul.f32 %v513, %v513
        %v627 = vmul.f32 %v514, %v514
        %v628 = vmul.f32 %v515, %v515
        %v629 = vmul.f32 %v516, %v516
        %v630 = vmul.f32 %v517, %v517
        %v631 = vmul.f32 %v518, %v518
        %v632 = vmul.f32 %v519, %v519
        %v633 = vmul.f32 %v520, %v520
        %v634 = vmul.f32 %v521, %v521
        %v635 = vmul.f32 %v522, %v522
        %v636 = vmul.f32 %v523, %v523
        %v637 = vmul.f32 %v524, %v524
        %v638 = vmul.f32 %v525, %v525
        %v639 = vadd.f32 %v623, %v631
        %v640 = vadd.f32 %v624, %v632
        %v641 = vadd.f32 %v625, %v633
        %v642 = vadd.f32 %v626, %v634
        %v643 = vadd.f32 %v627, %v635
        %v644 = vadd.f32 %v628, %v636
        %v645 = vadd.f32 %v629, %v637
        %v646 = vadd.f32 %v630, %v638
        %v647 = vrsqrt.pop %v639
        %v648 = vmul.f32 %v639, %v647
        %vm649 = vcmp.eq.f32.partialorder %v639, inf
        %v650 = vsel %vm649, %v639, %v648
        %vm651 = vcmp.eq.f32.partialorder %v639, 0.0
        %v652 = vand.u32 %v639, 2147483648
        %v653 = vsel %vm651, %v652, %v650
        %v654 = vrsqrt.pop %v640
        %v655 = vmul.f32 %v640, %v654
        %vm656 = vcmp.eq.f32.partialorder %v640, inf
        %v657 = vsel %vm656, %v640, %v655
        %vm658 = vcmp.eq.f32.partialorder %v640, 0.0
        %v659 = vand.u32 %v640, 2147483648
        %v660 = vsel %vm658, %v659, %v657
        %v661 = vrsqrt.pop %v641
        %v662 = vmul.f32 %v641, %v661
        %vm663 = vcmp.eq.f32.partialorder %v641, inf
        %v664 = vsel %vm663, %v641, %v662
        %vm665 = vcmp.eq.f32.partialorder %v641, 0.0
        %v666 = vand.u32 %v641, 2147483648
        %v667 = vsel %vm665, %v666, %v664
        %v668 = vrsqrt.pop %v642
        %v669 = vmul.f32 %v642, %v668
        %vm670 = vcmp.eq.f32.partialorder %v642, inf
        %v671 = vsel %vm670, %v642, %v669
        %vm672 = vcmp.eq.f32.partialorder %v642, 0.0
        %v673 = vand.u32 %v642, 2147483648
        %v674 = vsel %vm672, %v673, %v671
        %v675 = vrsqrt.pop %v643
        %v676 = vmul.f32 %v643, %v675
        %vm677 = vcmp.eq.f32.partialorder %v643, inf
        %v678 = vsel %vm677, %v643, %v676
        %vm679 = vcmp.eq.f32.partialorder %v643, 0.0
        %v680 = vand.u32 %v643, 2147483648
        %v681 = vsel %vm679, %v680, %v678
        %v682 = vrsqrt.pop %v644
        %v683 = vmul.f32 %v644, %v682
        %vm684 = vcmp.eq.f32.partialorder %v644, inf
        %v685 = vsel %vm684, %v644, %v683
        %vm686 = vcmp.eq.f32.partialorder %v644, 0.0
        %v687 = vand.u32 %v644, 2147483648
        %v688 = vsel %vm686, %v687, %v685
        %v689 = vrsqrt.pop %v645
        %v690 = vmul.f32 %v645, %v689
        %vm691 = vcmp.eq.f32.partialorder %v645, inf
        %v692 = vsel %vm691, %v645, %v690
        %vm693 = vcmp.eq.f32.partialorder %v645, 0.0
        %v694 = vand.u32 %v645, 2147483648
        %v695 = vsel %vm693, %v694, %v692
        %v696 = vrsqrt.pop %v646
        %v697 = vmul.f32 %v646, %v696
        %vm698 = vcmp.eq.f32.partialorder %v646, inf
        %v699 = vsel %vm698, %v646, %v697
        %vm700 = vcmp.eq.f32.partialorder %v646, 0.0
        %v701 = vand.u32 %v646, 2147483648
        %v702 = vsel %vm700, %v701, %v699
        %v703 = vmul.f32 %v518, %v494
        %v704 = vmul.f32 %v519, %v495
        %v705 = vmul.f32 %v520, %v496
        %v706 = vmul.f32 %v521, %v497
        %v707 = vmul.f32 %v522, %v498
        %v708 = vmul.f32 %v523, %v499
        %v709 = vmul.f32 %v524, %v500
        %v710 = vmul.f32 %v525, %v501
        %v711 = vmul.f32 %v510, %v502
        %v712 = vmul.f32 %v511, %v503
        %v713 = vmul.f32 %v512, %v504
        %v714 = vmul.f32 %v513, %v505
        %v715 = vmul.f32 %v514, %v506
        %v716 = vmul.f32 %v515, %v507
        %v717 = vmul.f32 %v516, %v508
        %v718 = vmul.f32 %v517, %v509
        %v719 = vsub.f32 %v703, %v711
        %v720 = vsub.f32 %v704, %v712
        %v721 = vsub.f32 %v705, %v713
        %v722 = vsub.f32 %v706, %v714
        %v723 = vsub.f32 %v707, %v715
        %v724 = vsub.f32 %v708, %v716
        %v725 = vsub.f32 %v709, %v717
        %v726 = vsub.f32 %v710, %v718
        %v727 = vmul.f32 %v510, %v494
        %v728 = vmul.f32 %v511, %v495
        %v729 = vmul.f32 %v512, %v496
        %v730 = vmul.f32 %v513, %v497
        %v731 = vmul.f32 %v514, %v498
        %v732 = vmul.f32 %v515, %v499
        %v733 = vmul.f32 %v516, %v500
        %v734 = vmul.f32 %v517, %v501
        %v735 = vmul.f32 %v518, %v502
        %v736 = vmul.f32 %v519, %v503
        %v737 = vmul.f32 %v520, %v504
        %v738 = vmul.f32 %v521, %v505
        %v739 = vmul.f32 %v522, %v506
        %v740 = vmul.f32 %v523, %v507
        %v741 = vmul.f32 %v524, %v508
        %v742 = vmul.f32 %v525, %v509
        %v743 = vadd.f32 %v727, %v735
        %v744 = vadd.f32 %v728, %v736
        %v745 = vadd.f32 %v729, %v737
        %v746 = vadd.f32 %v730, %v738
        %v747 = vadd.f32 %v731, %v739
        %v748 = vadd.f32 %v732, %v740
        %v749 = vadd.f32 %v733, %v741
        %v750 = vadd.f32 %v734, %v742
        %v751 = vand.u32 2147483647, %v743
        %v752 = vand.u32 2147483647, %v719
        %v753 = vmin.f32 %v751, %v752
        %v754 = vmax.f32 %v751, %v752
        %v755 = vrcp.pop %v754
        %v756 = vmul.f32 %v753, %v755
        %v757 = vmul.f32 %v756, %v756
        %v758 = vmul.f32 0.002785687, %v757
        %v759 = vadd.f32 %v758, -0.015866
        %v760 = vmul.f32 %v759, %v757
        %v761 = vadd.f32 %v760, 0.04247222
        %v762 = vmul.f32 %v761, %v757
        %v763 = vadd.f32 %v762, -0.074975304
        %v764 = vmul.f32 %v763, %v757
        %v765 = vadd.f32 %v764, 0.1064488
        %v766 = vmul.f32 %v765, %v757
        %v767 = vadd.f32 %v766, -0.14207031
        %v768 = vmul.f32 %v767, %v757
        %v769 = vadd.f32 %v768, 0.19993454
        %v770 = vmul.f32 %v769, %v757
        %v771 = vadd.f32 %v770, -0.33333147
        %v772 = vmul.f32 %v771, %v757
        %v773 = vmul.f32 %v772, %v756
        %v774 = vadd.f32 %v773, %v756
        %vm775 = vcmp.gt.f32.partialorder %v752, %v751
        %v776 = vsub.f32 1.5707964, %v774
        %v777 = vsel %vm775, %v776, %v774
        %vm778 = vcmp.lt.f32.partialorder %v743, 0.0
        %v779 = vsub.f32 3.1415927, %v777
        %v780 = vsel %vm778, %v779, %v777
        %vm781 = vcmp.lt.s32.totalorder %v743, 0
        %v782 = vsel %vm781, 3.1415927, 0.0
        %vm783 = vcmp.eq.f32.partialorder %v719, 0.0
        %v784 = vsel %vm783, %v782, %v780
        %vm785 = vcmp.ne.f32.partialorder %v743, %v743
        %vm786 = vcmp.ne.f32.partialorder %v719, %v719
        %vm787 = vmor %vm785, %vm786
        %v788 = vsel %vm787, nan, %v784
        %vm789 = vcmp.lt.f32.partialorder %v743, 0.0
        %v790 = vsel %vm789, 2.3561945, 0.7853982
        %vm791 = vcmp.eq.s32.totalorder %v751, inf
        %vm792 = vcmp.eq.s32.totalorder %v752, inf
        %vm793 = vmand %vm791, %vm792
        %v794 = vsel %vm793, %v790, %v788
        %v795 = vand.u32 2147483647, %v794
        %v796 = vand.u32 %v719, 2147483648
        %v797 = vor.u32 %v795, %v796
        %v798 = vand.u32 2147483647, %v744
        %v799 = vand.u32 2147483647, %v720
        %v800 = vmin.f32 %v798, %v799
        %v801 = vmax.f32 %v798, %v799
        %v802 = vrcp.pop %v801
        %v803 = vmul.f32 %v800, %v802
        %v804 = vmul.f32 %v803, %v803
        %v805 = vmul.f32 0.002785687, %v804
        %v806 = vadd.f32 %v805, -0.015866
        %v807 = vmul.f32 %v806, %v804
        %v808 = vadd.f32 %v807, 0.04247222
        %v809 = vmul.f32 %v808, %v804
        %v810 = vadd.f32 %v809, -0.074975304
        %v811 = vmul.f32 %v810, %v804
        %v812 = vadd.f32 %v811, 0.1064488
        %v813 = vmul.f32 %v812, %v804
        %v814 = vadd.f32 %v813, -0.14207031
        %v815 = vmul.f32 %v814, %v804
        %v816 = vadd.f32 %v815, 0.19993454
        %v817 = vmul.f32 %v816, %v804
        %v818 = vadd.f32 %v817, -0.33333147
        %v819 = vmul.f32 %v818, %v804
        %v820 = vmul.f32 %v819, %v803
        %v821 = vadd.f32 %v820, %v803
        %vm822 = vcmp.gt.f32.partialorder %v799, %v798
        %v823 = vsub.f32 1.5707964, %v821
        %v824 = vsel %vm822, %v823, %v821
        %vm825 = vcmp.lt.f32.partialorder %v744, 0.0
        %v826 = vsub.f32 3.1415927, %v824
        %v827 = vsel %vm825, %v826, %v824
        %vm828 = vcmp.lt.s32.totalorder %v744, 0
        %v829 = vsel %vm828, 3.1415927, 0.0
        %vm830 = vcmp.eq.f32.partialorder %v720, 0.0
        %v831 = vsel %vm830, %v829, %v827
        %vm832 = vcmp.ne.f32.partialorder %v744, %v744
        %vm833 = vcmp.ne.f32.partialorder %v720, %v720
        %vm834 = vmor %vm832, %vm833
        %v835 = vsel %vm834, nan, %v831
        %vm836 = vcmp.lt.f32.partialorder %v744, 0.0
        %v837 = vsel %vm836, 2.3561945, 0.7853982
        %vm838 = vcmp.eq.s32.totalorder %v798, inf
        %vm839 = vcmp.eq.s32.totalorder %v799, inf
        %vm840 = vmand %vm838, %vm839
        %v841 = vsel %vm840, %v837, %v835
        %v842 = vand.u32 2147483647, %v841
        %v843 = vand.u32 %v720, 2147483648
        %v844 = vor.u32 %v842, %v843
        %v845 = vand.u32 2147483647, %v745
        %v846 = vand.u32 2147483647, %v721
        %v847 = vmin.f32 %v845, %v846
        %v848 = vmax.f32 %v845, %v846
        %v849 = vrcp.pop %v848
        %v850 = vmul.f32 %v847, %v849
        %v851 = vmul.f32 %v850, %v850
        %v852 = vmul.f32 0.002785687, %v851
        %v853 = vadd.f32 %v852, -0.015866
        %v854 = vmul.f32 %v853, %v851
        %v855 = vadd.f32 %v854, 0.04247222
        %v856 = vmul.f32 %v855, %v851
        %v857 = vadd.f32 %v856, -0.074975304
        %v858 = vmul.f32 %v857, %v851
        %v859 = vadd.f32 %v858, 0.1064488
        %v860 = vmul.f32 %v859, %v851
        %v861 = vadd.f32 %v860, -0.14207031
        %v862 = vmul.f32 %v861, %v851
        %v863 = vadd.f32 %v862, 0.19993454
        %v864 = vmul.f32 %v863, %v851
        %v865 = vadd.f32 %v864, -0.33333147
        %v866 = vmul.f32 %v865, %v851
        %v867 = vmul.f32 %v866, %v850
        %v868 = vadd.f32 %v867, %v850
        %vm869 = vcmp.gt.f32.partialorder %v846, %v845
        %v870 = vsub.f32 1.5707964, %v868
        %v871 = vsel %vm869, %v870, %v868
        %vm872 = vcmp.lt.f32.partialorder %v745, 0.0
        %v873 = vsub.f32 3.1415927, %v871
        %v874 = vsel %vm872, %v873, %v871
        %vm875 = vcmp.lt.s32.totalorder %v745, 0
        %v876 = vsel %vm875, 3.1415927, 0.0
        %vm877 = vcmp.eq.f32.partialorder %v721, 0.0
        %v878 = vsel %vm877, %v876, %v874
        %vm879 = vcmp.ne.f32.partialorder %v745, %v745
        %vm880 = vcmp.ne.f32.partialorder %v721, %v721
        %vm881 = vmor %vm879, %vm880
        %v882 = vsel %vm881, nan, %v878
        %vm883 = vcmp.lt.f32.partialorder %v745, 0.0
        %v884 = vsel %vm883, 2.3561945, 0.7853982
        %vm885 = vcmp.eq.s32.totalorder %v845, inf
        %vm886 = vcmp.eq.s32.totalorder %v846, inf
        %vm887 = vmand %vm885, %vm886
        %v888 = vsel %vm887, %v884, %v882
        %v889 = vand.u32 2147483647, %v888
        %v890 = vand.u32 %v721, 2147483648
        %v891 = vor.u32 %v889, %v890
        %v892 = vand.u32 2147483647, %v746
        %v893 = vand.u32 2147483647, %v722
        %v894 = vmin.f32 %v892, %v893
        %v895 = vmax.f32 %v892, %v893
        %v896 = vrcp.pop %v895
        %v897 = vmul.f32 %v894, %v896
        %v898 = vmul.f32 %v897, %v897
        %v899 = vmul.f32 0.002785687, %v898
        %v900 = vadd.f32 %v899, -0.015866
        %v901 = vmul.f32 %v900, %v898
        %v902 = vadd.f32 %v901, 0.04247222
        %v903 = vmul.f32 %v902, %v898
        %v904 = vadd.f32 %v903, -0.074975304
        %v905 = vmul.f32 %v904, %v898
        %v906 = vadd.f32 %v905, 0.1064488
        %v907 = vmul.f32 %v906, %v898
        %v908 = vadd.f32 %v907, -0.14207031
        %v909 = vmul.f32 %v908, %v898
        %v910 = vadd.f32 %v909, 0.19993454
        %v911 = vmul.f32 %v910, %v898
        %v912 = vadd.f32 %v911, -0.33333147
        %v913 = vmul.f32 %v912, %v898
        %v914 = vmul.f32 %v913, %v897
        %v915 = vadd.f32 %v914, %v897
        %vm916 = vcmp.gt.f32.partialorder %v893, %v892
        %v917 = vsub.f32 1.5707964, %v915
        %v918 = vsel %vm916, %v917, %v915
        %vm919 = vcmp.lt.f32.partialorder %v746, 0.0
        %v920 = vsub.f32 3.1415927, %v918
        %v921 = vsel %vm919, %v920, %v918
        %vm922 = vcmp.lt.s32.totalorder %v746, 0
        %v923 = vsel %vm922, 3.1415927, 0.0
        %vm924 = vcmp.eq.f32.partialorder %v722, 0.0
        %v925 = vsel %vm924, %v923, %v921
        %vm926 = vcmp.ne.f32.partialorder %v746, %v746
        %vm927 = vcmp.ne.f32.partialorder %v722, %v722
        %vm928 = vmor %vm926, %vm927
        %v929 = vsel %vm928, nan, %v925
        %vm930 = vcmp.lt.f32.partialorder %v746, 0.0
        %v931 = vsel %vm930, 2.3561945, 0.7853982
        %vm932 = vcmp.eq.s32.totalorder %v892, inf
        %vm933 = vcmp.eq.s32.totalorder %v893, inf
        %vm934 = vmand %vm932, %vm933
        %v935 = vsel %vm934, %v931, %v929
        %v936 = vand.u32 2147483647, %v935
        %v937 = vand.u32 %v722, 2147483648
        %v938 = vor.u32 %v936, %v937
        %v939 = vand.u32 2147483647, %v747
        %v940 = vand.u32 2147483647, %v723
        %v941 = vmin.f32 %v939, %v940
        %v942 = vmax.f32 %v939, %v940
        %v943 = vrcp.pop %v942
        %v944 = vmul.f32 %v941, %v943
        %v945 = vmul.f32 %v944, %v944
        %v946 = vmul.f32 0.002785687, %v945
        %v947 = vadd.f32 %v946, -0.015866
        %v948 = vmul.f32 %v947, %v945
        %v949 = vadd.f32 %v948, 0.04247222
        %v950 = vmul.f32 %v949, %v945
        %v951 = vadd.f32 %v950, -0.074975304
        %v952 = vmul.f32 %v951, %v945
        %v953 = vadd.f32 %v952, 0.1064488
        %v954 = vmul.f32 %v953, %v945
        %v955 = vadd.f32 %v954, -0.14207031
        %v956 = vmul.f32 %v955, %v945
        %v957 = vadd.f32 %v956, 0.19993454
        %v958 = vmul.f32 %v957, %v945
        %v959 = vadd.f32 %v958, -0.33333147
        %v960 = vmul.f32 %v959, %v945
        %v961 = vmul.f32 %v960, %v944
        %v962 = vadd.f32 %v961, %v944
        %vm963 = vcmp.gt.f32.partialorder %v940, %v939
        %v964 = vsub.f32 1.5707964, %v962
        %v965 = vsel %vm963, %v964, %v962
        %vm966 = vcmp.lt.f32.partialorder %v747, 0.0
        %v967 = vsub.f32 3.1415927, %v965
        %v968 = vsel %vm966, %v967, %v965
        %vm969 = vcmp.lt.s32.totalorder %v747, 0
        %v970 = vsel %vm969, 3.1415927, 0.0
        %vm971 = vcmp.eq.f32.partialorder %v723, 0.0
        %v972 = vsel %vm971, %v970, %v968
        %vm973 = vcmp.ne.f32.partialorder %v747, %v747
        %vm974 = vcmp.ne.f32.partialorder %v723, %v723
        %vm975 = vmor %vm973, %vm974
        %v976 = vsel %vm975, nan, %v972
        %vm977 = vcmp.lt.f32.partialorder %v747, 0.0
        %v978 = vsel %vm977, 2.3561945, 0.7853982
        %vm979 = vcmp.eq.s32.totalorder %v939, inf
        %vm980 = vcmp.eq.s32.totalorder %v940, inf
        %vm981 = vmand %vm979, %vm980
        %v982 = vsel %vm981, %v978, %v976
        %v983 = vand.u32 2147483647, %v982
        %v984 = vand.u32 %v723, 2147483648
        %v985 = vor.u32 %v983, %v984
        %v986 = vand.u32 2147483647, %v748
        %v987 = vand.u32 2147483647, %v724
        %v988 = vmin.f32 %v986, %v987
        %v989 = vmax.f32 %v986, %v987
        %v990 = vrcp.pop %v989
        %v991 = vmul.f32 %v988, %v990
        %v992 = vmul.f32 %v991, %v991
        %v993 = vmul.f32 0.002785687, %v992
        %v994 = vadd.f32 %v993, -0.015866
        %v995 = vmul.f32 %v994, %v992
        %v996 = vadd.f32 %v995, 0.04247222
        %v997 = vmul.f32 %v996, %v992
        %v998 = vadd.f32 %v997, -0.074975304
        %v999 = vmul.f32 %v998, %v992
        %v1000 = vadd.f32 %v999, 0.1064488
        %v1001 = vmul.f32 %v1000, %v992
        %v1002 = vadd.f32 %v1001, -0.14207031
        %v1003 = vmul.f32 %v1002, %v992
        %v1004 = vadd.f32 %v1003, 0.19993454
        %v1005 = vmul.f32 %v1004, %v992
        %v1006 = vadd.f32 %v1005, -0.33333147
        %v1007 = vmul.f32 %v1006, %v992
        %v1008 = vmul.f32 %v1007, %v991
        %v1009 = vadd.f32 %v1008, %v991
        %vm1010 = vcmp.gt.f32.partialorder %v987, %v986
        %v1011 = vsub.f32 1.5707964, %v1009
        %v1012 = vsel %vm1010, %v1011, %v1009
        %vm1013 = vcmp.lt.f32.partialorder %v748, 0.0
        %v1014 = vsub.f32 3.1415927, %v1012
        %v1015 = vsel %vm1013, %v1014, %v1012
        %vm1016 = vcmp.lt.s32.totalorder %v748, 0
        %v1017 = vsel %vm1016, 3.1415927, 0.0
        %vm1018 = vcmp.eq.f32.partialorder %v724, 0.0
        %v1019 = vsel %vm1018, %v1017, %v1015
        %vm1020 = vcmp.ne.f32.partialorder %v748, %v748
        %vm1021 = vcmp.ne.f32.partialorder %v724, %v724
        %vm1022 = vmor %vm1020, %vm1021
        %v1023 = vsel %vm1022, nan, %v1019
        %vm1024 = vcmp.lt.f32.partialorder %v748, 0.0
        %v1025 = vsel %vm1024, 2.3561945, 0.7853982
        %vm1026 = vcmp.eq.s32.totalorder %v986, inf
        %vm1027 = vcmp.eq.s32.totalorder %v987, inf
        %vm1028 = vmand %vm1026, %vm1027
        %v1029 = vsel %vm1028, %v1025, %v1023
        %v1030 = vand.u32 2147483647, %v1029
        %v1031 = vand.u32 %v724, 2147483648
        %v1032 = vor.u32 %v1030, %v1031
        %v1033 = vand.u32 2147483647, %v749
        %v1034 = vand.u32 2147483647, %v725
        %v1035 = vmin.f32 %v1033, %v1034
        %v1036 = vmax.f32 %v1033, %v1034
        %v1037 = vrcp.pop %v1036
        %v1038 = vmul.f32 %v1035, %v1037
        %v1039 = vmul.f32 %v1038, %v1038
        %v1040 = vmul.f32 0.002785687, %v1039
        %v1041 = vadd.f32 %v1040, -0.015866
        %v1042 = vmul.f32 %v1041, %v1039
        %v1043 = vadd.f32 %v1042, 0.04247222
        %v1044 = vmul.f32 %v1043, %v1039
        %v1045 = vadd.f32 %v1044, -0.074975304
        %v1046 = vmul.f32 %v1045, %v1039
        %v1047 = vadd.f32 %v1046, 0.1064488
        %v1048 = vmul.f32 %v1047, %v1039
        %v1049 = vadd.f32 %v1048, -0.14207031
        %v1050 = vmul.f32 %v1049, %v1039
        %v1051 = vadd.f32 %v1050, 0.19993454
        %v1052 = vmul.f32 %v1051, %v1039
        %v1053 = vadd.f32 %v1052, -0.33333147
        %v1054 = vmul.f32 %v1053, %v1039
        %v1055 = vmul.f32 %v1054, %v1038
        %v1056 = vadd.f32 %v1055, %v1038
        %vm1057 = vcmp.gt.f32.partialorder %v1034, %v1033
        %v1058 = vsub.f32 1.5707964, %v1056
        %v1059 = vsel %vm1057, %v1058, %v1056
        %vm1060 = vcmp.lt.f32.partialorder %v749, 0.0
        %v1061 = vsub.f32 3.1415927, %v1059
        %v1062 = vsel %vm1060, %v1061, %v1059
        %vm1063 = vcmp.lt.s32.totalorder %v749, 0
        %v1064 = vsel %vm1063, 3.1415927, 0.0
        %vm1065 = vcmp.eq.f32.partialorder %v725, 0.0
        %v1066 = vsel %vm1065, %v1064, %v1062
        %vm1067 = vcmp.ne.f32.partialorder %v749, %v749
        %vm1068 = vcmp.ne.f32.partialorder %v725, %v725
        %vm1069 = vmor %vm1067, %vm1068
        %v1070 = vsel %vm1069, nan, %v1066
        %vm1071 = vcmp.lt.f32.partialorder %v749, 0.0
        %v1072 = vsel %vm1071, 2.3561945, 0.7853982
        %vm1073 = vcmp.eq.s32.totalorder %v1033, inf
        %vm1074 = vcmp.eq.s32.totalorder %v1034, inf
        %vm1075 = vmand %vm1073, %vm1074
        %v1076 = vsel %vm1075, %v1072, %v1070
        %v1077 = vand.u32 2147483647, %v1076
        %v1078 = vand.u32 %v725, 2147483648
        %v1079 = vor.u32 %v1077, %v1078
        %v1080 = vand.u32 2147483647, %v750
        %v1081 = vand.u32 2147483647, %v726
        %v1082 = vmin.f32 %v1080, %v1081
        %v1083 = vmax.f32 %v1080, %v1081
        %v1084 = vrcp.pop %v1083
        %v1085 = vmul.f32 %v1082, %v1084
        %v1086 = vmul.f32 %v1085, %v1085
        %v1087 = vmul.f32 0.002785687, %v1086
        %v1088 = vadd.f32 %v1087, -0.015866
        %v1089 = vmul.f32 %v1088, %v1086
        %v1090 = vadd.f32 %v1089, 0.04247222
        %v1091 = vmul.f32 %v1090, %v1086
        %v1092 = vadd.f32 %v1091, -0.074975304
        %v1093 = vmul.f32 %v1092, %v1086
        %v1094 = vadd.f32 %v1093, 0.1064488
        %v1095 = vmul.f32 %v1094, %v1086
        %v1096 = vadd.f32 %v1095, -0.14207031
        %v1097 = vmul.f32 %v1096, %v1086
        %v1098 = vadd.f32 %v1097, 0.19993454
        %v1099 = vmul.f32 %v1098, %v1086
        %v1100 = vadd.f32 %v1099, -0.33333147
        %v1101 = vmul.f32 %v1100, %v1086
        %v1102 = vmul.f32 %v1101, %v1085
        %v1103 = vadd.f32 %v1102, %v1085
        %vm1104 = vcmp.gt.f32.partialorder %v1081, %v1080
        %v1105 = vsub.f32 1.5707964, %v1103
        %v1106 = vsel %vm1104, %v1105, %v1103
        %vm1107 = vcmp.lt.f32.partialorder %v750, 0.0
        %v1108 = vsub.f32 3.1415927, %v1106
        %v1109 = vsel %vm1107, %v1108, %v1106
        %vm1110 = vcmp.lt.s32.totalorder %v750, 0
        %v1111 = vsel %vm1110, 3.1415927, 0.0
        %vm1112 = vcmp.eq.f32.partialorder %v726, 0.0
        %v1113 = vsel %vm1112, %v1111, %v1109
        %vm1114 = vcmp.ne.f32.partialorder %v750, %v750
        %vm1115 = vcmp.ne.f32.partialorder %v726, %v726
        %vm1116 = vmor %vm1114, %vm1115
        %v1117 = vsel %vm1116, nan, %v1113
        %vm1118 = vcmp.lt.f32.partialorder %v750, 0.0
        %v1119 = vsel %vm1118, 2.3561945, 0.7853982
        %vm1120 = vcmp.eq.s32.totalorder %v1080, inf
        %vm1121 = vcmp.eq.s32.totalorder %v1081, inf
        %vm1122 = vmand %vm1120, %vm1121
        %v1123 = vsel %vm1122, %v1119, %v1117
        %v1124 = vand.u32 2147483647, %v1123
        %v1125 = vand.u32 %v726, 2147483648
        %v1126 = vor.u32 %v1124, %v1125
        %v1128 = vlaneseq
        %v1129 = vshrl.u32 %v1128, 7
        %v1130 = vsub.s32 0, %v1129
        %v1131 = vrot.slane %v526, %v1130
        %v1133 = vsub.f32 %v797, %v1131
        %v1134 = vsub.f32 %v844, %v1131
        %v1135 = vsub.f32 %v891, %v1131
        %v1136 = vsub.f32 %v938, %v1131
        %v1137 = vsub.f32 %v985, %v1131
        %v1138 = vsub.f32 %v1032, %v1131
        %v1139 = vsub.f32 %v1079, %v1131
        %v1140 = vsub.f32 %v1126, %v1131
        %v1141 = vmul.f32 %v1133, 0.15915494
        %v1142 = vmul.f32 %v1134, 0.15915494
        %v1143 = vmul.f32 %v1135, 0.15915494
        %v1144 = vmul.f32 %v1136, 0.15915494
        %v1145 = vmul.f32 %v1137, 0.15915494
        %v1146 = vmul.f32 %v1138, 0.15915494
        %v1147 = vmul.f32 %v1139, 0.15915494
        %v1148 = vmul.f32 %v1140, 0.15915494
        %v1149 = vround.ne.pseudo %v1141
        %v1150 = vround.ne.pseudo %v1142
        %v1151 = vround.ne.pseudo %v1143
        %v1152 = vround.ne.pseudo %v1144
        %v1153 = vround.ne.pseudo %v1145
        %v1154 = vround.ne.pseudo %v1146
        %v1155 = vround.ne.pseudo %v1147
        %v1156 = vround.ne.pseudo %v1148
        %v1157 = vmul.f32 %v1149, 6.2831855
        %v1158 = vmul.f32 %v1150, 6.2831855
        %v1159 = vmul.f32 %v1151, 6.2831855
        %v1160 = vmul.f32 %v1152, 6.2831855
        %v1161 = vmul.f32 %v1153, 6.2831855
        %v1162 = vmul.f32 %v1154, 6.2831855
        %v1163 = vmul.f32 %v1155, 6.2831855
        %v1164 = vmul.f32 %v1156, 6.2831855
        %v1165 = vsub.f32 %v1133, %v1157
        %v1166 = vsub.f32 %v1134, %v1158
        %v1167 = vsub.f32 %v1135, %v1159
        %v1168 = vsub.f32 %v1136, %v1160
        %v1169 = vsub.f32 %v1137, %v1161
        %v1170 = vsub.f32 %v1138, %v1162
        %v1171 = vsub.f32 %v1139, %v1163
        %v1172 = vsub.f32 %v1140, %v1164
        %v1173 = vadd.f32 %v1165, %v1131
        %v1174 = vadd.f32 %v1166, %v1131
        %v1175 = vadd.f32 %v1167, %v1131
        %v1176 = vadd.f32 %v1168, %v1131
        %v1177 = vadd.f32 %v1169, %v1131
        %v1178 = vadd.f32 %v1170, %v1131
        %v1179 = vadd.f32 %v1171, %v1131
        %v1180 = vadd.f32 %v1172, %v1131
        %v1181 = vand.u32 2147483647, %v494
        %v1182 = vand.u32 2147483647, %v502
        %v1183 = vmin.f32 %v1181, %v1182
        %v1184 = vmax.f32 %v1181, %v1182
        %v1185 = vrcp.pop %v1184
        %v1186 = vmul.f32 %v1183, %v1185
        %v1187 = vmul.f32 %v1186, %v1186
        %v1188 = vmul.f32 0.002785687, %v1187
        %v1189 = vadd.f32 %v1188, -0.015866
        %v1190 = vmul.f32 %v1189, %v1187
        %v1191 = vadd.f32 %v1190, 0.04247222
        %v1192 = vmul.f32 %v1191, %v1187
        %v1193 = vadd.f32 %v1192, -0.074975304
        %v1194 = vmul.f32 %v1193, %v1187
        %v1195 = vadd.f32 %v1194, 0.1064488
        %v1196 = vmul.f32 %v1195, %v1187
        %v1197 = vadd.f32 %v1196, -0.14207031
        %v1198 = vmul.f32 %v1197, %v1187
        %v1199 = vadd.f32 %v1198, 0.19993454
        %v1200 = vmul.f32 %v1199, %v1187
        %v1201 = vadd.f32 %v1200, -0.33333147
        %v1202 = vmul.f32 %v1201, %v1187
        %v1203 = vmul.f32 %v1202, %v1186
        %v1204 = vadd.f32 %v1203, %v1186
        %vm1205 = vcmp.gt.f32.partialorder %v1182, %v1181
        %v1206 = vsub.f32 1.5707964, %v1204
        %v1207 = vsel %vm1205, %v1206, %v1204
        %vm1208 = vcmp.lt.f32.partialorder %v494, 0.0
        %v1209 = vsub.f32 3.1415927, %v1207
        %v1210 = vsel %vm1208, %v1209, %v1207
        %vm1211 = vcmp.lt.s32.totalorder %v494, 0
        %v1212 = vsel %vm1211, 3.1415927, 0.0
        %vm1213 = vcmp.eq.f32.partialorder %v502, 0.0
        %v1214 = vsel %vm1213, %v1212, %v1210
        %vm1215 = vcmp.ne.f32.partialorder %v494, %v494
        %vm1216 = vcmp.ne.f32.partialorder %v502, %v502
        %vm1217 = vmor %vm1215, %vm1216
        %v1218 = vsel %vm1217, nan, %v1214
        %vm1219 = vcmp.lt.f32.partialorder %v494, 0.0
        %v1220 = vsel %vm1219, 2.3561945, 0.7853982
        %vm1221 = vcmp.eq.s32.totalorder %v1181, inf
        %vm1222 = vcmp.eq.s32.totalorder %v1182, inf
        %vm1223 = vmand %vm1221, %vm1222
        %v1224 = vsel %vm1223, %v1220, %v1218
        %v1225 = vand.u32 2147483647, %v1224
        %v1226 = vand.u32 %v502, 2147483648
        %v1227 = vor.u32 %v1225, %v1226
        %vm1228 = vcmask 523264
        %v1230 = vsel %vm1228, %v535, 0
        %v1233 = vsel %vm1228, %v536, 0
        %v1236 = vsel %vm1228, %v537, 0
        %v1239 = vsel %vm1228, %v538, 0
        %v1242 = vsel %vm1228, %v539, 0
        %v1245 = vsel %vm1228, %v540, 0
        %v1248 = vsel %vm1228, %v541, 0
        %v1251 = vsel %vm1228, %v542, 0
        %1253 = vmatprep.subr.mxu0 0.0
        %1254 = vmatpush1.msra.mxu0 0.0
        %1255 = vmatprep.subr.mxu0 0.0
        %1256 = vmatpush1.msra.mxu0 0.0
        %1257 = vmatprep.subr.mxu0 0.0
        %1258 = vmatpush1.msra.mxu0 0.0
        %1259 = vmatprep.subr.mxu0 0.0
        %1260 = vmatpush1.msra.mxu0 0.0
        %1261 = vmatprep.subr.mxu0 0.0
        %1262 = vmatpush1.msra.mxu0 0.0
        %1263 = vmatprep.subr.mxu0 0.0
        %1264 = vmatpush1.msra.mxu0 0.0
        %1265 = vmatprep.subr.mxu0 0.0
        %1266 = vmatpush1.msra.mxu0 0.0
        %1267 = vmatprep.subr.mxu0 0.0
        %1268 = vmatpush1.msra.mxu0 0.0
        %1269 = vmatprep.subr.mxu0 0.0
        %v1270 = vand.u32 %v1180, 4294901760
        %1271 = vmatpush1.msra.mxu0 %v1270
        %1272 = vmatprep.subr.mxu0 0.0
        %v1273 = vand.u32 %v1179, 4294901760
        %1274 = vmatpush1.msra.mxu0 %v1273
        %1275 = vmatprep.subr.mxu0 0.0
        %v1276 = vand.u32 %v1178, 4294901760
        %1277 = vmatpush1.msra.mxu0 %v1276
        %1278 = vmatprep.subr.mxu0 0.0
        %v1279 = vand.u32 %v1177, 4294901760
        %1280 = vmatpush1.msra.mxu0 %v1279
        %1281 = vmatprep.subr.mxu0 0.0
        %v1282 = vand.u32 %v1176, 4294901760
        %1283 = vmatpush1.msra.mxu0 %v1282
        %1284 = vmatprep.subr.mxu0 0.0
        %v1285 = vand.u32 %v1175, 4294901760
        %1286 = vmatpush1.msra.mxu0 %v1285
        %1287 = vmatprep.subr.mxu0 0.0
        %v1288 = vand.u32 %v1174, 4294901760
        %1289 = vmatpush1.msra.mxu0 %v1288
        %1290 = vmatprep.subr.mxu0 0.0
        %v1291 = vand.u32 %v1173, 4294901760
        %1292 = vmatpush1.msra.mxu0 %v1291
        %1293 = vmatprep.subr.mxu0 0.0
        %1294 = vmatpush2.msra.mxu0 0.0
        %1295 = vmatprep.subr.mxu0 0.0
        %1296 = vmatpush2.msra.mxu0 0.0
        %1297 = vmatprep.subr.mxu0 0.0
        %1298 = vmatpush2.msra.mxu0 0.0
        %1299 = vmatprep.subr.mxu0 0.0
        %1300 = vmatpush2.msra.mxu0 0.0
        %1301 = vmatprep.subr.mxu0 0.0
        %1302 = vmatpush2.msra.mxu0 0.0
        %1303 = vmatprep.subr.mxu0 0.0
        %1304 = vmatpush2.msra.mxu0 0.0
        %1305 = vmatprep.subr.mxu0 0.0
        %1306 = vmatpush2.msra.mxu0 0.0
        %1307 = vmatprep.subr.mxu0 0.0
        %1308 = vmatpush2.msra.mxu0 0.0
        %1309 = vmatprep.subr.mxu0 0.0
        %1310 = vmatpush2.msra.mxu0 0.0
        %1311 = vmatprep.subr.mxu0 0.0
        %1312 = vmatpush2.msra.mxu0 0.0
        %1313 = vmatprep.subr.mxu0 0.0
        %1314 = vmatpush2.msra.mxu0 0.0
        %1315 = vmatprep.subr.mxu0 0.0
        %1316 = vmatpush2.msra.mxu0 0.0
        %1317 = vmatprep.subr.mxu0 0.0
        %1318 = vmatpush2.msra.mxu0 0.0
        %1319 = vmatprep.subr.mxu0 0.0
        %1320 = vmatpush2.msra.mxu0 0.0
        %1321 = vmatprep.subr.mxu0 0.0
        %1322 = vmatpush2.msra.mxu0 0.0
        %1323 = vmatprep.subr.mxu0 0.0
        %1324 = vmatpush2.msra.mxu0 0.0
        %1325 = vmatprep.mubr.f32.mxu0 0.0
        %v1326 = vand.u32 %v1230, 4294901760
        %v1327 = vsub.f32 %v1230, %v1326
        %v1328 = vand.u32 %v1327, 4294901760
        %v1329 = vsub.f32 %v1327, %v1328
        %v1330 = vand.u32 %v1329, 4294901760
        %1331 = vmatmul.mubr.f32.gmra.mxu0 %v1330
        %v1332 = vpop.f32.mrf.mxu0
        %v1333 = vadd.f32 0.0, %v1332
        %v1334 = vpop.f32.mrf.mxu0
        %1335 = vmatprep.mubr.f32.mxu0 0.0
        %v1336 = vand.u32 %v1233, 4294901760
        %v1337 = vsub.f32 %v1233, %v1336
        %v1338 = vand.u32 %v1337, 4294901760
        %v1339 = vsub.f32 %v1337, %v1338
        %v1340 = vand.u32 %v1339, 4294901760
        %1341 = vmatmul.mubr.f32.gmra.mxu0 %v1340
        %v1342 = vpop.f32.mrf.mxu0
        %v1343 = vadd.f32 0.0, %v1342
        %v1344 = vpop.f32.mrf.mxu0
        %1345 = vmatprep.mubr.f32.mxu0 0.0
        %v1346 = vand.u32 %v1236, 4294901760
        %v1347 = vsub.f32 %v1236, %v1346
        %v1348 = vand.u32 %v1347, 4294901760
        %v1349 = vsub.f32 %v1347, %v1348
        %v1350 = vand.u32 %v1349, 4294901760
        %1351 = vmatmul.mubr.f32.gmra.mxu0 %v1350
        %v1352 = vpop.f32.mrf.mxu0
        %v1353 = vadd.f32 0.0, %v1352
        %v1354 = vpop.f32.mrf.mxu0
        %1355 = vmatprep.mubr.f32.mxu0 0.0
        %v1356 = vand.u32 %v1239, 4294901760
        %v1357 = vsub.f32 %v1239, %v1356
        %v1358 = vand.u32 %v1357, 4294901760
        %v1359 = vsub.f32 %v1357, %v1358
        %v1360 = vand.u32 %v1359, 4294901760
        %1361 = vmatmul.mubr.f32.gmra.mxu0 %v1360
        %v1362 = vpop.f32.mrf.mxu0
        %v1363 = vadd.f32 0.0, %v1362
        %v1364 = vpop.f32.mrf.mxu0
        %1365 = vmatprep.mubr.f32.mxu0 0.0
        %v1366 = vand.u32 %v1242, 4294901760
        %v1367 = vsub.f32 %v1242, %v1366
        %v1368 = vand.u32 %v1367, 4294901760
        %v1369 = vsub.f32 %v1367, %v1368
        %v1370 = vand.u32 %v1369, 4294901760
        %1371 = vmatmul.mubr.f32.gmra.mxu0 %v1370
        %v1372 = vpop.f32.mrf.mxu0
        %v1373 = vadd.f32 0.0, %v1372
        %v1374 = vpop.f32.mrf.mxu0
        %1375 = vmatprep.mubr.f32.mxu0 0.0
        %v1376 = vand.u32 %v1245, 4294901760
        %v1377 = vsub.f32 %v1245, %v1376
        %v1378 = vand.u32 %v1377, 4294901760
        %v1379 = vsub.f32 %v1377, %v1378
        %v1380 = vand.u32 %v1379, 4294901760
        %1381 = vmatmul.mubr.f32.gmra.mxu0 %v1380
        %v1382 = vpop.f32.mrf.mxu0
        %v1383 = vadd.f32 0.0, %v1382
        %v1384 = vpop.f32.mrf.mxu0
        %1385 = vmatprep.mubr.f32.mxu0 0.0
        %v1386 = vand.u32 %v1248, 4294901760
        %v1387 = vsub.f32 %v1248, %v1386
        %v1388 = vand.u32 %v1387, 4294901760
        %v1389 = vsub.f32 %v1387, %v1388
        %v1390 = vand.u32 %v1389, 4294901760
        %1391 = vmatmul.mubr.f32.gmra.mxu0 %v1390
        %v1392 = vpop.f32.mrf.mxu0
        %v1393 = vadd.f32 0.0, %v1392
        %v1394 = vpop.f32.mrf.mxu0
        %1395 = vmatprep.mubr.f32.mxu0 0.0
        %v1396 = vand.u32 %v1251, 4294901760
        %v1397 = vsub.f32 %v1251, %v1396
        %v1398 = vand.u32 %v1397, 4294901760
        %v1399 = vsub.f32 %v1397, %v1398
        %v1400 = vand.u32 %v1399, 4294901760
        %1401 = vmatmul.mubr.f32.gmra.mxu0 %v1400
        %v1402 = vpop.f32.mrf.mxu0
        %v1403 = vadd.f32 0.0, %v1402
        %v1404 = vpop.f32.mrf.mxu0
        %1405 = vdwg.mxu0
        %1406 = vmatprep.subr.mxu0 0.0
        %1407 = vmatpush1.msra.mxu0 0.0
        %1408 = vmatprep.subr.mxu0 0.0
        %1409 = vmatpush1.msra.mxu0 0.0
        %1410 = vmatprep.subr.mxu0 0.0
        %1411 = vmatpush1.msra.mxu0 0.0
        %1412 = vmatprep.subr.mxu0 0.0
        %1413 = vmatpush1.msra.mxu0 0.0
        %1414 = vmatprep.subr.mxu0 0.0
        %1415 = vmatpush1.msra.mxu0 0.0
        %1416 = vmatprep.subr.mxu0 0.0
        %1417 = vmatpush1.msra.mxu0 0.0
        %1418 = vmatprep.subr.mxu0 0.0
        %1419 = vmatpush1.msra.mxu0 0.0
        %1420 = vmatprep.subr.mxu0 0.0
        %1421 = vmatpush1.msra.mxu0 0.0
        %1422 = vmatprep.subr.mxu0 0.0
        %v1423 = vand.u32 %v1180, 4294901760
        %v1424 = vsub.f32 %v1180, %v1423
        %v1425 = vand.u32 %v1424, 4294901760
        %v1426 = vsub.f32 %v1424, %v1425
        %v1427 = vand.u32 %v1426, 4294901760
        %1428 = vmatpush1.msra.mxu0 %v1427
        %1429 = vmatprep.subr.mxu0 0.0
        %v1430 = vand.u32 %v1179, 4294901760
        %v1431 = vsub.f32 %v1179, %v1430
        %v1432 = vand.u32 %v1431, 4294901760
        %v1433 = vsub.f32 %v1431, %v1432
        %v1434 = vand.u32 %v1433, 4294901760
        %1435 = vmatpush1.msra.mxu0 %v1434
        %1436 = vmatprep.subr.mxu0 0.0
        %v1437 = vand.u32 %v1178, 4294901760
        %v1438 = vsub.f32 %v1178, %v1437
        %v1439 = vand.u32 %v1438, 4294901760
        %v1440 = vsub.f32 %v1438, %v1439
        %v1441 = vand.u32 %v1440, 4294901760
        %1442 = vmatpush1.msra.mxu0 %v1441
        %1443 = vmatprep.subr.mxu0 0.0
        %v1444 = vand.u32 %v1177, 4294901760
        %v1445 = vsub.f32 %v1177, %v1444
        %v1446 = vand.u32 %v1445, 4294901760
        %v1447 = vsub.f32 %v1445, %v1446
        %v1448 = vand.u32 %v1447, 4294901760
        %1449 = vmatpush1.msra.mxu0 %v1448
        %1450 = vmatprep.subr.mxu0 0.0
        %v1451 = vand.u32 %v1176, 4294901760
        %v1452 = vsub.f32 %v1176, %v1451
        %v1453 = vand.u32 %v1452, 4294901760
        %v1454 = vsub.f32 %v1452, %v1453
        %v1455 = vand.u32 %v1454, 4294901760
        %1456 = vmatpush1.msra.mxu0 %v1455
        %1457 = vmatprep.subr.mxu0 0.0
        %v1458 = vand.u32 %v1175, 4294901760
        %v1459 = vsub.f32 %v1175, %v1458
        %v1460 = vand.u32 %v1459, 4294901760
        %v1461 = vsub.f32 %v1459, %v1460
        %v1462 = vand.u32 %v1461, 4294901760
        %1463 = vmatpush1.msra.mxu0 %v1462
        %1464 = vmatprep.subr.mxu0 0.0
        %v1465 = vand.u32 %v1174, 4294901760
        %v1466 = vsub.f32 %v1174, %v1465
        %v1467 = vand.u32 %v1466, 4294901760
        %v1468 = vsub.f32 %v1466, %v1467
        %v1469 = vand.u32 %v1468, 4294901760
        %1470 = vmatpush1.msra.mxu0 %v1469
        %1471 = vmatprep.subr.mxu0 0.0
        %v1472 = vand.u32 %v1173, 4294901760
        %v1473 = vsub.f32 %v1173, %v1472
        %v1474 = vand.u32 %v1473, 4294901760
        %v1475 = vsub.f32 %v1473, %v1474
        %v1476 = vand.u32 %v1475, 4294901760
        %1477 = vmatpush1.msra.mxu0 %v1476
        %1478 = vmatprep.subr.mxu0 0.0
        %1479 = vmatpush2.msra.mxu0 0.0
        %1480 = vmatprep.subr.mxu0 0.0
        %1481 = vmatpush2.msra.mxu0 0.0
        %1482 = vmatprep.subr.mxu0 0.0
        %1483 = vmatpush2.msra.mxu0 0.0
        %1484 = vmatprep.subr.mxu0 0.0
        %1485 = vmatpush2.msra.mxu0 0.0
        %1486 = vmatprep.subr.mxu0 0.0
        %1487 = vmatpush2.msra.mxu0 0.0
        %1488 = vmatprep.subr.mxu0 0.0
        %1489 = vmatpush2.msra.mxu0 0.0
        %1490 = vmatprep.subr.mxu0 0.0
        %1491 = vmatpush2.msra.mxu0 0.0
        %1492 = vmatprep.subr.mxu0 0.0
        %1493 = vmatpush2.msra.mxu0 0.0
        %1494 = vmatprep.subr.mxu0 0.0
        %1495 = vmatpush2.msra.mxu0 0.0
        %1496 = vmatprep.subr.mxu0 0.0
        %1497 = vmatpush2.msra.mxu0 0.0
        %1498 = vmatprep.subr.mxu0 0.0
        %1499 = vmatpush2.msra.mxu0 0.0
        %1500 = vmatprep.subr.mxu0 0.0
        %1501 = vmatpush2.msra.mxu0 0.0
        %1502 = vmatprep.subr.mxu0 0.0
        %1503 = vmatpush2.msra.mxu0 0.0
        %1504 = vmatprep.subr.mxu0 0.0
        %1505 = vmatpush2.msra.mxu0 0.0
        %1506 = vmatprep.subr.mxu0 0.0
        %1507 = vmatpush2.msra.mxu0 0.0
        %1508 = vmatprep.subr.mxu0 0.0
        %1509 = vmatpush2.msra.mxu0 0.0
        %1510 = vmatprep.mubr.f32.mxu0 0.0
        %v1511 = vand.u32 %v1230, 4294901760
        %1512 = vmatmul.mubr.f32.gmra.mxu0 %v1511
        %v1513 = vpop.f32.mrf.mxu0
        %v1514 = vadd.f32 %v1333, %v1513
        %v1515 = vpop.f32.mrf.mxu0
        %1516 = vmatprep.mubr.f32.mxu0 0.0
        %v1517 = vand.u32 %v1233, 4294901760
        %1518 = vmatmul.mubr.f32.gmra.mxu0 %v1517
        %v1519 = vpop.f32.mrf.mxu0
        %v1520 = vadd.f32 %v1343, %v1519
        %v1521 = vpop.f32.mrf.mxu0
        %1522 = vmatprep.mubr.f32.mxu0 0.0
        %v1523 = vand.u32 %v1236, 4294901760
        %1524 = vmatmul.mubr.f32.gmra.mxu0 %v1523
        %v1525 = vpop.f32.mrf.mxu0
        %v1526 = vadd.f32 %v1353, %v1525
        %v1527 = vpop.f32.mrf.mxu0
        %1528 = vmatprep.mubr.f32.mxu0 0.0
        %v1529 = vand.u32 %v1239, 4294901760
        %1530 = vmatmul.mubr.f32.gmra.mxu0 %v1529
        %v1531 = vpop.f32.mrf.mxu0
        %v1532 = vadd.f32 %v1363, %v1531
        %v1533 = vpop.f32.mrf.mxu0
        %1534 = vmatprep.mubr.f32.mxu0 0.0
        %v1535 = vand.u32 %v1242, 4294901760
        %1536 = vmatmul.mubr.f32.gmra.mxu0 %v1535
        %v1537 = vpop.f32.mrf.mxu0
        %v1538 = vadd.f32 %v1373, %v1537
        %v1539 = vpop.f32.mrf.mxu0
        %1540 = vmatprep.mubr.f32.mxu0 0.0
        %v1541 = vand.u32 %v1245, 4294901760
        %1542 = vmatmul.mubr.f32.gmra.mxu0 %v1541
        %v1543 = vpop.f32.mrf.mxu0
        %v1544 = vadd.f32 %v1383, %v1543
        %v1545 = vpop.f32.mrf.mxu0
        %1546 = vmatprep.mubr.f32.mxu0 0.0
        %v1547 = vand.u32 %v1248, 4294901760
        %1548 = vmatmul.mubr.f32.gmra.mxu0 %v1547
        %v1549 = vpop.f32.mrf.mxu0
        %v1550 = vadd.f32 %v1393, %v1549
        %v1551 = vpop.f32.mrf.mxu0
        %1552 = vmatprep.mubr.f32.mxu0 0.0
        %v1553 = vand.u32 %v1251, 4294901760
        %1554 = vmatmul.mubr.f32.gmra.mxu0 %v1553
        %v1555 = vpop.f32.mrf.mxu0
        %v1556 = vadd.f32 %v1403, %v1555
        %v1557 = vpop.f32.mrf.mxu0
        %1558 = vdwg.mxu0
        %1559 = vmatprep.subr.mxu0 0.0
        %1560 = vmatpush1.msra.mxu0 0.0
        %1561 = vmatprep.subr.mxu0 0.0
        %1562 = vmatpush1.msra.mxu0 0.0
        %1563 = vmatprep.subr.mxu0 0.0
        %1564 = vmatpush1.msra.mxu0 0.0
        %1565 = vmatprep.subr.mxu0 0.0
        %1566 = vmatpush1.msra.mxu0 0.0
        %1567 = vmatprep.subr.mxu0 0.0
        %1568 = vmatpush1.msra.mxu0 0.0
        %1569 = vmatprep.subr.mxu0 0.0
        %1570 = vmatpush1.msra.mxu0 0.0
        %1571 = vmatprep.subr.mxu0 0.0
        %1572 = vmatpush1.msra.mxu0 0.0
        %1573 = vmatprep.subr.mxu0 0.0
        %1574 = vmatpush1.msra.mxu0 0.0
        %1575 = vmatprep.subr.mxu0 0.0
        %v1576 = vand.u32 %v1180, 4294901760
        %v1577 = vsub.f32 %v1180, %v1576
        %1578 = vmatpush1.msra.mxu0 %v1577
        %1579 = vmatprep.subr.mxu0 0.0
        %v1580 = vand.u32 %v1179, 4294901760
        %v1581 = vsub.f32 %v1179, %v1580
        %1582 = vmatpush1.msra.mxu0 %v1581
        %1583 = vmatprep.subr.mxu0 0.0
        %v1584 = vand.u32 %v1178, 4294901760
        %v1585 = vsub.f32 %v1178, %v1584
        %1586 = vmatpush1.msra.mxu0 %v1585
        %1587 = vmatprep.subr.mxu0 0.0
        %v1588 = vand.u32 %v1177, 4294901760
        %v1589 = vsub.f32 %v1177, %v1588
        %1590 = vmatpush1.msra.mxu0 %v1589
        %1591 = vmatprep.subr.mxu0 0.0
        %v1592 = vand.u32 %v1176, 4294901760
        %v1593 = vsub.f32 %v1176, %v1592
        %1594 = vmatpush1.msra.mxu0 %v1593
        %1595 = vmatprep.subr.mxu0 0.0
        %v1596 = vand.u32 %v1175, 4294901760
        %v1597 = vsub.f32 %v1175, %v1596
        %1598 = vmatpush1.msra.mxu0 %v1597
        %1599 = vmatprep.subr.mxu0 0.0
        %v1600 = vand.u32 %v1174, 4294901760
        %v1601 = vsub.f32 %v1174, %v1600
        %1602 = vmatpush1.msra.mxu0 %v1601
        %1603 = vmatprep.subr.mxu0 0.0
        %v1604 = vand.u32 %v1173, 4294901760
        %v1605 = vsub.f32 %v1173, %v1604
        %1606 = vmatpush1.msra.mxu0 %v1605
        %1607 = vmatprep.subr.mxu0 0.0
        %1608 = vmatpush2.msra.mxu0 0.0
        %1609 = vmatprep.subr.mxu0 0.0
        %1610 = vmatpush2.msra.mxu0 0.0
        %1611 = vmatprep.subr.mxu0 0.0
        %1612 = vmatpush2.msra.mxu0 0.0
        %1613 = vmatprep.subr.mxu0 0.0
        %1614 = vmatpush2.msra.mxu0 0.0
        %1615 = vmatprep.subr.mxu0 0.0
        %1616 = vmatpush2.msra.mxu0 0.0
        %1617 = vmatprep.subr.mxu0 0.0
        %1618 = vmatpush2.msra.mxu0 0.0
        %1619 = vmatprep.subr.mxu0 0.0
        %1620 = vmatpush2.msra.mxu0 0.0
        %1621 = vmatprep.subr.mxu0 0.0
        %1622 = vmatpush2.msra.mxu0 0.0
        %1623 = vmatprep.subr.mxu0 0.0
        %1624 = vmatpush2.msra.mxu0 0.0
        %1625 = vmatprep.subr.mxu0 0.0
        %1626 = vmatpush2.msra.mxu0 0.0
        %1627 = vmatprep.subr.mxu0 0.0
        %1628 = vmatpush2.msra.mxu0 0.0
        %1629 = vmatprep.subr.mxu0 0.0
        %1630 = vmatpush2.msra.mxu0 0.0
        %1631 = vmatprep.subr.mxu0 0.0
        %1632 = vmatpush2.msra.mxu0 0.0
        %1633 = vmatprep.subr.mxu0 0.0
        %1634 = vmatpush2.msra.mxu0 0.0
        %1635 = vmatprep.subr.mxu0 0.0
        %1636 = vmatpush2.msra.mxu0 0.0
        %1637 = vmatprep.subr.mxu0 0.0
        %1638 = vmatpush2.msra.mxu0 0.0
        %1639 = vmatprep.mubr.f32.mxu0 0.0
        %v1640 = vand.u32 %v1230, 4294901760
        %v1641 = vsub.f32 %v1230, %v1640
        %1642 = vmatmul.mubr.f32.gmra.mxu0 %v1641
        %v1643 = vpop.f32.mrf.mxu0
        %v1644 = vadd.f32 %v1514, %v1643
        %v1645 = vpop.f32.mrf.mxu0
        %1646 = vmatprep.mubr.f32.mxu0 0.0
        %v1647 = vand.u32 %v1233, 4294901760
        %v1648 = vsub.f32 %v1233, %v1647
        %1649 = vmatmul.mubr.f32.gmra.mxu0 %v1648
        %v1650 = vpop.f32.mrf.mxu0
        %v1651 = vadd.f32 %v1520, %v1650
        %v1652 = vpop.f32.mrf.mxu0
        %1653 = vmatprep.mubr.f32.mxu0 0.0
        %v1654 = vand.u32 %v1236, 4294901760
        %v1655 = vsub.f32 %v1236, %v1654
        %1656 = vmatmul.mubr.f32.gmra.mxu0 %v1655
        %v1657 = vpop.f32.mrf.mxu0
        %v1658 = vadd.f32 %v1526, %v1657
        %v1659 = vpop.f32.mrf.mxu0
        %1660 = vmatprep.mubr.f32.mxu0 0.0
        %v1661 = vand.u32 %v1239, 4294901760
        %v1662 = vsub.f32 %v1239, %v1661
        %1663 = vmatmul.mubr.f32.gmra.mxu0 %v1662
        %v1664 = vpop.f32.mrf.mxu0
        %v1665 = vadd.f32 %v1532, %v1664
        %v1666 = vpop.f32.mrf.mxu0
        %1667 = vmatprep.mubr.f32.mxu0 0.0
        %v1668 = vand.u32 %v1242, 4294901760
        %v1669 = vsub.f32 %v1242, %v1668
        %1670 = vmatmul.mubr.f32.gmra.mxu0 %v1669
        %v1671 = vpop.f32.mrf.mxu0
        %v1672 = vadd.f32 %v1538, %v1671
        %v1673 = vpop.f32.mrf.mxu0
        %1674 = vmatprep.mubr.f32.mxu0 0.0
        %v1675 = vand.u32 %v1245, 4294901760
        %v1676 = vsub.f32 %v1245, %v1675
        %1677 = vmatmul.mubr.f32.gmra.mxu0 %v1676
        %v1678 = vpop.f32.mrf.mxu0
        %v1679 = vadd.f32 %v1544, %v1678
        %v1680 = vpop.f32.mrf.mxu0
        %1681 = vmatprep.mubr.f32.mxu0 0.0
        %v1682 = vand.u32 %v1248, 4294901760
        %v1683 = vsub.f32 %v1248, %v1682
        %1684 = vmatmul.mubr.f32.gmra.mxu0 %v1683
        %v1685 = vpop.f32.mrf.mxu0
        %v1686 = vadd.f32 %v1550, %v1685
        %v1687 = vpop.f32.mrf.mxu0
        %1688 = vmatprep.mubr.f32.mxu0 0.0
        %v1689 = vand.u32 %v1251, 4294901760
        %v1690 = vsub.f32 %v1251, %v1689
        %1691 = vmatmul.mubr.f32.gmra.mxu0 %v1690
        %v1692 = vpop.f32.mrf.mxu0
        %v1693 = vadd.f32 %v1556, %v1692
        %v1694 = vpop.f32.mrf.mxu0
        %1695 = vdwg.mxu0
        %1696 = vmatprep.subr.mxu0 0.0
        %1697 = vmatpush1.msra.mxu0 0.0
        %1698 = vmatprep.subr.mxu0 0.0
        %1699 = vmatpush1.msra.mxu0 0.0
        %1700 = vmatprep.subr.mxu0 0.0
        %1701 = vmatpush1.msra.mxu0 0.0
        %1702 = vmatprep.subr.mxu0 0.0
        %1703 = vmatpush1.msra.mxu0 0.0
        %1704 = vmatprep.subr.mxu0 0.0
        %1705 = vmatpush1.msra.mxu0 0.0
        %1706 = vmatprep.subr.mxu0 0.0
        %1707 = vmatpush1.msra.mxu0 0.0
        %1708 = vmatprep.subr.mxu0 0.0
        %1709 = vmatpush1.msra.mxu0 0.0
        %1710 = vmatprep.subr.mxu0 0.0
        %1711 = vmatpush1.msra.mxu0 0.0
        %1712 = vmatprep.subr.mxu0 0.0
        %v1713 = vand.u32 %v1180, 4294901760
        %1714 = vmatpush1.msra.mxu0 %v1713
        %1715 = vmatprep.subr.mxu0 0.0
        %v1716 = vand.u32 %v1179, 4294901760
        %1717 = vmatpush1.msra.mxu0 %v1716
        %1718 = vmatprep.subr.mxu0 0.0
        %v1719 = vand.u32 %v1178, 4294901760
        %1720 = vmatpush1.msra.mxu0 %v1719
        %1721 = vmatprep.subr.mxu0 0.0
        %v1722 = vand.u32 %v1177, 4294901760
        %1723 = vmatpush1.msra.mxu0 %v1722
        %1724 = vmatprep.subr.mxu0 0.0
        %v1725 = vand.u32 %v1176, 4294901760
        %1726 = vmatpush1.msra.mxu0 %v1725
        %1727 = vmatprep.subr.mxu0 0.0
        %v1728 = vand.u32 %v1175, 4294901760
        %1729 = vmatpush1.msra.mxu0 %v1728
        %1730 = vmatprep.subr.mxu0 0.0
        %v1731 = vand.u32 %v1174, 4294901760
        %1732 = vmatpush1.msra.mxu0 %v1731
        %1733 = vmatprep.subr.mxu0 0.0
        %v1734 = vand.u32 %v1173, 4294901760
        %1735 = vmatpush1.msra.mxu0 %v1734
        %1736 = vmatprep.subr.mxu0 0.0
        %1737 = vmatpush2.msra.mxu0 0.0
        %1738 = vmatprep.subr.mxu0 0.0
        %1739 = vmatpush2.msra.mxu0 0.0
        %1740 = vmatprep.subr.mxu0 0.0
        %1741 = vmatpush2.msra.mxu0 0.0
        %1742 = vmatprep.subr.mxu0 0.0
        %1743 = vmatpush2.msra.mxu0 0.0
        %1744 = vmatprep.subr.mxu0 0.0
        %1745 = vmatpush2.msra.mxu0 0.0
        %1746 = vmatprep.subr.mxu0 0.0
        %1747 = vmatpush2.msra.mxu0 0.0
        %1748 = vmatprep.subr.mxu0 0.0
        %1749 = vmatpush2.msra.mxu0 0.0
        %1750 = vmatprep.subr.mxu0 0.0
        %1751 = vmatpush2.msra.mxu0 0.0
        %1752 = vmatprep.subr.mxu0 0.0
        %1753 = vmatpush2.msra.mxu0 0.0
        %1754 = vmatprep.subr.mxu0 0.0
        %1755 = vmatpush2.msra.mxu0 0.0
        %1756 = vmatprep.subr.mxu0 0.0
        %1757 = vmatpush2.msra.mxu0 0.0
        %1758 = vmatprep.subr.mxu0 0.0
        %1759 = vmatpush2.msra.mxu0 0.0
        %1760 = vmatprep.subr.mxu0 0.0
        %1761 = vmatpush2.msra.mxu0 0.0
        %1762 = vmatprep.subr.mxu0 0.0
        %1763 = vmatpush2.msra.mxu0 0.0
        %1764 = vmatprep.subr.mxu0 0.0
        %1765 = vmatpush2.msra.mxu0 0.0
        %1766 = vmatprep.subr.mxu0 0.0
        %1767 = vmatpush2.msra.mxu0 0.0
        %1768 = vmatprep.mubr.f32.mxu0 0.0
        %v1769 = vand.u32 %v1230, 4294901760
        %v1770 = vsub.f32 %v1230, %v1769
        %v1771 = vand.u32 %v1770, 4294901760
        %1772 = vmatmul.mubr.f32.gmra.mxu0 %v1771
        %v1773 = vpop.f32.mrf.mxu0
        %v1774 = vadd.f32 %v1644, %v1773
        %v1775 = vpop.f32.mrf.mxu0
        %1776 = vmatprep.mubr.f32.mxu0 0.0
        %v1777 = vand.u32 %v1233, 4294901760
        %v1778 = vsub.f32 %v1233, %v1777
        %v1779 = vand.u32 %v1778, 4294901760
        %1780 = vmatmul.mubr.f32.gmra.mxu0 %v1779
        %v1781 = vpop.f32.mrf.mxu0
        %v1782 = vadd.f32 %v1651, %v1781
        %v1783 = vpop.f32.mrf.mxu0
        %1784 = vmatprep.mubr.f32.mxu0 0.0
        %v1785 = vand.u32 %v1236, 4294901760
        %v1786 = vsub.f32 %v1236, %v1785
        %v1787 = vand.u32 %v1786, 4294901760
        %1788 = vmatmul.mubr.f32.gmra.mxu0 %v1787
        %v1789 = vpop.f32.mrf.mxu0
        %v1790 = vadd.f32 %v1658, %v1789
        %v1791 = vpop.f32.mrf.mxu0
        %1792 = vmatprep.mubr.f32.mxu0 0.0
        %v1793 = vand.u32 %v1239, 4294901760
        %v1794 = vsub.f32 %v1239, %v1793
        %v1795 = vand.u32 %v1794, 4294901760
        %1796 = vmatmul.mubr.f32.gmra.mxu0 %v1795
        %v1797 = vpop.f32.mrf.mxu0
        %v1798 = vadd.f32 %v1665, %v1797
        %v1799 = vpop.f32.mrf.mxu0
        %1800 = vmatprep.mubr.f32.mxu0 0.0
        %v1801 = vand.u32 %v1242, 4294901760
        %v1802 = vsub.f32 %v1242, %v1801
        %v1803 = vand.u32 %v1802, 4294901760
        %1804 = vmatmul.mubr.f32.gmra.mxu0 %v1803
        %v1805 = vpop.f32.mrf.mxu0
        %v1806 = vadd.f32 %v1672, %v1805
        %v1807 = vpop.f32.mrf.mxu0
        %1808 = vmatprep.mubr.f32.mxu0 0.0
        %v1809 = vand.u32 %v1245, 4294901760
        %v1810 = vsub.f32 %v1245, %v1809
        %v1811 = vand.u32 %v1810, 4294901760
        %1812 = vmatmul.mubr.f32.gmra.mxu0 %v1811
        %v1813 = vpop.f32.mrf.mxu0
        %v1814 = vadd.f32 %v1679, %v1813
        %v1815 = vpop.f32.mrf.mxu0
        %1816 = vmatprep.mubr.f32.mxu0 0.0
        %v1817 = vand.u32 %v1248, 4294901760
        %v1818 = vsub.f32 %v1248, %v1817
        %v1819 = vand.u32 %v1818, 4294901760
        %1820 = vmatmul.mubr.f32.gmra.mxu0 %v1819
        %v1821 = vpop.f32.mrf.mxu0
        %v1822 = vadd.f32 %v1686, %v1821
        %v1823 = vpop.f32.mrf.mxu0
        %1824 = vmatprep.mubr.f32.mxu0 0.0
        %v1825 = vand.u32 %v1251, 4294901760
        %v1826 = vsub.f32 %v1251, %v1825
        %v1827 = vand.u32 %v1826, 4294901760
        %1828 = vmatmul.mubr.f32.gmra.mxu0 %v1827
        %v1829 = vpop.f32.mrf.mxu0
        %v1830 = vadd.f32 %v1693, %v1829
        %v1831 = vpop.f32.mrf.mxu0
        %1832 = vdwg.mxu0
        %1833 = vmatprep.subr.mxu0 0.0
        %1834 = vmatpush1.msra.mxu0 0.0
        %1835 = vmatprep.subr.mxu0 0.0
        %1836 = vmatpush1.msra.mxu0 0.0
        %1837 = vmatprep.subr.mxu0 0.0
        %1838 = vmatpush1.msra.mxu0 0.0
        %1839 = vmatprep.subr.mxu0 0.0
        %1840 = vmatpush1.msra.mxu0 0.0
        %1841 = vmatprep.subr.mxu0 0.0
        %1842 = vmatpush1.msra.mxu0 0.0
        %1843 = vmatprep.subr.mxu0 0.0
        %1844 = vmatpush1.msra.mxu0 0.0
        %1845 = vmatprep.subr.mxu0 0.0
        %1846 = vmatpush1.msra.mxu0 0.0
        %1847 = vmatprep.subr.mxu0 0.0
        %1848 = vmatpush1.msra.mxu0 0.0
        %1849 = vmatprep.subr.mxu0 0.0
        %v1850 = vand.u32 %v1180, 4294901760
        %v1851 = vsub.f32 %v1180, %v1850
        %v1852 = vand.u32 %v1851, 4294901760
        %1853 = vmatpush1.msra.mxu0 %v1852
        %1854 = vmatprep.subr.mxu0 0.0
        %v1855 = vand.u32 %v1179, 4294901760
        %v1856 = vsub.f32 %v1179, %v1855
        %v1857 = vand.u32 %v1856, 4294901760
        %1858 = vmatpush1.msra.mxu0 %v1857
        %1859 = vmatprep.subr.mxu0 0.0
        %v1860 = vand.u32 %v1178, 4294901760
        %v1861 = vsub.f32 %v1178, %v1860
        %v1862 = vand.u32 %v1861, 4294901760
        %1863 = vmatpush1.msra.mxu0 %v1862
        %1864 = vmatprep.subr.mxu0 0.0
        %v1865 = vand.u32 %v1177, 4294901760
        %v1866 = vsub.f32 %v1177, %v1865
        %v1867 = vand.u32 %v1866, 4294901760
        %1868 = vmatpush1.msra.mxu0 %v1867
        %1869 = vmatprep.subr.mxu0 0.0
        %v1870 = vand.u32 %v1176, 4294901760
        %v1871 = vsub.f32 %v1176, %v1870
        %v1872 = vand.u32 %v1871, 4294901760
        %1873 = vmatpush1.msra.mxu0 %v1872
        %1874 = vmatprep.subr.mxu0 0.0
        %v1875 = vand.u32 %v1175, 4294901760
        %v1876 = vsub.f32 %v1175, %v1875
        %v1877 = vand.u32 %v1876, 4294901760
        %1878 = vmatpush1.msra.mxu0 %v1877
        %1879 = vmatprep.subr.mxu0 0.0
        %v1880 = vand.u32 %v1174, 4294901760
        %v1881 = vsub.f32 %v1174, %v1880
        %v1882 = vand.u32 %v1881, 4294901760
        %1883 = vmatpush1.msra.mxu0 %v1882
        %1884 = vmatprep.subr.mxu0 0.0
        %v1885 = vand.u32 %v1173, 4294901760
        %v1886 = vsub.f32 %v1173, %v1885
        %v1887 = vand.u32 %v1886, 4294901760
        %1888 = vmatpush1.msra.mxu0 %v1887
        %1889 = vmatprep.subr.mxu0 0.0
        %1890 = vmatpush2.msra.mxu0 0.0
        %1891 = vmatprep.subr.mxu0 0.0
        %1892 = vmatpush2.msra.mxu0 0.0
        %1893 = vmatprep.subr.mxu0 0.0
        %1894 = vmatpush2.msra.mxu0 0.0
        %1895 = vmatprep.subr.mxu0 0.0
        %1896 = vmatpush2.msra.mxu0 0.0
        %1897 = vmatprep.subr.mxu0 0.0
        %1898 = vmatpush2.msra.mxu0 0.0
        %1899 = vmatprep.subr.mxu0 0.0
        %1900 = vmatpush2.msra.mxu0 0.0
        %1901 = vmatprep.subr.mxu0 0.0
        %1902 = vmatpush2.msra.mxu0 0.0
        %1903 = vmatprep.subr.mxu0 0.0
        %1904 = vmatpush2.msra.mxu0 0.0
        %1905 = vmatprep.subr.mxu0 0.0
        %1906 = vmatpush2.msra.mxu0 0.0
        %1907 = vmatprep.subr.mxu0 0.0
        %1908 = vmatpush2.msra.mxu0 0.0
        %1909 = vmatprep.subr.mxu0 0.0
        %1910 = vmatpush2.msra.mxu0 0.0
        %1911 = vmatprep.subr.mxu0 0.0
        %1912 = vmatpush2.msra.mxu0 0.0
        %1913 = vmatprep.subr.mxu0 0.0
        %1914 = vmatpush2.msra.mxu0 0.0
        %1915 = vmatprep.subr.mxu0 0.0
        %1916 = vmatpush2.msra.mxu0 0.0
        %1917 = vmatprep.subr.mxu0 0.0
        %1918 = vmatpush2.msra.mxu0 0.0
        %1919 = vmatprep.subr.mxu0 0.0
        %1920 = vmatpush2.msra.mxu0 0.0
        %1921 = vmatprep.mubr.f32.mxu0 0.0
        %v1922 = vand.u32 %v1230, 4294901760
        %1923 = vmatmul.mubr.f32.gmra.mxu0 %v1922
        %v1924 = vpop.f32.mrf.mxu0
        %v1925 = vadd.f32 %v1774, %v1924
        %v1926 = vpop.f32.mrf.mxu0
        %1927 = vmatprep.mubr.f32.mxu0 0.0
        %v1928 = vand.u32 %v1233, 4294901760
        %1929 = vmatmul.mubr.f32.gmra.mxu0 %v1928
        %v1930 = vpop.f32.mrf.mxu0
        %v1931 = vadd.f32 %v1782, %v1930
        %v1932 = vpop.f32.mrf.mxu0
        %1933 = vmatprep.mubr.f32.mxu0 0.0
        %v1934 = vand.u32 %v1236, 4294901760
        %1935 = vmatmul.mubr.f32.gmra.mxu0 %v1934
        %v1936 = vpop.f32.mrf.mxu0
        %v1937 = vadd.f32 %v1790, %v1936
        %v1938 = vpop.f32.mrf.mxu0
        %1939 = vmatprep.mubr.f32.mxu0 0.0
        %v1940 = vand.u32 %v1239, 4294901760
        %1941 = vmatmul.mubr.f32.gmra.mxu0 %v1940
        %v1942 = vpop.f32.mrf.mxu0
        %v1943 = vadd.f32 %v1798, %v1942
        %v1944 = vpop.f32.mrf.mxu0
        %1945 = vmatprep.mubr.f32.mxu0 0.0
        %v1946 = vand.u32 %v1242, 4294901760
        %1947 = vmatmul.mubr.f32.gmra.mxu0 %v1946
        %v1948 = vpop.f32.mrf.mxu0
        %v1949 = vadd.f32 %v1806, %v1948
        %v1950 = vpop.f32.mrf.mxu0
        %1951 = vmatprep.mubr.f32.mxu0 0.0
        %v1952 = vand.u32 %v1245, 4294901760
        %1953 = vmatmul.mubr.f32.gmra.mxu0 %v1952
        %v1954 = vpop.f32.mrf.mxu0
        %v1955 = vadd.f32 %v1814, %v1954
        %v1956 = vpop.f32.mrf.mxu0
        %1957 = vmatprep.mubr.f32.mxu0 0.0
        %v1958 = vand.u32 %v1248, 4294901760
        %1959 = vmatmul.mubr.f32.gmra.mxu0 %v1958
        %v1960 = vpop.f32.mrf.mxu0
        %v1961 = vadd.f32 %v1822, %v1960
        %v1962 = vpop.f32.mrf.mxu0
        %1963 = vmatprep.mubr.f32.mxu0 0.0
        %v1964 = vand.u32 %v1251, 4294901760
        %1965 = vmatmul.mubr.f32.gmra.mxu0 %v1964
        %v1966 = vpop.f32.mrf.mxu0
        %v1967 = vadd.f32 %v1830, %v1966
        %v1968 = vpop.f32.mrf.mxu0
        %1969 = vdwg.mxu0
        %1970 = vmatprep.subr.mxu0 0.0
        %1971 = vmatpush1.msra.mxu0 0.0
        %1972 = vmatprep.subr.mxu0 0.0
        %1973 = vmatpush1.msra.mxu0 0.0
        %1974 = vmatprep.subr.mxu0 0.0
        %1975 = vmatpush1.msra.mxu0 0.0
        %1976 = vmatprep.subr.mxu0 0.0
        %1977 = vmatpush1.msra.mxu0 0.0
        %1978 = vmatprep.subr.mxu0 0.0
        %1979 = vmatpush1.msra.mxu0 0.0
        %1980 = vmatprep.subr.mxu0 0.0
        %1981 = vmatpush1.msra.mxu0 0.0
        %1982 = vmatprep.subr.mxu0 0.0
        %1983 = vmatpush1.msra.mxu0 0.0
        %1984 = vmatprep.subr.mxu0 0.0
        %1985 = vmatpush1.msra.mxu0 0.0
        %1986 = vmatprep.subr.mxu0 0.0
        %v1987 = vand.u32 %v1180, 4294901760
        %1988 = vmatpush1.msra.mxu0 %v1987
        %1989 = vmatprep.subr.mxu0 0.0
        %v1990 = vand.u32 %v1179, 4294901760
        %1991 = vmatpush1.msra.mxu0 %v1990
        %1992 = vmatprep.subr.mxu0 0.0
        %v1993 = vand.u32 %v1178, 4294901760
        %1994 = vmatpush1.msra.mxu0 %v1993
        %1995 = vmatprep.subr.mxu0 0.0
        %v1996 = vand.u32 %v1177, 4294901760
        %1997 = vmatpush1.msra.mxu0 %v1996
        %1998 = vmatprep.subr.mxu0 0.0
        %v1999 = vand.u32 %v1176, 4294901760
        %2000 = vmatpush1.msra.mxu0 %v1999
        %2001 = vmatprep.subr.mxu0 0.0
        %v2002 = vand.u32 %v1175, 4294901760
        %2003 = vmatpush1.msra.mxu0 %v2002
        %2004 = vmatprep.subr.mxu0 0.0
        %v2005 = vand.u32 %v1174, 4294901760
        %2006 = vmatpush1.msra.mxu0 %v2005
        %2007 = vmatprep.subr.mxu0 0.0
        %v2008 = vand.u32 %v1173, 4294901760
        %2009 = vmatpush1.msra.mxu0 %v2008
        %2010 = vmatprep.subr.mxu0 0.0
        %2011 = vmatpush2.msra.mxu0 0.0
        %2012 = vmatprep.subr.mxu0 0.0
        %2013 = vmatpush2.msra.mxu0 0.0
        %2014 = vmatprep.subr.mxu0 0.0
        %2015 = vmatpush2.msra.mxu0 0.0
        %2016 = vmatprep.subr.mxu0 0.0
        %2017 = vmatpush2.msra.mxu0 0.0
        %2018 = vmatprep.subr.mxu0 0.0
        %2019 = vmatpush2.msra.mxu0 0.0
        %2020 = vmatprep.subr.mxu0 0.0
        %2021 = vmatpush2.msra.mxu0 0.0
        %2022 = vmatprep.subr.mxu0 0.0
        %2023 = vmatpush2.msra.mxu0 0.0
        %2024 = vmatprep.subr.mxu0 0.0
        %2025 = vmatpush2.msra.mxu0 0.0
        %2026 = vmatprep.subr.mxu0 0.0
        %2027 = vmatpush2.msra.mxu0 0.0
        %2028 = vmatprep.subr.mxu0 0.0
        %2029 = vmatpush2.msra.mxu0 0.0
        %2030 = vmatprep.subr.mxu0 0.0
        %2031 = vmatpush2.msra.mxu0 0.0
        %2032 = vmatprep.subr.mxu0 0.0
        %2033 = vmatpush2.msra.mxu0 0.0
        %2034 = vmatprep.subr.mxu0 0.0
        %2035 = vmatpush2.msra.mxu0 0.0
        %2036 = vmatprep.subr.mxu0 0.0
        %2037 = vmatpush2.msra.mxu0 0.0
        %2038 = vmatprep.subr.mxu0 0.0
        %2039 = vmatpush2.msra.mxu0 0.0
        %2040 = vmatprep.subr.mxu0 0.0
        %2041 = vmatpush2.msra.mxu0 0.0
        %2042 = vmatprep.mubr.f32.mxu0 0.0
        %v2043 = vand.u32 %v1230, 4294901760
        %2044 = vmatmul.mubr.f32.gmra.mxu0 %v2043
        %v2045 = vpop.f32.mrf.mxu0
        %v2046 = vadd.f32 %v1925, %v2045
        %v2047 = vpop.f32.mrf.mxu0
        %2048 = vmatprep.mubr.f32.mxu0 0.0
        %v2049 = vand.u32 %v1233, 4294901760
        %2050 = vmatmul.mubr.f32.gmra.mxu0 %v2049
        %v2051 = vpop.f32.mrf.mxu0
        %v2052 = vadd.f32 %v1931, %v2051
        %v2053 = vpop.f32.mrf.mxu0
        %2054 = vmatprep.mubr.f32.mxu0 0.0
        %v2055 = vand.u32 %v1236, 4294901760
        %2056 = vmatmul.mubr.f32.gmra.mxu0 %v2055
        %v2057 = vpop.f32.mrf.mxu0
        %v2058 = vadd.f32 %v1937, %v2057
        %v2059 = vpop.f32.mrf.mxu0
        %2060 = vmatprep.mubr.f32.mxu0 0.0
        %v2061 = vand.u32 %v1239, 4294901760
        %2062 = vmatmul.mubr.f32.gmra.mxu0 %v2061
        %v2063 = vpop.f32.mrf.mxu0
        %v2064 = vadd.f32 %v1943, %v2063
        %v2065 = vpop.f32.mrf.mxu0
        %2066 = vmatprep.mubr.f32.mxu0 0.0
        %v2067 = vand.u32 %v1242, 4294901760
        %2068 = vmatmul.mubr.f32.gmra.mxu0 %v2067
        %v2069 = vpop.f32.mrf.mxu0
        %v2070 = vadd.f32 %v1949, %v2069
        %v2071 = vpop.f32.mrf.mxu0
        %2072 = vmatprep.mubr.f32.mxu0 0.0
        %v2073 = vand.u32 %v1245, 4294901760
        %2074 = vmatmul.mubr.f32.gmra.mxu0 %v2073
        %v2075 = vpop.f32.mrf.mxu0
        %v2076 = vadd.f32 %v1955, %v2075
        %v2077 = vpop.f32.mrf.mxu0
        %2078 = vmatprep.mubr.f32.mxu0 0.0
        %v2079 = vand.u32 %v1248, 4294901760
        %2080 = vmatmul.mubr.f32.gmra.mxu0 %v2079
        %v2081 = vpop.f32.mrf.mxu0
        %v2082 = vadd.f32 %v1961, %v2081
        %v2083 = vpop.f32.mrf.mxu0
        %2084 = vmatprep.mubr.f32.mxu0 0.0
        %v2085 = vand.u32 %v1251, 4294901760
        %2086 = vmatmul.mubr.f32.gmra.mxu0 %v2085
        %v2087 = vpop.f32.mrf.mxu0
        %v2088 = vadd.f32 %v1967, %v2087
        %v2089 = vpop.f32.mrf.mxu0
        %2090 = vdwg.mxu0
        %v2091 = vlaneseq
        %v2092 = vshrl.u32 %v2091, 7
        %v2093 = vsub.s32 0, %v2092
        %v2094 = vrot.slane %v1227, %v2093
        %v2095 = vadd.f32 %v2094, %v2046
        %v2096 = vadd.f32 %v2094, %v2052
        %v2097 = vadd.f32 %v2094, %v2058
        %v2098 = vadd.f32 %v2094, %v2064
        %v2099 = vadd.f32 %v2094, %v2070
        %v2100 = vadd.f32 %v2094, %v2076
        %v2101 = vadd.f32 %v2094, %v2082
        %v2102 = vadd.f32 %v2094, %v2088
        %2104 = vset.pattern.permute.xlu0 0
        %2105 = vperm.xlu0 %2104, %v527
        %v2106 = vpop.permute.xlu0 %2105
        %2109 = vset.pattern.permute.xlu0 0
        %2110 = vperm.xlu0 %2109, %v528
        %v2111 = vpop.permute.xlu0 %2110
        %2114 = vset.pattern.permute.xlu0 0
        %2115 = vperm.xlu0 %2114, %v529
        %v2116 = vpop.permute.xlu0 %2115
        %2119 = vset.pattern.permute.xlu0 0
        %2120 = vperm.xlu0 %2119, %v530
        %v2121 = vpop.permute.xlu0 %2120
        %2124 = vset.pattern.permute.xlu0 0
        %2125 = vperm.xlu0 %2124, %v531
        %v2126 = vpop.permute.xlu0 %2125
        %2129 = vset.pattern.permute.xlu0 0
        %2130 = vperm.xlu0 %2129, %v532
        %v2131 = vpop.permute.xlu0 %2130
        %2134 = vset.pattern.permute.xlu0 0
        %2135 = vperm.xlu0 %2134, %v533
        %v2136 = vpop.permute.xlu0 %2135
        %2139 = vset.pattern.permute.xlu0 0
        %2140 = vperm.xlu0 %2139, %v534
        %v2141 = vpop.permute.xlu0 %2140
        %v2143 = vmul.f32 %v2106, %v653
        %v2144 = vmul.f32 %v2111, %v660
        %v2145 = vmul.f32 %v2116, %v667
        %v2146 = vmul.f32 %v2121, %v674
        %v2147 = vmul.f32 %v2126, %v681
        %v2148 = vmul.f32 %v2131, %v688
        %v2149 = vmul.f32 %v2136, %v695
        %v2150 = vmul.f32 %v2141, %v702
        %v2151 = vsub.f32 1.0, %v527
        %v2152 = vsub.f32 1.0, %v528
        %v2153 = vsub.f32 1.0, %v529
        %v2154 = vsub.f32 1.0, %v530
        %v2155 = vsub.f32 1.0, %v531
        %v2156 = vsub.f32 1.0, %v532
        %v2157 = vsub.f32 1.0, %v533
        %v2158 = vsub.f32 1.0, %v534
        %2160 = vset.pattern.permute.xlu0 0
        %2161 = vperm.xlu0 %2160, %v2151
        %v2162 = vpop.permute.xlu0 %2161
        %2165 = vset.pattern.permute.xlu0 0
        %2166 = vperm.xlu0 %2165, %v2152
        %v2167 = vpop.permute.xlu0 %2166
        %2170 = vset.pattern.permute.xlu0 0
        %2171 = vperm.xlu0 %2170, %v2153
        %v2172 = vpop.permute.xlu0 %2171
        %2175 = vset.pattern.permute.xlu0 0
        %2176 = vperm.xlu0 %2175, %v2154
        %v2177 = vpop.permute.xlu0 %2176
        %2180 = vset.pattern.permute.xlu0 0
        %2181 = vperm.xlu0 %2180, %v2155
        %v2182 = vpop.permute.xlu0 %2181
        %2185 = vset.pattern.permute.xlu0 0
        %2186 = vperm.xlu0 %2185, %v2156
        %v2187 = vpop.permute.xlu0 %2186
        %2190 = vset.pattern.permute.xlu0 0
        %2191 = vperm.xlu0 %2190, %v2157
        %v2192 = vpop.permute.xlu0 %2191
        %2195 = vset.pattern.permute.xlu0 0
        %2196 = vperm.xlu0 %2195, %v2158
        %v2197 = vpop.permute.xlu0 %2196
        %v2199 = vmul.f32 %v2162, %v573
        %v2200 = vmul.f32 %v2167, %v580
        %v2201 = vmul.f32 %v2172, %v587
        %v2202 = vmul.f32 %v2177, %v594
        %v2203 = vmul.f32 %v2182, %v601
        %v2204 = vmul.f32 %v2187, %v608
        %v2205 = vmul.f32 %v2192, %v615
        %v2206 = vmul.f32 %v2197, %v622
        %v2207 = vadd.f32 %v2143, %v2199
        %v2208 = vadd.f32 %v2144, %v2200
        %v2209 = vadd.f32 %v2145, %v2201
        %v2210 = vadd.f32 %v2146, %v2202
        %v2211 = vadd.f32 %v2147, %v2203
        %v2212 = vadd.f32 %v2148, %v2204
        %v2213 = vadd.f32 %v2149, %v2205
        %v2214 = vadd.f32 %v2150, %v2206
        %v2215 = vand.u32 2147483647, %v2095
        %vm2216 = vcmp.le.f32.partialorder %v2215, 0.7853982
        %vm2217 = vcmp.lt.s32.totalorder %v2095, 0
        %v2218 = vand.u32 %v2095, 2139095040
        %v2219 = vshrl.u32 %v2218, 23
        %v2220 = vsub.s32 %v2219, 127
        %v2221 = vand.u32 2147483647, %v2095
        %v2222 = vand.u32 %v2221, 8388607
        %v2223 = vor.u32 %v2222, 8388608
        %v2224 = vsub.s32 0, %v2223
        %v2225 = vadd.s32 %v2220, 1
        %vm2226 = vcmp.gt.s32.totalorder %v2225, 0
        %v2227 = vsel %vm2226, %v2225, 0
        %v2228 = vshrl.u32 %v2227, 5
        %v2229 = vand.u32 %v2227, 31
        %v2230 = vsub.s32 32, %v2229
        %v2231 = vshrl.u32 683565275, %v2230
        %v2232 = vshll.u32 683565275, %v2229
        %v2233 = vshrl.u32 2475754826, %v2230
        %v2234 = vor.u32 %v2232, %v2233
        %v2235 = vshll.u32 2475754826, %v2229
        %v2236 = vshrl.u32 2131351028, %v2230
        %v2237 = vor.u32 %v2235, %v2236
        %v2238 = vshll.u32 2131351028, %v2229
        %v2239 = vshrl.u32 2102212464, %v2230
        %v2240 = vor.u32 %v2238, %v2239
        %v2241 = vshll.u32 2102212464, %v2229
        %v2242 = vshrl.u32 920167782, %v2230
        %v2243 = vor.u32 %v2241, %v2242
        %v2244 = vshll.u32 920167782, %v2229
        %v2245 = vshrl.u32 1326507024, %v2230
        %v2246 = vor.u32 %v2244, %v2245
        %vm2247 = vcmp.lt.s32.totalorder %v2228, 1
        %vm2248 = vcmp.lt.s32.totalorder %v2228, 2
        %vm2249 = vcmp.lt.s32.totalorder %v2228, 3
        %vm2250 = vcmp.lt.s32.totalorder %v2228, 4
        %v2251 = vsel %vm2247, %v2231, %v2234
        %v2252 = vsel %vm2250, %v2240, 2102212464
        %v2253 = vsel %vm2249, %v2237, %v2252
        %v2254 = vsel %vm2248, %v2251, %v2253
        %v2255 = vsel %vm2247, %v2234, %v2237
        %v2256 = vsel %vm2250, %v2243, 920167782
        %v2257 = vsel %vm2249, %v2240, %v2256
        %v2258 = vsel %vm2248, %v2255, %v2257
        %v2259 = vsel %vm2247, %v2237, %v2240
        %v2260 = vsel %vm2250, %v2246, 1326507024
        %v2261 = vsel %vm2249, %v2243, %v2260
        %v2262 = vsel %vm2248, %v2259, %v2261
        %v2263 = vshll.u32 %v2223, 8
        %v2264 = vmul.u32.u64.compose %v2263, %v2262
        %v2265 = vextract.low.u32 %v2264
        %v2266 = vextract.high.u32 %v2264
        %v2267 = vmul.u32.u64.compose %v2263, %v2258
        %v2268 = vextract.low.u32 %v2267
        %v2269 = vextract.high.u32 %v2267
        %v2270 = vmul.u32 %v2263, %v2254
        %v2271 = vadd.s32 %v2266, %v2268
        %vm2272 = vc.u32 %v2266, %v2268
        %v2273 = vadd.s32 %v2269, 1
        %v2274 = vsel %vm2272, %v2273, %v2269
        %v2275 = vadd.s32 %v2270, %v2274
        %v2276 = vadd.s32 %v2275, 536870912
        %v2277 = vshrl.u32 %v2276, 30
        %v2278 = vshll.u32 %v2277, 30
        %v2279 = vsub.s32 %v2275, %v2278
        %vm2280 = vcmp.lt.s32.totalorder %v2279, 0
        %v2281 = vsub.s32 0, %v2279
        %v2282 = vsel %vm2280, %v2281, %v2279
        %v2283 = vclz %v2282
        %v2284 = vsub.s32 %v2283, 2
        %vm2285 = vcmp.gt.s32.totalorder 0, %v2284
        %v2286 = vsel %vm2285, 0, %v2284
        %v2287 = vsub.s32 32, %v2286
        %v2288 = vshll.u32 %v2279, %v2286
        %v2289 = vshrl.u32 %v2271, %v2287
        %v2290 = vor.u32 %v2288, %v2289
        %v2291 = vsub.s32 4294967266, %v2286
        %v2292 = vadd.s32 %v2291, 127
        %v2293 = vshll.u32 %v2292, 23
        %v2294 = vor.u32 4788187, %v2293
        %v2295 = vand.u32 2147483647, %v2294
        %v2297 = vcvt.s32.f32 %v2290
        %v2298 = vmul.f32 %v2297, %v2295
        %v2299 = vxor.u32 %v2298, 2147483648
        %v2300 = vsel %vm2217, %v2299, %v2298
        %v2301 = vsub.s32 4, %v2277
        %v2302 = vsel %vm2217, %v2301, %v2277
        %v2303 = vsel %vm2216, %v2095, %v2300
        %v2304 = vsel %vm2216, 0, %v2302
        %v2305 = vcosq.f32.pop %v2303
        %v2306 = vsinq.f32.pop %v2303
        %vm2307 = vweird.f32 %v2095
        %v2308 = vand.u32 %v2304, 3
        %vm2309 = vcmp.lt.s32.totalorder %v2308, 2
        %vm2310 = vcmp.eq.s32.totalorder %v2308, 0
        %v2311 = vxor.u32 %v2306, 2147483648
        %v2312 = vsel %vm2310, %v2305, %v2311
        %vm2313 = vcmp.eq.s32.totalorder %v2308, 2
        %v2314 = vxor.u32 %v2305, 2147483648
        %v2315 = vsel %vm2313, %v2314, %v2306
        %v2316 = vsel %vm2309, %v2312, %v2315
        %v2317 = vsel %vm2307, nan, %v2316
        %v2318 = vand.u32 2147483647, %v2096
        %vm2319 = vcmp.le.f32.partialorder %v2318, 0.7853982
        %vm2320 = vcmp.lt.s32.totalorder %v2096, 0
        %v2321 = vand.u32 %v2096, 2139095040
        %v2322 = vshrl.u32 %v2321, 23
        %v2323 = vsub.s32 %v2322, 127
        %v2324 = vand.u32 2147483647, %v2096
        %v2325 = vand.u32 %v2324, 8388607
        %v2326 = vor.u32 %v2325, 8388608
        %v2327 = vsub.s32 0, %v2326
        %v2328 = vadd.s32 %v2323, 1
        %vm2329 = vcmp.gt.s32.totalorder %v2328, 0
        %v2330 = vsel %vm2329, %v2328, 0
        %v2331 = vshrl.u32 %v2330, 5
        %v2332 = vand.u32 %v2330, 31
        %v2333 = vsub.s32 32, %v2332
        %v2334 = vshrl.u32 683565275, %v2333
        %v2335 = vshll.u32 683565275, %v2332
        %v2336 = vshrl.u32 2475754826, %v2333
        %v2337 = vor.u32 %v2335, %v2336
        %v2338 = vshll.u32 2475754826, %v2332
        %v2339 = vshrl.u32 2131351028, %v2333
        %v2340 = vor.u32 %v2338, %v2339
        %v2341 = vshll.u32 2131351028, %v2332
        %v2342 = vshrl.u32 2102212464, %v2333
        %v2343 = vor.u32 %v2341, %v2342
        %v2344 = vshll.u32 2102212464, %v2332
        %v2345 = vshrl.u32 920167782, %v2333
        %v2346 = vor.u32 %v2344, %v2345
        %v2347 = vshll.u32 920167782, %v2332
        %v2348 = vshrl.u32 1326507024, %v2333
        %v2349 = vor.u32 %v2347, %v2348
        %vm2350 = vcmp.lt.s32.totalorder %v2331, 1
        %vm2351 = vcmp.lt.s32.totalorder %v2331, 2
        %vm2352 = vcmp.lt.s32.totalorder %v2331, 3
        %vm2353 = vcmp.lt.s32.totalorder %v2331, 4
        %v2354 = vsel %vm2350, %v2334, %v2337
        %v2355 = vsel %vm2353, %v2343, 2102212464
        %v2356 = vsel %vm2352, %v2340, %v2355
        %v2357 = vsel %vm2351, %v2354, %v2356
        %v2358 = vsel %vm2350, %v2337, %v2340
        %v2359 = vsel %vm2353, %v2346, 920167782
        %v2360 = vsel %vm2352, %v2343, %v2359
        %v2361 = vsel %vm2351, %v2358, %v2360
        %v2362 = vsel %vm2350, %v2340, %v2343
        %v2363 = vsel %vm2353, %v2349, 1326507024
        %v2364 = vsel %vm2352, %v2346, %v2363
        %v2365 = vsel %vm2351, %v2362, %v2364
        %v2366 = vshll.u32 %v2326, 8
        %v2367 = vmul.u32.u64.compose %v2366, %v2365
        %v2368 = vextract.low.u32 %v2367
        %v2369 = vextract.high.u32 %v2367
        %v2370 = vmul.u32.u64.compose %v2366, %v2361
        %v2371 = vextract.low.u32 %v2370
        %v2372 = vextract.high.u32 %v2370
        %v2373 = vmul.u32 %v2366, %v2357
        %v2374 = vadd.s32 %v2369, %v2371
        %vm2375 = vc.u32 %v2369, %v2371
        %v2376 = vadd.s32 %v2372, 1
        %v2377 = vsel %vm2375, %v2376, %v2372
        %v2378 = vadd.s32 %v2373, %v2377
        %v2379 = vadd.s32 %v2378, 536870912
        %v2380 = vshrl.u32 %v2379, 30
        %v2381 = vshll.u32 %v2380, 30
        %v2382 = vsub.s32 %v2378, %v2381
        %vm2383 = vcmp.lt.s32.totalorder %v2382, 0
        %v2384 = vsub.s32 0, %v2382
        %v2385 = vsel %vm2383, %v2384, %v2382
        %v2386 = vclz %v2385
        %v2387 = vsub.s32 %v2386, 2
        %vm2388 = vcmp.gt.s32.totalorder 0, %v2387
        %v2389 = vsel %vm2388, 0, %v2387
        %v2390 = vsub.s32 32, %v2389
        %v2391 = vshll.u32 %v2382, %v2389
        %v2392 = vshrl.u32 %v2374, %v2390
        %v2393 = vor.u32 %v2391, %v2392
        %v2394 = vsub.s32 4294967266, %v2389
        %v2395 = vadd.s32 %v2394, 127
        %v2396 = vshll.u32 %v2395, 23
        %v2397 = vor.u32 4788187, %v2396
        %v2398 = vand.u32 2147483647, %v2397
        %v2400 = vcvt.s32.f32 %v2393
        %v2401 = vmul.f32 %v2400, %v2398
        %v2402 = vxor.u32 %v2401, 2147483648
        %v2403 = vsel %vm2320, %v2402, %v2401
        %v2404 = vsub.s32 4, %v2380
        %v2405 = vsel %vm2320, %v2404, %v2380
        %v2406 = vsel %vm2319, %v2096, %v2403
        %v2407 = vsel %vm2319, 0, %v2405
        %v2408 = vcosq.f32.pop %v2406
        %v2409 = vsinq.f32.pop %v2406
        %vm2410 = vweird.f32 %v2096
        %v2411 = vand.u32 %v2407, 3
        %vm2412 = vcmp.lt.s32.totalorder %v2411, 2
        %vm2413 = vcmp.eq.s32.totalorder %v2411, 0
        %v2414 = vxor.u32 %v2409, 2147483648
        %v2415 = vsel %vm2413, %v2408, %v2414
        %vm2416 = vcmp.eq.s32.totalorder %v2411, 2
        %v2417 = vxor.u32 %v2408, 2147483648
        %v2418 = vsel %vm2416, %v2417, %v2409
        %v2419 = vsel %vm2412, %v2415, %v2418
        %v2420 = vsel %vm2410, nan, %v2419
        %v2421 = vand.u32 2147483647, %v2097
        %vm2422 = vcmp.le.f32.partialorder %v2421, 0.7853982
        %vm2423 = vcmp.lt.s32.totalorder %v2097, 0
        %v2424 = vand.u32 %v2097, 2139095040
        %v2425 = vshrl.u32 %v2424, 23
        %v2426 = vsub.s32 %v2425, 127
        %v2427 = vand.u32 2147483647, %v2097
        %v2428 = vand.u32 %v2427, 8388607
        %v2429 = vor.u32 %v2428, 8388608
        %v2430 = vsub.s32 0, %v2429
        %v2431 = vadd.s32 %v2426, 1
        %vm2432 = vcmp.gt.s32.totalorder %v2431, 0
        %v2433 = vsel %vm2432, %v2431, 0
        %v2434 = vshrl.u32 %v2433, 5
        %v2435 = vand.u32 %v2433, 31
        %v2436 = vsub.s32 32, %v2435
        %v2437 = vshrl.u32 683565275, %v2436
        %v2438 = vshll.u32 683565275, %v2435
        %v2439 = vshrl.u32 2475754826, %v2436
        %v2440 = vor.u32 %v2438, %v2439
        %v2441 = vshll.u32 2475754826, %v2435
        %v2442 = vshrl.u32 2131351028, %v2436
        %v2443 = vor.u32 %v2441, %v2442
        %v2444 = vshll.u32 2131351028, %v2435
        %v2445 = vshrl.u32 2102212464, %v2436
        %v2446 = vor.u32 %v2444, %v2445
        %v2447 = vshll.u32 2102212464, %v2435
        %v2448 = vshrl.u32 920167782, %v2436
        %v2449 = vor.u32 %v2447, %v2448
        %v2450 = vshll.u32 920167782, %v2435
        %v2451 = vshrl.u32 1326507024, %v2436
        %v2452 = vor.u32 %v2450, %v2451
        %vm2453 = vcmp.lt.s32.totalorder %v2434, 1
        %vm2454 = vcmp.lt.s32.totalorder %v2434, 2
        %vm2455 = vcmp.lt.s32.totalorder %v2434, 3
        %vm2456 = vcmp.lt.s32.totalorder %v2434, 4
        %v2457 = vsel %vm2453, %v2437, %v2440
        %v2458 = vsel %vm2456, %v2446, 2102212464
        %v2459 = vsel %vm2455, %v2443, %v2458
        %v2460 = vsel %vm2454, %v2457, %v2459
        %v2461 = vsel %vm2453, %v2440, %v2443
        %v2462 = vsel %vm2456, %v2449, 920167782
        %v2463 = vsel %vm2455, %v2446, %v2462
        %v2464 = vsel %vm2454, %v2461, %v2463
        %v2465 = vsel %vm2453, %v2443, %v2446
        %v2466 = vsel %vm2456, %v2452, 1326507024
        %v2467 = vsel %vm2455, %v2449, %v2466
        %v2468 = vsel %vm2454, %v2465, %v2467
        %v2469 = vshll.u32 %v2429, 8
        %v2470 = vmul.u32.u64.compose %v2469, %v2468
        %v2471 = vextract.low.u32 %v2470
        %v2472 = vextract.high.u32 %v2470
        %v2473 = vmul.u32.u64.compose %v2469, %v2464
        %v2474 = vextract.low.u32 %v2473
        %v2475 = vextract.high.u32 %v2473
        %v2476 = vmul.u32 %v2469, %v2460
        %v2477 = vadd.s32 %v2472, %v2474
        %vm2478 = vc.u32 %v2472, %v2474
        %v2479 = vadd.s32 %v2475, 1
        %v2480 = vsel %vm2478, %v2479, %v2475
        %v2481 = vadd.s32 %v2476, %v2480
        %v2482 = vadd.s32 %v2481, 536870912
        %v2483 = vshrl.u32 %v2482, 30
        %v2484 = vshll.u32 %v2483, 30
        %v2485 = vsub.s32 %v2481, %v2484
        %vm2486 = vcmp.lt.s32.totalorder %v2485, 0
        %v2487 = vsub.s32 0, %v2485
        %v2488 = vsel %vm2486, %v2487, %v2485
        %v2489 = vclz %v2488
        %v2490 = vsub.s32 %v2489, 2
        %vm2491 = vcmp.gt.s32.totalorder 0, %v2490
        %v2492 = vsel %vm2491, 0, %v2490
        %v2493 = vsub.s32 32, %v2492
        %v2494 = vshll.u32 %v2485, %v2492
        %v2495 = vshrl.u32 %v2477, %v2493
        %v2496 = vor.u32 %v2494, %v2495
        %v2497 = vsub.s32 4294967266, %v2492
        %v2498 = vadd.s32 %v2497, 127
        %v2499 = vshll.u32 %v2498, 23
        %v2500 = vor.u32 4788187, %v2499
        %v2501 = vand.u32 2147483647, %v2500
        %v2503 = vcvt.s32.f32 %v2496
        %v2504 = vmul.f32 %v2503, %v2501
        %v2505 = vxor.u32 %v2504, 2147483648
        %v2506 = vsel %vm2423, %v2505, %v2504
        %v2507 = vsub.s32 4, %v2483
        %v2508 = vsel %vm2423, %v2507, %v2483
        %v2509 = vsel %vm2422, %v2097, %v2506
        %v2510 = vsel %vm2422, 0, %v2508
        %v2511 = vcosq.f32.pop %v2509
        %v2512 = vsinq.f32.pop %v2509
        %vm2513 = vweird.f32 %v2097
        %v2514 = vand.u32 %v2510, 3
        %vm2515 = vcmp.lt.s32.totalorder %v2514, 2
        %vm2516 = vcmp.eq.s32.totalorder %v2514, 0
        %v2517 = vxor.u32 %v2512, 2147483648
        %v2518 = vsel %vm2516, %v2511, %v2517
        %vm2519 = vcmp.eq.s32.totalorder %v2514, 2
        %v2520 = vxor.u32 %v2511, 2147483648
        %v2521 = vsel %vm2519, %v2520, %v2512
        %v2522 = vsel %vm2515, %v2518, %v2521
        %v2523 = vsel %vm2513, nan, %v2522
        %v2524 = vand.u32 2147483647, %v2098
        %vm2525 = vcmp.le.f32.partialorder %v2524, 0.7853982
        %vm2526 = vcmp.lt.s32.totalorder %v2098, 0
        %v2527 = vand.u32 %v2098, 2139095040
        %v2528 = vshrl.u32 %v2527, 23
        %v2529 = vsub.s32 %v2528, 127
        %v2530 = vand.u32 2147483647, %v2098
        %v2531 = vand.u32 %v2530, 8388607
        %v2532 = vor.u32 %v2531, 8388608
        %v2533 = vsub.s32 0, %v2532
        %v2534 = vadd.s32 %v2529, 1
        %vm2535 = vcmp.gt.s32.totalorder %v2534, 0
        %v2536 = vsel %vm2535, %v2534, 0
        %v2537 = vshrl.u32 %v2536, 5
        %v2538 = vand.u32 %v2536, 31
        %v2539 = vsub.s32 32, %v2538
        %v2540 = vshrl.u32 683565275, %v2539
        %v2541 = vshll.u32 683565275, %v2538
        %v2542 = vshrl.u32 2475754826, %v2539
        %v2543 = vor.u32 %v2541, %v2542
        %v2544 = vshll.u32 2475754826, %v2538
        %v2545 = vshrl.u32 2131351028, %v2539
        %v2546 = vor.u32 %v2544, %v2545
        %v2547 = vshll.u32 2131351028, %v2538
        %v2548 = vshrl.u32 2102212464, %v2539
        %v2549 = vor.u32 %v2547, %v2548
        %v2550 = vshll.u32 2102212464, %v2538
        %v2551 = vshrl.u32 920167782, %v2539
        %v2552 = vor.u32 %v2550, %v2551
        %v2553 = vshll.u32 920167782, %v2538
        %v2554 = vshrl.u32 1326507024, %v2539
        %v2555 = vor.u32 %v2553, %v2554
        %vm2556 = vcmp.lt.s32.totalorder %v2537, 1
        %vm2557 = vcmp.lt.s32.totalorder %v2537, 2
        %vm2558 = vcmp.lt.s32.totalorder %v2537, 3
        %vm2559 = vcmp.lt.s32.totalorder %v2537, 4
        %v2560 = vsel %vm2556, %v2540, %v2543
        %v2561 = vsel %vm2559, %v2549, 2102212464
        %v2562 = vsel %vm2558, %v2546, %v2561
        %v2563 = vsel %vm2557, %v2560, %v2562
        %v2564 = vsel %vm2556, %v2543, %v2546
        %v2565 = vsel %vm2559, %v2552, 920167782
        %v2566 = vsel %vm2558, %v2549, %v2565
        %v2567 = vsel %vm2557, %v2564, %v2566
        %v2568 = vsel %vm2556, %v2546, %v2549
        %v2569 = vsel %vm2559, %v2555, 1326507024
        %v2570 = vsel %vm2558, %v2552, %v2569
        %v2571 = vsel %vm2557, %v2568, %v2570
        %v2572 = vshll.u32 %v2532, 8
        %v2573 = vmul.u32.u64.compose %v2572, %v2571
        %v2574 = vextract.low.u32 %v2573
        %v2575 = vextract.high.u32 %v2573
        %v2576 = vmul.u32.u64.compose %v2572, %v2567
        %v2577 = vextract.low.u32 %v2576
        %v2578 = vextract.high.u32 %v2576
        %v2579 = vmul.u32 %v2572, %v2563
        %v2580 = vadd.s32 %v2575, %v2577
        %vm2581 = vc.u32 %v2575, %v2577
        %v2582 = vadd.s32 %v2578, 1
        %v2583 = vsel %vm2581, %v2582, %v2578
        %v2584 = vadd.s32 %v2579, %v2583
        %v2585 = vadd.s32 %v2584, 536870912
        %v2586 = vshrl.u32 %v2585, 30
        %v2587 = vshll.u32 %v2586, 30
        %v2588 = vsub.s32 %v2584, %v2587
        %vm2589 = vcmp.lt.s32.totalorder %v2588, 0
        %v2590 = vsub.s32 0, %v2588
        %v2591 = vsel %vm2589, %v2590, %v2588
        %v2592 = vclz %v2591
        %v2593 = vsub.s32 %v2592, 2
        %vm2594 = vcmp.gt.s32.totalorder 0, %v2593
        %v2595 = vsel %vm2594, 0, %v2593
        %v2596 = vsub.s32 32, %v2595
        %v2597 = vshll.u32 %v2588, %v2595
        %v2598 = vshrl.u32 %v2580, %v2596
        %v2599 = vor.u32 %v2597, %v2598
        %v2600 = vsub.s32 4294967266, %v2595
        %v2601 = vadd.s32 %v2600, 127
        %v2602 = vshll.u32 %v2601, 23
        %v2603 = vor.u32 4788187, %v2602
        %v2604 = vand.u32 2147483647, %v2603
        %v2606 = vcvt.s32.f32 %v2599
        %v2607 = vmul.f32 %v2606, %v2604
        %v2608 = vxor.u32 %v2607, 2147483648
        %v2609 = vsel %vm2526, %v2608, %v2607
        %v2610 = vsub.s32 4, %v2586
        %v2611 = vsel %vm2526, %v2610, %v2586
        %v2612 = vsel %vm2525, %v2098, %v2609
        %v2613 = vsel %vm2525, 0, %v2611
        %v2614 = vcosq.f32.pop %v2612
        %v2615 = vsinq.f32.pop %v2612
        %vm2616 = vweird.f32 %v2098
        %v2617 = vand.u32 %v2613, 3
        %vm2618 = vcmp.lt.s32.totalorder %v2617, 2
        %vm2619 = vcmp.eq.s32.totalorder %v2617, 0
        %v2620 = vxor.u32 %v2615, 2147483648
        %v2621 = vsel %vm2619, %v2614, %v2620
        %vm2622 = vcmp.eq.s32.totalorder %v2617, 2
        %v2623 = vxor.u32 %v2614, 2147483648
        %v2624 = vsel %vm2622, %v2623, %v2615
        %v2625 = vsel %vm2618, %v2621, %v2624
        %v2626 = vsel %vm2616, nan, %v2625
        %v2627 = vand.u32 2147483647, %v2099
        %vm2628 = vcmp.le.f32.partialorder %v2627, 0.7853982
        %vm2629 = vcmp.lt.s32.totalorder %v2099, 0
        %v2630 = vand.u32 %v2099, 2139095040
        %v2631 = vshrl.u32 %v2630, 23
        %v2632 = vsub.s32 %v2631, 127
        %v2633 = vand.u32 2147483647, %v2099
        %v2634 = vand.u32 %v2633, 8388607
        %v2635 = vor.u32 %v2634, 8388608
        %v2636 = vsub.s32 0, %v2635
        %v2637 = vadd.s32 %v2632, 1
        %vm2638 = vcmp.gt.s32.totalorder %v2637, 0
        %v2639 = vsel %vm2638, %v2637, 0
        %v2640 = vshrl.u32 %v2639, 5
        %v2641 = vand.u32 %v2639, 31
        %v2642 = vsub.s32 32, %v2641
        %v2643 = vshrl.u32 683565275, %v2642
        %v2644 = vshll.u32 683565275, %v2641
        %v2645 = vshrl.u32 2475754826, %v2642
        %v2646 = vor.u32 %v2644, %v2645
        %v2647 = vshll.u32 2475754826, %v2641
        %v2648 = vshrl.u32 2131351028, %v2642
        %v2649 = vor.u32 %v2647, %v2648
        %v2650 = vshll.u32 2131351028, %v2641
        %v2651 = vshrl.u32 2102212464, %v2642
        %v2652 = vor.u32 %v2650, %v2651
        %v2653 = vshll.u32 2102212464, %v2641
        %v2654 = vshrl.u32 920167782, %v2642
        %v2655 = vor.u32 %v2653, %v2654
        %v2656 = vshll.u32 920167782, %v2641
        %v2657 = vshrl.u32 1326507024, %v2642
        %v2658 = vor.u32 %v2656, %v2657
        %vm2659 = vcmp.lt.s32.totalorder %v2640, 1
        %vm2660 = vcmp.lt.s32.totalorder %v2640, 2
        %vm2661 = vcmp.lt.s32.totalorder %v2640, 3
        %vm2662 = vcmp.lt.s32.totalorder %v2640, 4
        %v2663 = vsel %vm2659, %v2643, %v2646
        %v2664 = vsel %vm2662, %v2652, 2102212464
        %v2665 = vsel %vm2661, %v2649, %v2664
        %v2666 = vsel %vm2660, %v2663, %v2665
        %v2667 = vsel %vm2659, %v2646, %v2649
        %v2668 = vsel %vm2662, %v2655, 920167782
        %v2669 = vsel %vm2661, %v2652, %v2668
        %v2670 = vsel %vm2660, %v2667, %v2669
        %v2671 = vsel %vm2659, %v2649, %v2652
        %v2672 = vsel %vm2662, %v2658, 1326507024
        %v2673 = vsel %vm2661, %v2655, %v2672
        %v2674 = vsel %vm2660, %v2671, %v2673
        %v2675 = vshll.u32 %v2635, 8
        %v2676 = vmul.u32.u64.compose %v2675, %v2674
        %v2677 = vextract.low.u32 %v2676
        %v2678 = vextract.high.u32 %v2676
        %v2679 = vmul.u32.u64.compose %v2675, %v2670
        %v2680 = vextract.low.u32 %v2679
        %v2681 = vextract.high.u32 %v2679
        %v2682 = vmul.u32 %v2675, %v2666
        %v2683 = vadd.s32 %v2678, %v2680
        %vm2684 = vc.u32 %v2678, %v2680
        %v2685 = vadd.s32 %v2681, 1
        %v2686 = vsel %vm2684, %v2685, %v2681
        %v2687 = vadd.s32 %v2682, %v2686
        %v2688 = vadd.s32 %v2687, 536870912
        %v2689 = vshrl.u32 %v2688, 30
        %v2690 = vshll.u32 %v2689, 30
        %v2691 = vsub.s32 %v2687, %v2690
        %vm2692 = vcmp.lt.s32.totalorder %v2691, 0
        %v2693 = vsub.s32 0, %v2691
        %v2694 = vsel %vm2692, %v2693, %v2691
        %v2695 = vclz %v2694
        %v2696 = vsub.s32 %v2695, 2
        %vm2697 = vcmp.gt.s32.totalorder 0, %v2696
        %v2698 = vsel %vm2697, 0, %v2696
        %v2699 = vsub.s32 32, %v2698
        %v2700 = vshll.u32 %v2691, %v2698
        %v2701 = vshrl.u32 %v2683, %v2699
        %v2702 = vor.u32 %v2700, %v2701
        %v2703 = vsub.s32 4294967266, %v2698
        %v2704 = vadd.s32 %v2703, 127
        %v2705 = vshll.u32 %v2704, 23
        %v2706 = vor.u32 4788187, %v2705
        %v2707 = vand.u32 2147483647, %v2706
        %v2709 = vcvt.s32.f32 %v2702
        %v2710 = vmul.f32 %v2709, %v2707
        %v2711 = vxor.u32 %v2710, 2147483648
        %v2712 = vsel %vm2629, %v2711, %v2710
        %v2713 = vsub.s32 4, %v2689
        %v2714 = vsel %vm2629, %v2713, %v2689
        %v2715 = vsel %vm2628, %v2099, %v2712
        %v2716 = vsel %vm2628, 0, %v2714
        %v2717 = vcosq.f32.pop %v2715
        %v2718 = vsinq.f32.pop %v2715
        %vm2719 = vweird.f32 %v2099
        %v2720 = vand.u32 %v2716, 3
        %vm2721 = vcmp.lt.s32.totalorder %v2720, 2
        %vm2722 = vcmp.eq.s32.totalorder %v2720, 0
        %v2723 = vxor.u32 %v2718, 2147483648
        %v2724 = vsel %vm2722, %v2717, %v2723
        %vm2725 = vcmp.eq.s32.totalorder %v2720, 2
        %v2726 = vxor.u32 %v2717, 2147483648
        %v2727 = vsel %vm2725, %v2726, %v2718
        %v2728 = vsel %vm2721, %v2724, %v2727
        %v2729 = vsel %vm2719, nan, %v2728
        %v2730 = vand.u32 2147483647, %v2100
        %vm2731 = vcmp.le.f32.partialorder %v2730, 0.7853982
        %vm2732 = vcmp.lt.s32.totalorder %v2100, 0
        %v2733 = vand.u32 %v2100, 2139095040
        %v2734 = vshrl.u32 %v2733, 23
        %v2735 = vsub.s32 %v2734, 127
        %v2736 = vand.u32 2147483647, %v2100
        %v2737 = vand.u32 %v2736, 8388607
        %v2738 = vor.u32 %v2737, 8388608
        %v2739 = vsub.s32 0, %v2738
        %v2740 = vadd.s32 %v2735, 1
        %vm2741 = vcmp.gt.s32.totalorder %v2740, 0
        %v2742 = vsel %vm2741, %v2740, 0
        %v2743 = vshrl.u32 %v2742, 5
        %v2744 = vand.u32 %v2742, 31
        %v2745 = vsub.s32 32, %v2744
        %v2746 = vshrl.u32 683565275, %v2745
        %v2747 = vshll.u32 683565275, %v2744
        %v2748 = vshrl.u32 2475754826, %v2745
        %v2749 = vor.u32 %v2747, %v2748
        %v2750 = vshll.u32 2475754826, %v2744
        %v2751 = vshrl.u32 2131351028, %v2745
        %v2752 = vor.u32 %v2750, %v2751
        %v2753 = vshll.u32 2131351028, %v2744
        %v2754 = vshrl.u32 2102212464, %v2745
        %v2755 = vor.u32 %v2753, %v2754
        %v2756 = vshll.u32 2102212464, %v2744
        %v2757 = vshrl.u32 920167782, %v2745
        %v2758 = vor.u32 %v2756, %v2757
        %v2759 = vshll.u32 920167782, %v2744
        %v2760 = vshrl.u32 1326507024, %v2745
        %v2761 = vor.u32 %v2759, %v2760
        %vm2762 = vcmp.lt.s32.totalorder %v2743, 1
        %vm2763 = vcmp.lt.s32.totalorder %v2743, 2
        %vm2764 = vcmp.lt.s32.totalorder %v2743, 3
        %vm2765 = vcmp.lt.s32.totalorder %v2743, 4
        %v2766 = vsel %vm2762, %v2746, %v2749
        %v2767 = vsel %vm2765, %v2755, 2102212464
        %v2768 = vsel %vm2764, %v2752, %v2767
        %v2769 = vsel %vm2763, %v2766, %v2768
        %v2770 = vsel %vm2762, %v2749, %v2752
        %v2771 = vsel %vm2765, %v2758, 920167782
        %v2772 = vsel %vm2764, %v2755, %v2771
        %v2773 = vsel %vm2763, %v2770, %v2772
        %v2774 = vsel %vm2762, %v2752, %v2755
        %v2775 = vsel %vm2765, %v2761, 1326507024
        %v2776 = vsel %vm2764, %v2758, %v2775
        %v2777 = vsel %vm2763, %v2774, %v2776
        %v2778 = vshll.u32 %v2738, 8
        %v2779 = vmul.u32.u64.compose %v2778, %v2777
        %v2780 = vextract.low.u32 %v2779
        %v2781 = vextract.high.u32 %v2779
        %v2782 = vmul.u32.u64.compose %v2778, %v2773
        %v2783 = vextract.low.u32 %v2782
        %v2784 = vextract.high.u32 %v2782
        %v2785 = vmul.u32 %v2778, %v2769
        %v2786 = vadd.s32 %v2781, %v2783
        %vm2787 = vc.u32 %v2781, %v2783
        %v2788 = vadd.s32 %v2784, 1
        %v2789 = vsel %vm2787, %v2788, %v2784
        %v2790 = vadd.s32 %v2785, %v2789
        %v2791 = vadd.s32 %v2790, 536870912
        %v2792 = vshrl.u32 %v2791, 30
        %v2793 = vshll.u32 %v2792, 30
        %v2794 = vsub.s32 %v2790, %v2793
        %vm2795 = vcmp.lt.s32.totalorder %v2794, 0
        %v2796 = vsub.s32 0, %v2794
        %v2797 = vsel %vm2795, %v2796, %v2794
        %v2798 = vclz %v2797
        %v2799 = vsub.s32 %v2798, 2
        %vm2800 = vcmp.gt.s32.totalorder 0, %v2799
        %v2801 = vsel %vm2800, 0, %v2799
        %v2802 = vsub.s32 32, %v2801
        %v2803 = vshll.u32 %v2794, %v2801
        %v2804 = vshrl.u32 %v2786, %v2802
        %v2805 = vor.u32 %v2803, %v2804
        %v2806 = vsub.s32 4294967266, %v2801
        %v2807 = vadd.s32 %v2806, 127
        %v2808 = vshll.u32 %v2807, 23
        %v2809 = vor.u32 4788187, %v2808
        %v2810 = vand.u32 2147483647, %v2809
        %v2812 = vcvt.s32.f32 %v2805
        %v2813 = vmul.f32 %v2812, %v2810
        %v2814 = vxor.u32 %v2813, 2147483648
        %v2815 = vsel %vm2732, %v2814, %v2813
        %v2816 = vsub.s32 4, %v2792
        %v2817 = vsel %vm2732, %v2816, %v2792
        %v2818 = vsel %vm2731, %v2100, %v2815
        %v2819 = vsel %vm2731, 0, %v2817
        %v2820 = vcosq.f32.pop %v2818
        %v2821 = vsinq.f32.pop %v2818
        %vm2822 = vweird.f32 %v2100
        %v2823 = vand.u32 %v2819, 3
        %vm2824 = vcmp.lt.s32.totalorder %v2823, 2
        %vm2825 = vcmp.eq.s32.totalorder %v2823, 0
        %v2826 = vxor.u32 %v2821, 2147483648
        %v2827 = vsel %vm2825, %v2820, %v2826
        %vm2828 = vcmp.eq.s32.totalorder %v2823, 2
        %v2829 = vxor.u32 %v2820, 2147483648
        %v2830 = vsel %vm2828, %v2829, %v2821
        %v2831 = vsel %vm2824, %v2827, %v2830
        %v2832 = vsel %vm2822, nan, %v2831
        %v2833 = vand.u32 2147483647, %v2101
        %vm2834 = vcmp.le.f32.partialorder %v2833, 0.7853982
        %vm2835 = vcmp.lt.s32.totalorder %v2101, 0
        %v2836 = vand.u32 %v2101, 2139095040
        %v2837 = vshrl.u32 %v2836, 23
        %v2838 = vsub.s32 %v2837, 127
        %v2839 = vand.u32 2147483647, %v2101
        %v2840 = vand.u32 %v2839, 8388607
        %v2841 = vor.u32 %v2840, 8388608
        %v2842 = vsub.s32 0, %v2841
        %v2843 = vadd.s32 %v2838, 1
        %vm2844 = vcmp.gt.s32.totalorder %v2843, 0
        %v2845 = vsel %vm2844, %v2843, 0
        %v2846 = vshrl.u32 %v2845, 5
        %v2847 = vand.u32 %v2845, 31
        %v2848 = vsub.s32 32, %v2847
        %v2849 = vshrl.u32 683565275, %v2848
        %v2850 = vshll.u32 683565275, %v2847
        %v2851 = vshrl.u32 2475754826, %v2848
        %v2852 = vor.u32 %v2850, %v2851
        %v2853 = vshll.u32 2475754826, %v2847
        %v2854 = vshrl.u32 2131351028, %v2848
        %v2855 = vor.u32 %v2853, %v2854
        %v2856 = vshll.u32 2131351028, %v2847
        %v2857 = vshrl.u32 2102212464, %v2848
        %v2858 = vor.u32 %v2856, %v2857
        %v2859 = vshll.u32 2102212464, %v2847
        %v2860 = vshrl.u32 920167782, %v2848
        %v2861 = vor.u32 %v2859, %v2860
        %v2862 = vshll.u32 920167782, %v2847
        %v2863 = vshrl.u32 1326507024, %v2848
        %v2864 = vor.u32 %v2862, %v2863
        %vm2865 = vcmp.lt.s32.totalorder %v2846, 1
        %vm2866 = vcmp.lt.s32.totalorder %v2846, 2
        %vm2867 = vcmp.lt.s32.totalorder %v2846, 3
        %vm2868 = vcmp.lt.s32.totalorder %v2846, 4
        %v2869 = vsel %vm2865, %v2849, %v2852
        %v2870 = vsel %vm2868, %v2858, 2102212464
        %v2871 = vsel %vm2867, %v2855, %v2870
        %v2872 = vsel %vm2866, %v2869, %v2871
        %v2873 = vsel %vm2865, %v2852, %v2855
        %v2874 = vsel %vm2868, %v2861, 920167782
        %v2875 = vsel %vm2867, %v2858, %v2874
        %v2876 = vsel %vm2866, %v2873, %v2875
        %v2877 = vsel %vm2865, %v2855, %v2858
        %v2878 = vsel %vm2868, %v2864, 1326507024
        %v2879 = vsel %vm2867, %v2861, %v2878
        %v2880 = vsel %vm2866, %v2877, %v2879
        %v2881 = vshll.u32 %v2841, 8
        %v2882 = vmul.u32.u64.compose %v2881, %v2880
        %v2883 = vextract.low.u32 %v2882
        %v2884 = vextract.high.u32 %v2882
        %v2885 = vmul.u32.u64.compose %v2881, %v2876
        %v2886 = vextract.low.u32 %v2885
        %v2887 = vextract.high.u32 %v2885
        %v2888 = vmul.u32 %v2881, %v2872
        %v2889 = vadd.s32 %v2884, %v2886
        %vm2890 = vc.u32 %v2884, %v2886
        %v2891 = vadd.s32 %v2887, 1
        %v2892 = vsel %vm2890, %v2891, %v2887
        %v2893 = vadd.s32 %v2888, %v2892
        %v2894 = vadd.s32 %v2893, 536870912
        %v2895 = vshrl.u32 %v2894, 30
        %v2896 = vshll.u32 %v2895, 30
        %v2897 = vsub.s32 %v2893, %v2896
        %vm2898 = vcmp.lt.s32.totalorder %v2897, 0
        %v2899 = vsub.s32 0, %v2897
        %v2900 = vsel %vm2898, %v2899, %v2897
        %v2901 = vclz %v2900
        %v2902 = vsub.s32 %v2901, 2
        %vm2903 = vcmp.gt.s32.totalorder 0, %v2902
        %v2904 = vsel %vm2903, 0, %v2902
        %v2905 = vsub.s32 32, %v2904
        %v2906 = vshll.u32 %v2897, %v2904
        %v2907 = vshrl.u32 %v2889, %v2905
        %v2908 = vor.u32 %v2906, %v2907
        %v2909 = vsub.s32 4294967266, %v2904
        %v2910 = vadd.s32 %v2909, 127
        %v2911 = vshll.u32 %v2910, 23
        %v2912 = vor.u32 4788187, %v2911
        %v2913 = vand.u32 2147483647, %v2912
        %v2915 = vcvt.s32.f32 %v2908
        %v2916 = vmul.f32 %v2915, %v2913
        %v2917 = vxor.u32 %v2916, 2147483648
        %v2918 = vsel %vm2835, %v2917, %v2916
        %v2919 = vsub.s32 4, %v2895
        %v2920 = vsel %vm2835, %v2919, %v2895
        %v2921 = vsel %vm2834, %v2101, %v2918
        %v2922 = vsel %vm2834, 0, %v2920
        %v2923 = vcosq.f32.pop %v2921
        %v2924 = vsinq.f32.pop %v2921
        %vm2925 = vweird.f32 %v2101
        %v2926 = vand.u32 %v2922, 3
        %vm2927 = vcmp.lt.s32.totalorder %v2926, 2
        %vm2928 = vcmp.eq.s32.totalorder %v2926, 0
        %v2929 = vxor.u32 %v2924, 2147483648
        %v2930 = vsel %vm2928, %v2923, %v2929
        %vm2931 = vcmp.eq.s32.totalorder %v2926, 2
        %v2932 = vxor.u32 %v2923, 2147483648
        %v2933 = vsel %vm2931, %v2932, %v2924
        %v2934 = vsel %vm2927, %v2930, %v2933
        %v2935 = vsel %vm2925, nan, %v2934
        %v2936 = vand.u32 2147483647, %v2102
        %vm2937 = vcmp.le.f32.partialorder %v2936, 0.7853982
        %vm2938 = vcmp.lt.s32.totalorder %v2102, 0
        %v2939 = vand.u32 %v2102, 2139095040
        %v2940 = vshrl.u32 %v2939, 23
        %v2941 = vsub.s32 %v2940, 127
        %v2942 = vand.u32 2147483647, %v2102
        %v2943 = vand.u32 %v2942, 8388607
        %v2944 = vor.u32 %v2943, 8388608
        %v2945 = vsub.s32 0, %v2944
        %v2946 = vadd.s32 %v2941, 1
        %vm2947 = vcmp.gt.s32.totalorder %v2946, 0
        %v2948 = vsel %vm2947, %v2946, 0
        %v2949 = vshrl.u32 %v2948, 5
        %v2950 = vand.u32 %v2948, 31
        %v2951 = vsub.s32 32, %v2950
        %v2952 = vshrl.u32 683565275, %v2951
        %v2953 = vshll.u32 683565275, %v2950
        %v2954 = vshrl.u32 2475754826, %v2951
        %v2955 = vor.u32 %v2953, %v2954
        %v2956 = vshll.u32 2475754826, %v2950
        %v2957 = vshrl.u32 2131351028, %v2951
        %v2958 = vor.u32 %v2956, %v2957
        %v2959 = vshll.u32 2131351028, %v2950
        %v2960 = vshrl.u32 2102212464, %v2951
        %v2961 = vor.u32 %v2959, %v2960
        %v2962 = vshll.u32 2102212464, %v2950
        %v2963 = vshrl.u32 920167782, %v2951
        %v2964 = vor.u32 %v2962, %v2963
        %v2965 = vshll.u32 920167782, %v2950
        %v2966 = vshrl.u32 1326507024, %v2951
        %v2967 = vor.u32 %v2965, %v2966
        %vm2968 = vcmp.lt.s32.totalorder %v2949, 1
        %vm2969 = vcmp.lt.s32.totalorder %v2949, 2
        %vm2970 = vcmp.lt.s32.totalorder %v2949, 3
        %vm2971 = vcmp.lt.s32.totalorder %v2949, 4
        %v2972 = vsel %vm2968, %v2952, %v2955
        %v2973 = vsel %vm2971, %v2961, 2102212464
        %v2974 = vsel %vm2970, %v2958, %v2973
        %v2975 = vsel %vm2969, %v2972, %v2974
        %v2976 = vsel %vm2968, %v2955, %v2958
        %v2977 = vsel %vm2971, %v2964, 920167782
        %v2978 = vsel %vm2970, %v2961, %v2977
        %v2979 = vsel %vm2969, %v2976, %v2978
        %v2980 = vsel %vm2968, %v2958, %v2961
        %v2981 = vsel %vm2971, %v2967, 1326507024
        %v2982 = vsel %vm2970, %v2964, %v2981
        %v2983 = vsel %vm2969, %v2980, %v2982
        %v2984 = vshll.u32 %v2944, 8
        %v2985 = vmul.u32.u64.compose %v2984, %v2983
        %v2986 = vextract.low.u32 %v2985
        %v2987 = vextract.high.u32 %v2985
        %v2988 = vmul.u32.u64.compose %v2984, %v2979
        %v2989 = vextract.low.u32 %v2988
        %v2990 = vextract.high.u32 %v2988
        %v2991 = vmul.u32 %v2984, %v2975
        %v2992 = vadd.s32 %v2987, %v2989
        %vm2993 = vc.u32 %v2987, %v2989
        %v2994 = vadd.s32 %v2990, 1
        %v2995 = vsel %vm2993, %v2994, %v2990
        %v2996 = vadd.s32 %v2991, %v2995
        %v2997 = vadd.s32 %v2996, 536870912
        %v2998 = vshrl.u32 %v2997, 30
        %v2999 = vshll.u32 %v2998, 30
        %v3000 = vsub.s32 %v2996, %v2999
        %vm3001 = vcmp.lt.s32.totalorder %v3000, 0
        %v3002 = vsub.s32 0, %v3000
        %v3003 = vsel %vm3001, %v3002, %v3000
        %v3004 = vclz %v3003
        %v3005 = vsub.s32 %v3004, 2
        %vm3006 = vcmp.gt.s32.totalorder 0, %v3005
        %v3007 = vsel %vm3006, 0, %v3005
        %v3008 = vsub.s32 32, %v3007
        %v3009 = vshll.u32 %v3000, %v3007
        %v3010 = vshrl.u32 %v2992, %v3008
        %v3011 = vor.u32 %v3009, %v3010
        %v3012 = vsub.s32 4294967266, %v3007
        %v3013 = vadd.s32 %v3012, 127
        %v3014 = vshll.u32 %v3013, 23
        %v3015 = vor.u32 4788187, %v3014
        %v3016 = vand.u32 2147483647, %v3015
        %v3018 = vcvt.s32.f32 %v3011
        %v3019 = vmul.f32 %v3018, %v3016
        %v3020 = vxor.u32 %v3019, 2147483648
        %v3021 = vsel %vm2938, %v3020, %v3019
        %v3022 = vsub.s32 4, %v2998
        %v3023 = vsel %vm2938, %v3022, %v2998
        %v3024 = vsel %vm2937, %v2102, %v3021
        %v3025 = vsel %vm2937, 0, %v3023
        %v3026 = vcosq.f32.pop %v3024
        %v3027 = vsinq.f32.pop %v3024
        %vm3028 = vweird.f32 %v2102
        %v3029 = vand.u32 %v3025, 3
        %vm3030 = vcmp.lt.s32.totalorder %v3029, 2
        %vm3031 = vcmp.eq.s32.totalorder %v3029, 0
        %v3032 = vxor.u32 %v3027, 2147483648
        %v3033 = vsel %vm3031, %v3026, %v3032
        %vm3034 = vcmp.eq.s32.totalorder %v3029, 2
        %v3035 = vxor.u32 %v3026, 2147483648
        %v3036 = vsel %vm3034, %v3035, %v3027
        %v3037 = vsel %vm3030, %v3033, %v3036
        %v3038 = vsel %vm3028, nan, %v3037
        %v3039 = vmul.f32 %v2207, %v2317
        %v3040 = vmul.f32 %v2208, %v2420
        %v3041 = vmul.f32 %v2209, %v2523
        %v3042 = vmul.f32 %v2210, %v2626
        %v3043 = vmul.f32 %v2211, %v2729
        %v3044 = vmul.f32 %v2212, %v2832
        %v3045 = vmul.f32 %v2213, %v2935
        %v3046 = vmul.f32 %v2214, %v3038
        %3047 = vst [vmem:[%s483] sm:$0xff] %v3039
        %3048 = vst [vmem:[%s483 + $0x8] sm:$0xff] %v3040
        %3049 = vst [vmem:[%s483 + $0x10] sm:$0xff] %v3041
        %3050 = vst [vmem:[%s483 + $0x18] sm:$0xff] %v3042
        %3051 = vst [vmem:[%s483 + $0x20] sm:$0xff] %v3043
        %3052 = vst [vmem:[%s483 + $0x28] sm:$0xff] %v3044
        %3053 = vst [vmem:[%s483 + $0x30] sm:$0xff] %v3045
        %3054 = vst [vmem:[%s483 + $0x38] sm:$0xff] %v3046
        %v3055 = vand.u32 2147483647, %v2095
        %vm3056 = vcmp.le.f32.partialorder %v3055, 0.7853982
        %vm3057 = vcmp.lt.s32.totalorder %v2095, 0
        %v3058 = vand.u32 %v2095, 2139095040
        %v3059 = vshrl.u32 %v3058, 23
        %v3060 = vsub.s32 %v3059, 127
        %v3061 = vand.u32 2147483647, %v2095
        %v3062 = vand.u32 %v3061, 8388607
        %v3063 = vor.u32 %v3062, 8388608
        %v3064 = vsub.s32 0, %v3063
        %v3065 = vadd.s32 %v3060, 1
        %vm3066 = vcmp.gt.s32.totalorder %v3065, 0
        %v3067 = vsel %vm3066, %v3065, 0
        %v3068 = vshrl.u32 %v3067, 5
        %v3069 = vand.u32 %v3067, 31
        %v3070 = vsub.s32 32, %v3069
        %v3071 = vshrl.u32 683565275, %v3070
        %v3072 = vshll.u32 683565275, %v3069
        %v3073 = vshrl.u32 2475754826, %v3070
        %v3074 = vor.u32 %v3072, %v3073
        %v3075 = vshll.u32 2475754826, %v3069
        %v3076 = vshrl.u32 2131351028, %v3070
        %v3077 = vor.u32 %v3075, %v3076
        %v3078 = vshll.u32 2131351028, %v3069
        %v3079 = vshrl.u32 2102212464, %v3070
        %v3080 = vor.u32 %v3078, %v3079
        %v3081 = vshll.u32 2102212464, %v3069
        %v3082 = vshrl.u32 920167782, %v3070
        %v3083 = vor.u32 %v3081, %v3082
        %v3084 = vshll.u32 920167782, %v3069
        %v3085 = vshrl.u32 1326507024, %v3070
        %v3086 = vor.u32 %v3084, %v3085
        %vm3087 = vcmp.lt.s32.totalorder %v3068, 1
        %vm3088 = vcmp.lt.s32.totalorder %v3068, 2
        %vm3089 = vcmp.lt.s32.totalorder %v3068, 3
        %vm3090 = vcmp.lt.s32.totalorder %v3068, 4
        %v3091 = vsel %vm3087, %v3071, %v3074
        %v3092 = vsel %vm3090, %v3080, 2102212464
        %v3093 = vsel %vm3089, %v3077, %v3092
        %v3094 = vsel %vm3088, %v3091, %v3093
        %v3095 = vsel %vm3087, %v3074, %v3077
        %v3096 = vsel %vm3090, %v3083, 920167782
        %v3097 = vsel %vm3089, %v3080, %v3096
        %v3098 = vsel %vm3088, %v3095, %v3097
        %v3099 = vsel %vm3087, %v3077, %v3080
        %v3100 = vsel %vm3090, %v3086, 1326507024
        %v3101 = vsel %vm3089, %v3083, %v3100
        %v3102 = vsel %vm3088, %v3099, %v3101
        %v3103 = vshll.u32 %v3063, 8
        %v3104 = vmul.u32.u64.compose %v3103, %v3102
        %v3105 = vextract.low.u32 %v3104
        %v3106 = vextract.high.u32 %v3104
        %v3107 = vmul.u32.u64.compose %v3103, %v3098
        %v3108 = vextract.low.u32 %v3107
        %v3109 = vextract.high.u32 %v3107
        %v3110 = vmul.u32 %v3103, %v3094
        %v3111 = vadd.s32 %v3106, %v3108
        %vm3112 = vc.u32 %v3106, %v3108
        %v3113 = vadd.s32 %v3109, 1
        %v3114 = vsel %vm3112, %v3113, %v3109
        %v3115 = vadd.s32 %v3110, %v3114
        %v3116 = vadd.s32 %v3115, 536870912
        %v3117 = vshrl.u32 %v3116, 30
        %v3118 = vshll.u32 %v3117, 30
        %v3119 = vsub.s32 %v3115, %v3118
        %vm3120 = vcmp.lt.s32.totalorder %v3119, 0
        %v3121 = vsub.s32 0, %v3119
        %v3122 = vsel %vm3120, %v3121, %v3119
        %v3123 = vclz %v3122
        %v3124 = vsub.s32 %v3123, 2
        %vm3125 = vcmp.gt.s32.totalorder 0, %v3124
        %v3126 = vsel %vm3125, 0, %v3124
        %v3127 = vsub.s32 32, %v3126
        %v3128 = vshll.u32 %v3119, %v3126
        %v3129 = vshrl.u32 %v3111, %v3127
        %v3130 = vor.u32 %v3128, %v3129
        %v3131 = vsub.s32 4294967266, %v3126
        %v3132 = vadd.s32 %v3131, 127
        %v3133 = vshll.u32 %v3132, 23
        %v3134 = vor.u32 4788187, %v3133
        %v3135 = vand.u32 2147483647, %v3134
        %v3137 = vcvt.s32.f32 %v3130
        %v3138 = vmul.f32 %v3137, %v3135
        %v3139 = vxor.u32 %v3138, 2147483648
        %v3140 = vsel %vm3057, %v3139, %v3138
        %v3141 = vsub.s32 4, %v3117
        %v3142 = vsel %vm3057, %v3141, %v3117
        %v3143 = vsel %vm3056, %v2095, %v3140
        %v3144 = vsel %vm3056, 0, %v3142
        %v3145 = vcosq.f32.pop %v3143
        %v3146 = vsinq.f32.pop %v3143
        %vm3147 = vweird.f32 %v2095
        %v3148 = vadd.s32 %v3144, 3
        %v3149 = vand.u32 %v3148, 3
        %vm3150 = vcmp.lt.s32.totalorder %v3149, 2
        %vm3151 = vcmp.eq.s32.totalorder %v3149, 0
        %v3152 = vxor.u32 %v3146, 2147483648
        %v3153 = vsel %vm3151, %v3145, %v3152
        %vm3154 = vcmp.eq.s32.totalorder %v3149, 2
        %v3155 = vxor.u32 %v3145, 2147483648
        %v3156 = vsel %vm3154, %v3155, %v3146
        %v3157 = vsel %vm3150, %v3153, %v3156
        %v3158 = vsel %vm3147, nan, %v3157
        %v3159 = vand.u32 2147483647, %v2096
        %vm3160 = vcmp.le.f32.partialorder %v3159, 0.7853982
        %vm3161 = vcmp.lt.s32.totalorder %v2096, 0
        %v3162 = vand.u32 %v2096, 2139095040
        %v3163 = vshrl.u32 %v3162, 23
        %v3164 = vsub.s32 %v3163, 127
        %v3165 = vand.u32 2147483647, %v2096
        %v3166 = vand.u32 %v3165, 8388607
        %v3167 = vor.u32 %v3166, 8388608
        %v3168 = vsub.s32 0, %v3167
        %v3169 = vadd.s32 %v3164, 1
        %vm3170 = vcmp.gt.s32.totalorder %v3169, 0
        %v3171 = vsel %vm3170, %v3169, 0
        %v3172 = vshrl.u32 %v3171, 5
        %v3173 = vand.u32 %v3171, 31
        %v3174 = vsub.s32 32, %v3173
        %v3175 = vshrl.u32 683565275, %v3174
        %v3176 = vshll.u32 683565275, %v3173
        %v3177 = vshrl.u32 2475754826, %v3174
        %v3178 = vor.u32 %v3176, %v3177
        %v3179 = vshll.u32 2475754826, %v3173
        %v3180 = vshrl.u32 2131351028, %v3174
        %v3181 = vor.u32 %v3179, %v3180
        %v3182 = vshll.u32 2131351028, %v3173
        %v3183 = vshrl.u32 2102212464, %v3174
        %v3184 = vor.u32 %v3182, %v3183
        %v3185 = vshll.u32 2102212464, %v3173
        %v3186 = vshrl.u32 920167782, %v3174
        %v3187 = vor.u32 %v3185, %v3186
        %v3188 = vshll.u32 920167782, %v3173
        %v3189 = vshrl.u32 1326507024, %v3174
        %v3190 = vor.u32 %v3188, %v3189
        %vm3191 = vcmp.lt.s32.totalorder %v3172, 1
        %vm3192 = vcmp.lt.s32.totalorder %v3172, 2
        %vm3193 = vcmp.lt.s32.totalorder %v3172, 3
        %vm3194 = vcmp.lt.s32.totalorder %v3172, 4
        %v3195 = vsel %vm3191, %v3175, %v3178
        %v3196 = vsel %vm3194, %v3184, 2102212464
        %v3197 = vsel %vm3193, %v3181, %v3196
        %v3198 = vsel %vm3192, %v3195, %v3197
        %v3199 = vsel %vm3191, %v3178, %v3181
        %v3200 = vsel %vm3194, %v3187, 920167782
        %v3201 = vsel %vm3193, %v3184, %v3200
        %v3202 = vsel %vm3192, %v3199, %v3201
        %v3203 = vsel %vm3191, %v3181, %v3184
        %v3204 = vsel %vm3194, %v3190, 1326507024
        %v3205 = vsel %vm3193, %v3187, %v3204
        %v3206 = vsel %vm3192, %v3203, %v3205
        %v3207 = vshll.u32 %v3167, 8
        %v3208 = vmul.u32.u64.compose %v3207, %v3206
        %v3209 = vextract.low.u32 %v3208
        %v3210 = vextract.high.u32 %v3208
        %v3211 = vmul.u32.u64.compose %v3207, %v3202
        %v3212 = vextract.low.u32 %v3211
        %v3213 = vextract.high.u32 %v3211
        %v3214 = vmul.u32 %v3207, %v3198
        %v3215 = vadd.s32 %v3210, %v3212
        %vm3216 = vc.u32 %v3210, %v3212
        %v3217 = vadd.s32 %v3213, 1
        %v3218 = vsel %vm3216, %v3217, %v3213
        %v3219 = vadd.s32 %v3214, %v3218
        %v3220 = vadd.s32 %v3219, 536870912
        %v3221 = vshrl.u32 %v3220, 30
        %v3222 = vshll.u32 %v3221, 30
        %v3223 = vsub.s32 %v3219, %v3222
        %vm3224 = vcmp.lt.s32.totalorder %v3223, 0
        %v3225 = vsub.s32 0, %v3223
        %v3226 = vsel %vm3224, %v3225, %v3223
        %v3227 = vclz %v3226
        %v3228 = vsub.s32 %v3227, 2
        %vm3229 = vcmp.gt.s32.totalorder 0, %v3228
        %v3230 = vsel %vm3229, 0, %v3228
        %v3231 = vsub.s32 32, %v3230
        %v3232 = vshll.u32 %v3223, %v3230
        %v3233 = vshrl.u32 %v3215, %v3231
        %v3234 = vor.u32 %v3232, %v3233
        %v3235 = vsub.s32 4294967266, %v3230
        %v3236 = vadd.s32 %v3235, 127
        %v3237 = vshll.u32 %v3236, 23
        %v3238 = vor.u32 4788187, %v3237
        %v3239 = vand.u32 2147483647, %v3238
        %v3241 = vcvt.s32.f32 %v3234
        %v3242 = vmul.f32 %v3241, %v3239
        %v3243 = vxor.u32 %v3242, 2147483648
        %v3244 = vsel %vm3161, %v3243, %v3242
        %v3245 = vsub.s32 4, %v3221
        %v3246 = vsel %vm3161, %v3245, %v3221
        %v3247 = vsel %vm3160, %v2096, %v3244
        %v3248 = vsel %vm3160, 0, %v3246
        %v3249 = vcosq.f32.pop %v3247
        %v3250 = vsinq.f32.pop %v3247
        %vm3251 = vweird.f32 %v2096
        %v3252 = vadd.s32 %v3248, 3
        %v3253 = vand.u32 %v3252, 3
        %vm3254 = vcmp.lt.s32.totalorder %v3253, 2
        %vm3255 = vcmp.eq.s32.totalorder %v3253, 0
        %v3256 = vxor.u32 %v3250, 2147483648
        %v3257 = vsel %vm3255, %v3249, %v3256
        %vm3258 = vcmp.eq.s32.totalorder %v3253, 2
        %v3259 = vxor.u32 %v3249, 2147483648
        %v3260 = vsel %vm3258, %v3259, %v3250
        %v3261 = vsel %vm3254, %v3257, %v3260
        %v3262 = vsel %vm3251, nan, %v3261
        %v3263 = vand.u32 2147483647, %v2097
        %vm3264 = vcmp.le.f32.partialorder %v3263, 0.7853982
        %vm3265 = vcmp.lt.s32.totalorder %v2097, 0
        %v3266 = vand.u32 %v2097, 2139095040
        %v3267 = vshrl.u32 %v3266, 23
        %v3268 = vsub.s32 %v3267, 127
        %v3269 = vand.u32 2147483647, %v2097
        %v3270 = vand.u32 %v3269, 8388607
        %v3271 = vor.u32 %v3270, 8388608
        %v3272 = vsub.s32 0, %v3271
        %v3273 = vadd.s32 %v3268, 1
        %vm3274 = vcmp.gt.s32.totalorder %v3273, 0
        %v3275 = vsel %vm3274, %v3273, 0
        %v3276 = vshrl.u32 %v3275, 5
        %v3277 = vand.u32 %v3275, 31
        %v3278 = vsub.s32 32, %v3277
        %v3279 = vshrl.u32 683565275, %v3278
        %v3280 = vshll.u32 683565275, %v3277
        %v3281 = vshrl.u32 2475754826, %v3278
        %v3282 = vor.u32 %v3280, %v3281
        %v3283 = vshll.u32 2475754826, %v3277
        %v3284 = vshrl.u32 2131351028, %v3278
        %v3285 = vor.u32 %v3283, %v3284
        %v3286 = vshll.u32 2131351028, %v3277
        %v3287 = vshrl.u32 2102212464, %v3278
        %v3288 = vor.u32 %v3286, %v3287
        %v3289 = vshll.u32 2102212464, %v3277
        %v3290 = vshrl.u32 920167782, %v3278
        %v3291 = vor.u32 %v3289, %v3290
        %v3292 = vshll.u32 920167782, %v3277
        %v3293 = vshrl.u32 1326507024, %v3278
        %v3294 = vor.u32 %v3292, %v3293
        %vm3295 = vcmp.lt.s32.totalorder %v3276, 1
        %vm3296 = vcmp.lt.s32.totalorder %v3276, 2
        %vm3297 = vcmp.lt.s32.totalorder %v3276, 3
        %vm3298 = vcmp.lt.s32.totalorder %v3276, 4
        %v3299 = vsel %vm3295, %v3279, %v3282
        %v3300 = vsel %vm3298, %v3288, 2102212464
        %v3301 = vsel %vm3297, %v3285, %v3300
        %v3302 = vsel %vm3296, %v3299, %v3301
        %v3303 = vsel %vm3295, %v3282, %v3285
        %v3304 = vsel %vm3298, %v3291, 920167782
        %v3305 = vsel %vm3297, %v3288, %v3304
        %v3306 = vsel %vm3296, %v3303, %v3305
        %v3307 = vsel %vm3295, %v3285, %v3288
        %v3308 = vsel %vm3298, %v3294, 1326507024
        %v3309 = vsel %vm3297, %v3291, %v3308
        %v3310 = vsel %vm3296, %v3307, %v3309
        %v3311 = vshll.u32 %v3271, 8
        %v3312 = vmul.u32.u64.compose %v3311, %v3310
        %v3313 = vextract.low.u32 %v3312
        %v3314 = vextract.high.u32 %v3312
        %v3315 = vmul.u32.u64.compose %v3311, %v3306
        %v3316 = vextract.low.u32 %v3315
        %v3317 = vextract.high.u32 %v3315
        %v3318 = vmul.u32 %v3311, %v3302
        %v3319 = vadd.s32 %v3314, %v3316
        %vm3320 = vc.u32 %v3314, %v3316
        %v3321 = vadd.s32 %v3317, 1
        %v3322 = vsel %vm3320, %v3321, %v3317
        %v3323 = vadd.s32 %v3318, %v3322
        %v3324 = vadd.s32 %v3323, 536870912
        %v3325 = vshrl.u32 %v3324, 30
        %v3326 = vshll.u32 %v3325, 30
        %v3327 = vsub.s32 %v3323, %v3326
        %vm3328 = vcmp.lt.s32.totalorder %v3327, 0
        %v3329 = vsub.s32 0, %v3327
        %v3330 = vsel %vm3328, %v3329, %v3327
        %v3331 = vclz %v3330
        %v3332 = vsub.s32 %v3331, 2
        %vm3333 = vcmp.gt.s32.totalorder 0, %v3332
        %v3334 = vsel %vm3333, 0, %v3332
        %v3335 = vsub.s32 32, %v3334
        %v3336 = vshll.u32 %v3327, %v3334
        %v3337 = vshrl.u32 %v3319, %v3335
        %v3338 = vor.u32 %v3336, %v3337
        %v3339 = vsub.s32 4294967266, %v3334
        %v3340 = vadd.s32 %v3339, 127
        %v3341 = vshll.u32 %v3340, 23
        %v3342 = vor.u32 4788187, %v3341
        %v3343 = vand.u32 2147483647, %v3342
        %v3345 = vcvt.s32.f32 %v3338
        %v3346 = vmul.f32 %v3345, %v3343
        %v3347 = vxor.u32 %v3346, 2147483648
        %v3348 = vsel %vm3265, %v3347, %v3346
        %v3349 = vsub.s32 4, %v3325
        %v3350 = vsel %vm3265, %v3349, %v3325
        %v3351 = vsel %vm3264, %v2097, %v3348
        %v3352 = vsel %vm3264, 0, %v3350
        %v3353 = vcosq.f32.pop %v3351
        %v3354 = vsinq.f32.pop %v3351
        %vm3355 = vweird.f32 %v2097
        %v3356 = vadd.s32 %v3352, 3
        %v3357 = vand.u32 %v3356, 3
        %vm3358 = vcmp.lt.s32.totalorder %v3357, 2
        %vm3359 = vcmp.eq.s32.totalorder %v3357, 0
        %v3360 = vxor.u32 %v3354, 2147483648
        %v3361 = vsel %vm3359, %v3353, %v3360
        %vm3362 = vcmp.eq.s32.totalorder %v3357, 2
        %v3363 = vxor.u32 %v3353, 2147483648
        %v3364 = vsel %vm3362, %v3363, %v3354
        %v3365 = vsel %vm3358, %v3361, %v3364
        %v3366 = vsel %vm3355, nan, %v3365
        %v3367 = vand.u32 2147483647, %v2098
        %vm3368 = vcmp.le.f32.partialorder %v3367, 0.7853982
        %vm3369 = vcmp.lt.s32.totalorder %v2098, 0
        %v3370 = vand.u32 %v2098, 2139095040
        %v3371 = vshrl.u32 %v3370, 23
        %v3372 = vsub.s32 %v3371, 127
        %v3373 = vand.u32 2147483647, %v2098
        %v3374 = vand.u32 %v3373, 8388607
        %v3375 = vor.u32 %v3374, 8388608
        %v3376 = vsub.s32 0, %v3375
        %v3377 = vadd.s32 %v3372, 1
        %vm3378 = vcmp.gt.s32.totalorder %v3377, 0
        %v3379 = vsel %vm3378, %v3377, 0
        %v3380 = vshrl.u32 %v3379, 5
        %v3381 = vand.u32 %v3379, 31
        %v3382 = vsub.s32 32, %v3381
        %v3383 = vshrl.u32 683565275, %v3382
        %v3384 = vshll.u32 683565275, %v3381
        %v3385 = vshrl.u32 2475754826, %v3382
        %v3386 = vor.u32 %v3384, %v3385
        %v3387 = vshll.u32 2475754826, %v3381
        %v3388 = vshrl.u32 2131351028, %v3382
        %v3389 = vor.u32 %v3387, %v3388
        %v3390 = vshll.u32 2131351028, %v3381
        %v3391 = vshrl.u32 2102212464, %v3382
        %v3392 = vor.u32 %v3390, %v3391
        %v3393 = vshll.u32 2102212464, %v3381
        %v3394 = vshrl.u32 920167782, %v3382
        %v3395 = vor.u32 %v3393, %v3394
        %v3396 = vshll.u32 920167782, %v3381
        %v3397 = vshrl.u32 1326507024, %v3382
        %v3398 = vor.u32 %v3396, %v3397
        %vm3399 = vcmp.lt.s32.totalorder %v3380, 1
        %vm3400 = vcmp.lt.s32.totalorder %v3380, 2
        %vm3401 = vcmp.lt.s32.totalorder %v3380, 3
        %vm3402 = vcmp.lt.s32.totalorder %v3380, 4
        %v3403 = vsel %vm3399, %v3383, %v3386
        %v3404 = vsel %vm3402, %v3392, 2102212464
        %v3405 = vsel %vm3401, %v3389, %v3404
        %v3406 = vsel %vm3400, %v3403, %v3405
        %v3407 = vsel %vm3399, %v3386, %v3389
        %v3408 = vsel %vm3402, %v3395, 920167782
        %v3409 = vsel %vm3401, %v3392, %v3408
        %v3410 = vsel %vm3400, %v3407, %v3409
        %v3411 = vsel %vm3399, %v3389, %v3392
        %v3412 = vsel %vm3402, %v3398, 1326507024
        %v3413 = vsel %vm3401, %v3395, %v3412
        %v3414 = vsel %vm3400, %v3411, %v3413
        %v3415 = vshll.u32 %v3375, 8
        %v3416 = vmul.u32.u64.compose %v3415, %v3414
        %v3417 = vextract.low.u32 %v3416
        %v3418 = vextract.high.u32 %v3416
        %v3419 = vmul.u32.u64.compose %v3415, %v3410
        %v3420 = vextract.low.u32 %v3419
        %v3421 = vextract.high.u32 %v3419
        %v3422 = vmul.u32 %v3415, %v3406
        %v3423 = vadd.s32 %v3418, %v3420
        %vm3424 = vc.u32 %v3418, %v3420
        %v3425 = vadd.s32 %v3421, 1
        %v3426 = vsel %vm3424, %v3425, %v3421
        %v3427 = vadd.s32 %v3422, %v3426
        %v3428 = vadd.s32 %v3427, 536870912
        %v3429 = vshrl.u32 %v3428, 30
        %v3430 = vshll.u32 %v3429, 30
        %v3431 = vsub.s32 %v3427, %v3430
        %vm3432 = vcmp.lt.s32.totalorder %v3431, 0
        %v3433 = vsub.s32 0, %v3431
        %v3434 = vsel %vm3432, %v3433, %v3431
        %v3435 = vclz %v3434
        %v3436 = vsub.s32 %v3435, 2
        %vm3437 = vcmp.gt.s32.totalorder 0, %v3436
        %v3438 = vsel %vm3437, 0, %v3436
        %v3439 = vsub.s32 32, %v3438
        %v3440 = vshll.u32 %v3431, %v3438
        %v3441 = vshrl.u32 %v3423, %v3439
        %v3442 = vor.u32 %v3440, %v3441
        %v3443 = vsub.s32 4294967266, %v3438
        %v3444 = vadd.s32 %v3443, 127
        %v3445 = vshll.u32 %v3444, 23
        %v3446 = vor.u32 4788187, %v3445
        %v3447 = vand.u32 2147483647, %v3446
        %v3449 = vcvt.s32.f32 %v3442
        %v3450 = vmul.f32 %v3449, %v3447
        %v3451 = vxor.u32 %v3450, 2147483648
        %v3452 = vsel %vm3369, %v3451, %v3450
        %v3453 = vsub.s32 4, %v3429
        %v3454 = vsel %vm3369, %v3453, %v3429
        %v3455 = vsel %vm3368, %v2098, %v3452
        %v3456 = vsel %vm3368, 0, %v3454
        %v3457 = vcosq.f32.pop %v3455
        %v3458 = vsinq.f32.pop %v3455
        %vm3459 = vweird.f32 %v2098
        %v3460 = vadd.s32 %v3456, 3
        %v3461 = vand.u32 %v3460, 3
        %vm3462 = vcmp.lt.s32.totalorder %v3461, 2
        %vm3463 = vcmp.eq.s32.totalorder %v3461, 0
        %v3464 = vxor.u32 %v3458, 2147483648
        %v3465 = vsel %vm3463, %v3457, %v3464
        %vm3466 = vcmp.eq.s32.totalorder %v3461, 2
        %v3467 = vxor.u32 %v3457, 2147483648
        %v3468 = vsel %vm3466, %v3467, %v3458
        %v3469 = vsel %vm3462, %v3465, %v3468
        %v3470 = vsel %vm3459, nan, %v3469
        %v3471 = vand.u32 2147483647, %v2099
        %vm3472 = vcmp.le.f32.partialorder %v3471, 0.7853982
        %vm3473 = vcmp.lt.s32.totalorder %v2099, 0
        %v3474 = vand.u32 %v2099, 2139095040
        %v3475 = vshrl.u32 %v3474, 23
        %v3476 = vsub.s32 %v3475, 127
        %v3477 = vand.u32 2147483647, %v2099
        %v3478 = vand.u32 %v3477, 8388607
        %v3479 = vor.u32 %v3478, 8388608
        %v3480 = vsub.s32 0, %v3479
        %v3481 = vadd.s32 %v3476, 1
        %vm3482 = vcmp.gt.s32.totalorder %v3481, 0
        %v3483 = vsel %vm3482, %v3481, 0
        %v3484 = vshrl.u32 %v3483, 5
        %v3485 = vand.u32 %v3483, 31
        %v3486 = vsub.s32 32, %v3485
        %v3487 = vshrl.u32 683565275, %v3486
        %v3488 = vshll.u32 683565275, %v3485
        %v3489 = vshrl.u32 2475754826, %v3486
        %v3490 = vor.u32 %v3488, %v3489
        %v3491 = vshll.u32 2475754826, %v3485
        %v3492 = vshrl.u32 2131351028, %v3486
        %v3493 = vor.u32 %v3491, %v3492
        %v3494 = vshll.u32 2131351028, %v3485
        %v3495 = vshrl.u32 2102212464, %v3486
        %v3496 = vor.u32 %v3494, %v3495
        %v3497 = vshll.u32 2102212464, %v3485
        %v3498 = vshrl.u32 920167782, %v3486
        %v3499 = vor.u32 %v3497, %v3498
        %v3500 = vshll.u32 920167782, %v3485
        %v3501 = vshrl.u32 1326507024, %v3486
        %v3502 = vor.u32 %v3500, %v3501
        %vm3503 = vcmp.lt.s32.totalorder %v3484, 1
        %vm3504 = vcmp.lt.s32.totalorder %v3484, 2
        %vm3505 = vcmp.lt.s32.totalorder %v3484, 3
        %vm3506 = vcmp.lt.s32.totalorder %v3484, 4
        %v3507 = vsel %vm3503, %v3487, %v3490
        %v3508 = vsel %vm3506, %v3496, 2102212464
        %v3509 = vsel %vm3505, %v3493, %v3508
        %v3510 = vsel %vm3504, %v3507, %v3509
        %v3511 = vsel %vm3503, %v3490, %v3493
        %v3512 = vsel %vm3506, %v3499, 920167782
        %v3513 = vsel %vm3505, %v3496, %v3512
        %v3514 = vsel %vm3504, %v3511, %v3513
        %v3515 = vsel %vm3503, %v3493, %v3496
        %v3516 = vsel %vm3506, %v3502, 1326507024
        %v3517 = vsel %vm3505, %v3499, %v3516
        %v3518 = vsel %vm3504, %v3515, %v3517
        %v3519 = vshll.u32 %v3479, 8
        %v3520 = vmul.u32.u64.compose %v3519, %v3518
        %v3521 = vextract.low.u32 %v3520
        %v3522 = vextract.high.u32 %v3520
        %v3523 = vmul.u32.u64.compose %v3519, %v3514
        %v3524 = vextract.low.u32 %v3523
        %v3525 = vextract.high.u32 %v3523
        %v3526 = vmul.u32 %v3519, %v3510
        %v3527 = vadd.s32 %v3522, %v3524
        %vm3528 = vc.u32 %v3522, %v3524
        %v3529 = vadd.s32 %v3525, 1
        %v3530 = vsel %vm3528, %v3529, %v3525
        %v3531 = vadd.s32 %v3526, %v3530
        %v3532 = vadd.s32 %v3531, 536870912
        %v3533 = vshrl.u32 %v3532, 30
        %v3534 = vshll.u32 %v3533, 30
        %v3535 = vsub.s32 %v3531, %v3534
        %vm3536 = vcmp.lt.s32.totalorder %v3535, 0
        %v3537 = vsub.s32 0, %v3535
        %v3538 = vsel %vm3536, %v3537, %v3535
        %v3539 = vclz %v3538
        %v3540 = vsub.s32 %v3539, 2
        %vm3541 = vcmp.gt.s32.totalorder 0, %v3540
        %v3542 = vsel %vm3541, 0, %v3540
        %v3543 = vsub.s32 32, %v3542
        %v3544 = vshll.u32 %v3535, %v3542
        %v3545 = vshrl.u32 %v3527, %v3543
        %v3546 = vor.u32 %v3544, %v3545
        %v3547 = vsub.s32 4294967266, %v3542
        %v3548 = vadd.s32 %v3547, 127
        %v3549 = vshll.u32 %v3548, 23
        %v3550 = vor.u32 4788187, %v3549
        %v3551 = vand.u32 2147483647, %v3550
        %v3553 = vcvt.s32.f32 %v3546
        %v3554 = vmul.f32 %v3553, %v3551
        %v3555 = vxor.u32 %v3554, 2147483648
        %v3556 = vsel %vm3473, %v3555, %v3554
        %v3557 = vsub.s32 4, %v3533
        %v3558 = vsel %vm3473, %v3557, %v3533
        %v3559 = vsel %vm3472, %v2099, %v3556
        %v3560 = vsel %vm3472, 0, %v3558
        %v3561 = vcosq.f32.pop %v3559
        %v3562 = vsinq.f32.pop %v3559
        %vm3563 = vweird.f32 %v2099
        %v3564 = vadd.s32 %v3560, 3
        %v3565 = vand.u32 %v3564, 3
        %vm3566 = vcmp.lt.s32.totalorder %v3565, 2
        %vm3567 = vcmp.eq.s32.totalorder %v3565, 0
        %v3568 = vxor.u32 %v3562, 2147483648
        %v3569 = vsel %vm3567, %v3561, %v3568
        %vm3570 = vcmp.eq.s32.totalorder %v3565, 2
        %v3571 = vxor.u32 %v3561, 2147483648
        %v3572 = vsel %vm3570, %v3571, %v3562
        %v3573 = vsel %vm3566, %v3569, %v3572
        %v3574 = vsel %vm3563, nan, %v3573
        %v3575 = vand.u32 2147483647, %v2100
        %vm3576 = vcmp.le.f32.partialorder %v3575, 0.7853982
        %vm3577 = vcmp.lt.s32.totalorder %v2100, 0
        %v3578 = vand.u32 %v2100, 2139095040
        %v3579 = vshrl.u32 %v3578, 23
        %v3580 = vsub.s32 %v3579, 127
        %v3581 = vand.u32 2147483647, %v2100
        %v3582 = vand.u32 %v3581, 8388607
        %v3583 = vor.u32 %v3582, 8388608
        %v3584 = vsub.s32 0, %v3583
        %v3585 = vadd.s32 %v3580, 1
        %vm3586 = vcmp.gt.s32.totalorder %v3585, 0
        %v3587 = vsel %vm3586, %v3585, 0
        %v3588 = vshrl.u32 %v3587, 5
        %v3589 = vand.u32 %v3587, 31
        %v3590 = vsub.s32 32, %v3589
        %v3591 = vshrl.u32 683565275, %v3590
        %v3592 = vshll.u32 683565275, %v3589
        %v3593 = vshrl.u32 2475754826, %v3590
        %v3594 = vor.u32 %v3592, %v3593
        %v3595 = vshll.u32 2475754826, %v3589
        %v3596 = vshrl.u32 2131351028, %v3590
        %v3597 = vor.u32 %v3595, %v3596
        %v3598 = vshll.u32 2131351028, %v3589
        %v3599 = vshrl.u32 2102212464, %v3590
        %v3600 = vor.u32 %v3598, %v3599
        %v3601 = vshll.u32 2102212464, %v3589
        %v3602 = vshrl.u32 920167782, %v3590
        %v3603 = vor.u32 %v3601, %v3602
        %v3604 = vshll.u32 920167782, %v3589
        %v3605 = vshrl.u32 1326507024, %v3590
        %v3606 = vor.u32 %v3604, %v3605
        %vm3607 = vcmp.lt.s32.totalorder %v3588, 1
        %vm3608 = vcmp.lt.s32.totalorder %v3588, 2
        %vm3609 = vcmp.lt.s32.totalorder %v3588, 3
        %vm3610 = vcmp.lt.s32.totalorder %v3588, 4
        %v3611 = vsel %vm3607, %v3591, %v3594
        %v3612 = vsel %vm3610, %v3600, 2102212464
        %v3613 = vsel %vm3609, %v3597, %v3612
        %v3614 = vsel %vm3608, %v3611, %v3613
        %v3615 = vsel %vm3607, %v3594, %v3597
        %v3616 = vsel %vm3610, %v3603, 920167782
        %v3617 = vsel %vm3609, %v3600, %v3616
        %v3618 = vsel %vm3608, %v3615, %v3617
        %v3619 = vsel %vm3607, %v3597, %v3600
        %v3620 = vsel %vm3610, %v3606, 1326507024
        %v3621 = vsel %vm3609, %v3603, %v3620
        %v3622 = vsel %vm3608, %v3619, %v3621
        %v3623 = vshll.u32 %v3583, 8
        %v3624 = vmul.u32.u64.compose %v3623, %v3622
        %v3625 = vextract.low.u32 %v3624
        %v3626 = vextract.high.u32 %v3624
        %v3627 = vmul.u32.u64.compose %v3623, %v3618
        %v3628 = vextract.low.u32 %v3627
        %v3629 = vextract.high.u32 %v3627
        %v3630 = vmul.u32 %v3623, %v3614
        %v3631 = vadd.s32 %v3626, %v3628
        %vm3632 = vc.u32 %v3626, %v3628
        %v3633 = vadd.s32 %v3629, 1
        %v3634 = vsel %vm3632, %v3633, %v3629
        %v3635 = vadd.s32 %v3630, %v3634
        %v3636 = vadd.s32 %v3635, 536870912
        %v3637 = vshrl.u32 %v3636, 30
        %v3638 = vshll.u32 %v3637, 30
        %v3639 = vsub.s32 %v3635, %v3638
        %vm3640 = vcmp.lt.s32.totalorder %v3639, 0
        %v3641 = vsub.s32 0, %v3639
        %v3642 = vsel %vm3640, %v3641, %v3639
        %v3643 = vclz %v3642
        %v3644 = vsub.s32 %v3643, 2
        %vm3645 = vcmp.gt.s32.totalorder 0, %v3644
        %v3646 = vsel %vm3645, 0, %v3644
        %v3647 = vsub.s32 32, %v3646
        %v3648 = vshll.u32 %v3639, %v3646
        %v3649 = vshrl.u32 %v3631, %v3647
        %v3650 = vor.u32 %v3648, %v3649
        %v3651 = vsub.s32 4294967266, %v3646
        %v3652 = vadd.s32 %v3651, 127
        %v3653 = vshll.u32 %v3652, 23
        %v3654 = vor.u32 4788187, %v3653
        %v3655 = vand.u32 2147483647, %v3654
        %v3657 = vcvt.s32.f32 %v3650
        %v3658 = vmul.f32 %v3657, %v3655
        %v3659 = vxor.u32 %v3658, 2147483648
        %v3660 = vsel %vm3577, %v3659, %v3658
        %v3661 = vsub.s32 4, %v3637
        %v3662 = vsel %vm3577, %v3661, %v3637
        %v3663 = vsel %vm3576, %v2100, %v3660
        %v3664 = vsel %vm3576, 0, %v3662
        %v3665 = vcosq.f32.pop %v3663
        %v3666 = vsinq.f32.pop %v3663
        %vm3667 = vweird.f32 %v2100
        %v3668 = vadd.s32 %v3664, 3
        %v3669 = vand.u32 %v3668, 3
        %vm3670 = vcmp.lt.s32.totalorder %v3669, 2
        %vm3671 = vcmp.eq.s32.totalorder %v3669, 0
        %v3672 = vxor.u32 %v3666, 2147483648
        %v3673 = vsel %vm3671, %v3665, %v3672
        %vm3674 = vcmp.eq.s32.totalorder %v3669, 2
        %v3675 = vxor.u32 %v3665, 2147483648
        %v3676 = vsel %vm3674, %v3675, %v3666
        %v3677 = vsel %vm3670, %v3673, %v3676
        %v3678 = vsel %vm3667, nan, %v3677
        %v3679 = vand.u32 2147483647, %v2101
        %vm3680 = vcmp.le.f32.partialorder %v3679, 0.7853982
        %vm3681 = vcmp.lt.s32.totalorder %v2101, 0
        %v3682 = vand.u32 %v2101, 2139095040
        %v3683 = vshrl.u32 %v3682, 23
        %v3684 = vsub.s32 %v3683, 127
        %v3685 = vand.u32 2147483647, %v2101
        %v3686 = vand.u32 %v3685, 8388607
        %v3687 = vor.u32 %v3686, 8388608
        %v3688 = vsub.s32 0, %v3687
        %v3689 = vadd.s32 %v3684, 1
        %vm3690 = vcmp.gt.s32.totalorder %v3689, 0
        %v3691 = vsel %vm3690, %v3689, 0
        %v3692 = vshrl.u32 %v3691, 5
        %v3693 = vand.u32 %v3691, 31
        %v3694 = vsub.s32 32, %v3693
        %v3695 = vshrl.u32 683565275, %v3694
        %v3696 = vshll.u32 683565275, %v3693
        %v3697 = vshrl.u32 2475754826, %v3694
        %v3698 = vor.u32 %v3696, %v3697
        %v3699 = vshll.u32 2475754826, %v3693
        %v3700 = vshrl.u32 2131351028, %v3694
        %v3701 = vor.u32 %v3699, %v3700
        %v3702 = vshll.u32 2131351028, %v3693
        %v3703 = vshrl.u32 2102212464, %v3694
        %v3704 = vor.u32 %v3702, %v3703
        %v3705 = vshll.u32 2102212464, %v3693
        %v3706 = vshrl.u32 920167782, %v3694
        %v3707 = vor.u32 %v3705, %v3706
        %v3708 = vshll.u32 920167782, %v3693
        %v3709 = vshrl.u32 1326507024, %v3694
        %v3710 = vor.u32 %v3708, %v3709
        %vm3711 = vcmp.lt.s32.totalorder %v3692, 1
        %vm3712 = vcmp.lt.s32.totalorder %v3692, 2
        %vm3713 = vcmp.lt.s32.totalorder %v3692, 3
        %vm3714 = vcmp.lt.s32.totalorder %v3692, 4
        %v3715 = vsel %vm3711, %v3695, %v3698
        %v3716 = vsel %vm3714, %v3704, 2102212464
        %v3717 = vsel %vm3713, %v3701, %v3716
        %v3718 = vsel %vm3712, %v3715, %v3717
        %v3719 = vsel %vm3711, %v3698, %v3701
        %v3720 = vsel %vm3714, %v3707, 920167782
        %v3721 = vsel %vm3713, %v3704, %v3720
        %v3722 = vsel %vm3712, %v3719, %v3721
        %v3723 = vsel %vm3711, %v3701, %v3704
        %v3724 = vsel %vm3714, %v3710, 1326507024
        %v3725 = vsel %vm3713, %v3707, %v3724
        %v3726 = vsel %vm3712, %v3723, %v3725
        %v3727 = vshll.u32 %v3687, 8
        %v3728 = vmul.u32.u64.compose %v3727, %v3726
        %v3729 = vextract.low.u32 %v3728
        %v3730 = vextract.high.u32 %v3728
        %v3731 = vmul.u32.u64.compose %v3727, %v3722
        %v3732 = vextract.low.u32 %v3731
        %v3733 = vextract.high.u32 %v3731
        %v3734 = vmul.u32 %v3727, %v3718
        %v3735 = vadd.s32 %v3730, %v3732
        %vm3736 = vc.u32 %v3730, %v3732
        %v3737 = vadd.s32 %v3733, 1
        %v3738 = vsel %vm3736, %v3737, %v3733
        %v3739 = vadd.s32 %v3734, %v3738
        %v3740 = vadd.s32 %v3739, 536870912
        %v3741 = vshrl.u32 %v3740, 30
        %v3742 = vshll.u32 %v3741, 30
        %v3743 = vsub.s32 %v3739, %v3742
        %vm3744 = vcmp.lt.s32.totalorder %v3743, 0
        %v3745 = vsub.s32 0, %v3743
        %v3746 = vsel %vm3744, %v3745, %v3743
        %v3747 = vclz %v3746
        %v3748 = vsub.s32 %v3747, 2
        %vm3749 = vcmp.gt.s32.totalorder 0, %v3748
        %v3750 = vsel %vm3749, 0, %v3748
        %v3751 = vsub.s32 32, %v3750
        %v3752 = vshll.u32 %v3743, %v3750
        %v3753 = vshrl.u32 %v3735, %v3751
        %v3754 = vor.u32 %v3752, %v3753
        %v3755 = vsub.s32 4294967266, %v3750
        %v3756 = vadd.s32 %v3755, 127
        %v3757 = vshll.u32 %v3756, 23
        %v3758 = vor.u32 4788187, %v3757
        %v3759 = vand.u32 2147483647, %v3758
        %v3761 = vcvt.s32.f32 %v3754
        %v3762 = vmul.f32 %v3761, %v3759
        %v3763 = vxor.u32 %v3762, 2147483648
        %v3764 = vsel %vm3681, %v3763, %v3762
        %v3765 = vsub.s32 4, %v3741
        %v3766 = vsel %vm3681, %v3765, %v3741
        %v3767 = vsel %vm3680, %v2101, %v3764
        %v3768 = vsel %vm3680, 0, %v3766
        %v3769 = vcosq.f32.pop %v3767
        %v3770 = vsinq.f32.pop %v3767
        %vm3771 = vweird.f32 %v2101
        %v3772 = vadd.s32 %v3768, 3
        %v3773 = vand.u32 %v3772, 3
        %vm3774 = vcmp.lt.s32.totalorder %v3773, 2
        %vm3775 = vcmp.eq.s32.totalorder %v3773, 0
        %v3776 = vxor.u32 %v3770, 2147483648
        %v3777 = vsel %vm3775, %v3769, %v3776
        %vm3778 = vcmp.eq.s32.totalorder %v3773, 2
        %v3779 = vxor.u32 %v3769, 2147483648
        %v3780 = vsel %vm3778, %v3779, %v3770
        %v3781 = vsel %vm3774, %v3777, %v3780
        %v3782 = vsel %vm3771, nan, %v3781
        %v3783 = vand.u32 2147483647, %v2102
        %vm3784 = vcmp.le.f32.partialorder %v3783, 0.7853982
        %vm3785 = vcmp.lt.s32.totalorder %v2102, 0
        %v3786 = vand.u32 %v2102, 2139095040
        %v3787 = vshrl.u32 %v3786, 23
        %v3788 = vsub.s32 %v3787, 127
        %v3789 = vand.u32 2147483647, %v2102
        %v3790 = vand.u32 %v3789, 8388607
        %v3791 = vor.u32 %v3790, 8388608
        %v3792 = vsub.s32 0, %v3791
        %v3793 = vadd.s32 %v3788, 1
        %vm3794 = vcmp.gt.s32.totalorder %v3793, 0
        %v3795 = vsel %vm3794, %v3793, 0
        %v3796 = vshrl.u32 %v3795, 5
        %v3797 = vand.u32 %v3795, 31
        %v3798 = vsub.s32 32, %v3797
        %v3799 = vshrl.u32 683565275, %v3798
        %v3800 = vshll.u32 683565275, %v3797
        %v3801 = vshrl.u32 2475754826, %v3798
        %v3802 = vor.u32 %v3800, %v3801
        %v3803 = vshll.u32 2475754826, %v3797
        %v3804 = vshrl.u32 2131351028, %v3798
        %v3805 = vor.u32 %v3803, %v3804
        %v3806 = vshll.u32 2131351028, %v3797
        %v3807 = vshrl.u32 2102212464, %v3798
        %v3808 = vor.u32 %v3806, %v3807
        %v3809 = vshll.u32 2102212464, %v3797
        %v3810 = vshrl.u32 920167782, %v3798
        %v3811 = vor.u32 %v3809, %v3810
        %v3812 = vshll.u32 920167782, %v3797
        %v3813 = vshrl.u32 1326507024, %v3798
        %v3814 = vor.u32 %v3812, %v3813
        %vm3815 = vcmp.lt.s32.totalorder %v3796, 1
        %vm3816 = vcmp.lt.s32.totalorder %v3796, 2
        %vm3817 = vcmp.lt.s32.totalorder %v3796, 3
        %vm3818 = vcmp.lt.s32.totalorder %v3796, 4
        %v3819 = vsel %vm3815, %v3799, %v3802
        %v3820 = vsel %vm3818, %v3808, 2102212464
        %v3821 = vsel %vm3817, %v3805, %v3820
        %v3822 = vsel %vm3816, %v3819, %v3821
        %v3823 = vsel %vm3815, %v3802, %v3805
        %v3824 = vsel %vm3818, %v3811, 920167782
        %v3825 = vsel %vm3817, %v3808, %v3824
        %v3826 = vsel %vm3816, %v3823, %v3825
        %v3827 = vsel %vm3815, %v3805, %v3808
        %v3828 = vsel %vm3818, %v3814, 1326507024
        %v3829 = vsel %vm3817, %v3811, %v3828
        %v3830 = vsel %vm3816, %v3827, %v3829
        %v3831 = vshll.u32 %v3791, 8
        %v3832 = vmul.u32.u64.compose %v3831, %v3830
        %v3833 = vextract.low.u32 %v3832
        %v3834 = vextract.high.u32 %v3832
        %v3835 = vmul.u32.u64.compose %v3831, %v3826
        %v3836 = vextract.low.u32 %v3835
        %v3837 = vextract.high.u32 %v3835
        %v3838 = vmul.u32 %v3831, %v3822
        %v3839 = vadd.s32 %v3834, %v3836
        %vm3840 = vc.u32 %v3834, %v3836
        %v3841 = vadd.s32 %v3837, 1
        %v3842 = vsel %vm3840, %v3841, %v3837
        %v3843 = vadd.s32 %v3838, %v3842
        %v3844 = vadd.s32 %v3843, 536870912
        %v3845 = vshrl.u32 %v3844, 30
        %v3846 = vshll.u32 %v3845, 30
        %v3847 = vsub.s32 %v3843, %v3846
        %vm3848 = vcmp.lt.s32.totalorder %v3847, 0
        %v3849 = vsub.s32 0, %v3847
        %v3850 = vsel %vm3848, %v3849, %v3847
        %v3851 = vclz %v3850
        %v3852 = vsub.s32 %v3851, 2
        %vm3853 = vcmp.gt.s32.totalorder 0, %v3852
        %v3854 = vsel %vm3853, 0, %v3852
        %v3855 = vsub.s32 32, %v3854
        %v3856 = vshll.u32 %v3847, %v3854
        %v3857 = vshrl.u32 %v3839, %v3855
        %v3858 = vor.u32 %v3856, %v3857
        %v3859 = vsub.s32 4294967266, %v3854
        %v3860 = vadd.s32 %v3859, 127
        %v3861 = vshll.u32 %v3860, 23
        %v3862 = vor.u32 4788187, %v3861
        %v3863 = vand.u32 2147483647, %v3862
        %v3865 = vcvt.s32.f32 %v3858
        %v3866 = vmul.f32 %v3865, %v3863
        %v3867 = vxor.u32 %v3866, 2147483648
        %v3868 = vsel %vm3785, %v3867, %v3866
        %v3869 = vsub.s32 4, %v3845
        %v3870 = vsel %vm3785, %v3869, %v3845
        %v3871 = vsel %vm3784, %v2102, %v3868
        %v3872 = vsel %vm3784, 0, %v3870
        %v3873 = vcosq.f32.pop %v3871
        %v3874 = vsinq.f32.pop %v3871
        %vm3875 = vweird.f32 %v2102
        %v3876 = vadd.s32 %v3872, 3
        %v3877 = vand.u32 %v3876, 3
        %vm3878 = vcmp.lt.s32.totalorder %v3877, 2
        %vm3879 = vcmp.eq.s32.totalorder %v3877, 0
        %v3880 = vxor.u32 %v3874, 2147483648
        %v3881 = vsel %vm3879, %v3873, %v3880
        %vm3882 = vcmp.eq.s32.totalorder %v3877, 2
        %v3883 = vxor.u32 %v3873, 2147483648
        %v3884 = vsel %vm3882, %v3883, %v3874
        %v3885 = vsel %vm3878, %v3881, %v3884
        %v3886 = vsel %vm3875, nan, %v3885
        %v3887 = vmul.f32 %v2207, %v3158
        %v3888 = vmul.f32 %v2208, %v3262
        %v3889 = vmul.f32 %v2209, %v3366
        %v3890 = vmul.f32 %v2210, %v3470
        %v3891 = vmul.f32 %v2211, %v3574
        %v3892 = vmul.f32 %v2212, %v3678
        %v3893 = vmul.f32 %v2213, %v3782
        %v3894 = vmul.f32 %v2214, %v3886
        %3895 = vst [vmem:[%s490] sm:$0xff] %v3887
        %3896 = vst [vmem:[%s490 + $0x8] sm:$0xff] %v3888
        %3897 = vst [vmem:[%s490 + $0x10] sm:$0xff] %v3889
        %3898 = vst [vmem:[%s490 + $0x18] sm:$0xff] %v3890
        %3899 = vst [vmem:[%s490 + $0x20] sm:$0xff] %v3891
        %3900 = vst [vmem:[%s490 + $0x28] sm:$0xff] %v3892
        %3901 = vst [vmem:[%s490 + $0x30] sm:$0xff] %v3893
        %3902 = vst [vmem:[%s490 + $0x38] sm:$0xff] %v3894
        %s3903 = sand.u32 %s237, 1
        %s3904 = scalar_lea.sflag [#allocation4], %s3903
        %s3905 = sand.u32 %s237, 1
        %s3906 = smul.addr %s3905, 64
        %s3907 = scalar_lea.vmem [#allocation10], %s3906
        %s3908 = sand.u32 %s265, 1
        %s3909 = scalar_lea.sflag [#allocation12], %s3908
        %s3910 = sand.u32 %s265, 1
        %s3911 = smul.addr %s3910, 64
        %s3912 = scalar_lea.vmem [#allocation11], %s3911
        // Predicated region
        $region65: #{tpu_custom_call.1} parent=47 // pred_check
          %p3913 = pneg %p247
        $region66: #{tpu_custom_call.1} parent=47 // pred_check_branch
          %3915 = sbr.rel (%p3913) target = $region68
        $region67: #{tpu_custom_call.1} parent=47 // pred_region
          %s3917 = ssub.s32 1024, 1024
          %3918 = vsyncadd %s3904, %s3917
          %s3919 = smul.addr %s39, 8
          %s3920 = sadd.s32 %s40, %s3919
          %s3921 = smul.addr %s3920, 128
          %s3922 = scalar_lea.hbm %s7, %s3921
          %s3923 = sshll.u32 %s3907, 4
          %s3924 = int_to_ptr.vmem [resolvable:$true] %s3923
          %3929 = dma.vmem_to_hbm [thread:$0]  %s3924, 1024, %s3922, %s3904, 128, 128, 8
        $region68: #{tpu_custom_call.1} parent=47 // pred_fallthru
          _
        // Predicated region
        $region69: #{tpu_custom_call.1} parent=47 // pred_check
          %p3930 = pneg %p275
        $region70: #{tpu_custom_call.1} parent=47 // pred_check_branch
          %3932 = sbr.rel (%p3930) target = $region72
        $region71: #{tpu_custom_call.1} parent=47 // pred_region
          %s3934 = ssub.s32 1024, 1024
          %3935 = vsyncadd %s3909, %s3934
          %s3936 = smul.addr %s39, 8
          %s3937 = sadd.s32 %s40, %s3936
          %s3938 = smul.addr %s3937, 128
          %s3939 = scalar_lea.hbm %s8, %s3938
          %s3940 = sshll.u32 %s3912, 4
          %s3941 = int_to_ptr.vmem [resolvable:$true] %s3940
          %3946 = dma.vmem_to_hbm [thread:$0]  %s3941, 1024, %s3939, %s3909, 128, 128, 8
        $region72: #{tpu_custom_call.1} parent=47 // pred_fallthru
          _
      $region48: #{tpu_custom_call.1} parent=5 // pred_fallthru
        _
      %p3947 = scmp.le.s32.totalorder 2, %s30
      // Predicated region
      $region73: #{tpu_custom_call.1} parent=5 // pred_check
        %p3948 = pneg %p3947
      $region74: #{tpu_custom_call.1} parent=5 // pred_check_branch
        %3950 = sbr.rel (%p3948) target = $region76
      $region75: #{tpu_custom_call.1} parent=5 // pred_region
        %s3951 = ssub.s32 %s30, 2
        // Predicated region
        $region77: #{tpu_custom_call.1} parent=75 // pred_check
          %p3952 = pneg %p253
        $region78: #{tpu_custom_call.1} parent=75 // pred_check_branch
          %3954 = sbr.rel (%p3952) target = $region80
        $region79: #{tpu_custom_call.1} parent=75 // pred_region
          %s3955 = sand.u32 %s238, 1
          %s3956 = scalar_lea.sflag [#allocation4], %s3955
          %s3957 = sand.u32 %s238, 1
          %s3958 = smul.addr %s3957, 64
          %s3959 = scalar_lea.vmem [#allocation10], %s3958
          %3960 = dma.done %s3956, 1024
        $region80: #{tpu_custom_call.1} parent=75 // pred_fallthru
          _
        // Predicated region
        $region81: #{tpu_custom_call.1} parent=75 // pred_check
          %p3961 = pneg %p281
        $region82: #{tpu_custom_call.1} parent=75 // pred_check_branch
          %3963 = sbr.rel (%p3961) target = $region84
        $region83: #{tpu_custom_call.1} parent=75 // pred_region
          %s3964 = sand.u32 %s266, 1
          %s3965 = scalar_lea.sflag [#allocation12], %s3964
          %s3966 = sand.u32 %s266, 1
          %s3967 = smul.addr %s3966, 64
          %s3968 = scalar_lea.vmem [#allocation11], %s3967
          %3969 = dma.done %s3965, 1024
        $region84: #{tpu_custom_call.1} parent=75 // pred_fallthru
          _
      $region76: #{tpu_custom_call.1} parent=5 // pred_fallthru
        _
    $region6: #{tpu_custom_call.1} parent=1 // loop_footer
      %s34 = sadd.s32 1, %s30
    $region7: #{tpu_custom_call.1} parent=1 // loop_footer_branch
      %29 = sbr.rel target = $region3
    $region8: #{tpu_custom_call.1} parent=1 // loop_exit
      _
    %3970 = vsyncpa [#allocation3], 1
    %s3971 = scalar_lea.sflag [#allocation3], 1
    %3972 = vsyncpa %s3971, 1
    %3973 = vsyncpa [#allocation6], 1
    %s3974 = scalar_lea.sflag [#allocation6], 1
    %3975 = vsyncpa %s3974, 1
    %3976 = vsyncpa [#allocation9], 1
    %s3977 = scalar_lea.sflag [#allocation9], 1
    %3978 = vsyncpa %s3977, 1
    %3979 = vsyncpa [#allocation4], 1
    %s3980 = scalar_lea.sflag [#allocation4], 1
    %3981 = vsyncpa %s3980, 1
    %3982 = vsyncpa [#allocation12], 1
    %s3983 = scalar_lea.sflag [#allocation12], 1
    %3984 = vsyncpa %s3983, 1

</llo_original>
